<compile_context>
chip_gen: v7x
topology: tpu7x:2x2x1
jax: 0.10.0
libtpu: 0.0.40
codegen_flags: <defaults>
</compile_context>

<pallas_src>
import functools

import jax
import jax.numpy as jnp
from jax.experimental import pallas as pl
from jax.experimental.pallas import tpu as pltpu


# ----------------------------- kernels --------------------------------------

def _se_kernel_3d(x_ref, w1_ref, w2_ref, o_ref):
    """x as (BB, C, HW).  Used when HW is already a multiple of 128."""
    x = x_ref[...]                                                    # (BB, C, HW)
    y = jnp.sum(x, axis=-1)                                           # (BB, C); 1/HW folded into w1
    h = jnp.maximum(jnp.dot(y, w1_ref[...], preferred_element_type=jnp.float32), 0.0)
    s = jax.nn.sigmoid(jnp.dot(h, w2_ref[...], preferred_element_type=jnp.float32))
    o_ref[...] = (x * s.astype(x.dtype)[:, :, None]).astype(o_ref.dtype)


def _se_kernel_flat(x_ref, p_ref, e_ref, w1_ref, w2_ref, o_ref):
    """x as a lane-dense (BB, C*HW) block; squeeze/broadcast via MXU matmuls."""
    x = x_ref[...]                                                    # (BB, C*HW)
    y = jnp.dot(x, p_ref[...], preferred_element_type=jnp.float32)    # mean pool -> (BB, C)
    h = jnp.maximum(jnp.dot(y, w1_ref[...], preferred_element_type=jnp.float32), 0.0)
    s = jax.nn.sigmoid(jnp.dot(h, w2_ref[...], preferred_element_type=jnp.float32))
    gate = jnp.dot(s, e_ref[...], preferred_element_type=jnp.float32)  # (BB, C*HW)
    o_ref[...] = (x * gate.astype(x.dtype)).astype(o_ref.dtype)


def _squeeze_kernel(x_ref, ysum_ref, *, hw_total, t_hw):
    """Fallback pass 1: accumulate spatial sums over HW chunks."""
    h = pl.program_id(1)

    @pl.when(h == 0)
    def _():
        ysum_ref[...] = jnp.zeros_like(ysum_ref)

    x = x_ref[...].astype(jnp.float32)                                # (1, C, t_hw)
    idx = jax.lax.broadcasted_iota(jnp.int32, x.shape, 2)
    x = jnp.where(idx + h * t_hw < hw_total, x, 0.0)                  # mask the HW tail
    ysum_ref[...] += jnp.sum(x, axis=-1)[:, None, :]                  # (1, 1, C)


def _scale_kernel(gate_ref, x_ref, o_ref):
    """Fallback pass 2: stream x and apply the per-(batch, channel) gate."""
    x = x_ref[...]                                                    # (1, C, t_hw)
    gate = gate_ref[...][:, 0, :, None].astype(x.dtype)               # (1, C, 1)
    o_ref[...] = (x * gate).astype(o_ref.dtype)


# ----------------------------- sizing helpers --------------------------------

def _tpu_budget():
    """Generation-aware per-block byte target, scoped-VMEM clamp, min grid steps."""
    vmem_cap = None
    try:
        vmem_cap = int(pltpu.get_tpu_info().vmem_capacity_bytes)
    except Exception:
        pass
    if vmem_cap is None:
        kind = ""
        try:
            kind = jax.devices()[0].device_kind.lower()
        except Exception:
            pass
        big = any(t in kind for t in ("v4", "v5", "v6"))
        vmem_cap = (128 << 20) if big else (64 << 20)
    if vmem_cap >= (100 << 20):
        # v5e / v6e: 128 MiB VMEM, one TensorCore -> big blocks, no forced split.
        return dict(target_bytes=4 << 20, vmem_clamp=96 << 20, min_grid=1)
    # v7x-like: 64 MiB VMEM / TC, 2 TensorCores -> grid >= 4 so each core pipelines.
    return dict(target_bytes=2 << 20, vmem_clamp=40 << 20, min_grid=4)


def _pick_batch_block(B, bytes_per_batch, target_bytes, clamp, extras, min_grid):
    """Batch-chunk size from the byte target alone (cdiv handles the tail)."""
    headroom = 2 << 20
    bb = max(1, min(B, int(target_bytes) // max(1, bytes_per_batch)))
    if min_grid > 1:
        bb = min(bb, max(1, -(-B // min_grid)))      # keep >= min_grid steps when B allows
    bb = max(1, bb)
    while bb > 1 and 4 * bb * bytes_per_batch + extras + headroom > clamp:
        bb = max(1, bb // 2)
    return bb


# ----------------------------- wrappers ---------------------------------------

def _se_block_two_pass(x, w1, w2, budget):
    """Big-feature-map fallback: gates from a streamed squeeze pass, then a
    streamed scale pass over HW chunks (1.5x HBM traffic, never spills)."""
    B, C, H, W = x.shape
    HW = H * W
    itemsize = jnp.dtype(x.dtype).itemsize
    target, clamp = budget["target_bytes"], budget["vmem_clamp"]
    headroom = 2 << 20

    x3 = x.reshape(B, C, HW)

    if HW <= 128:
        t_hw = HW
    else:
        cap = (HW // 128) * 128
        t_hw = min(cap, max(128, (int(target) // max(1, C * itemsize)) // 128 * 128))
        while t_hw > 128 and 4 * C * t_hw * itemsize + headroom > clamp:
            t_hw -= 128
    n_hw = -(-HW // t_hw)
    blk_bytes = C * t_hw * itemsize
    vmem_limit = int(min(clamp, max(32 << 20, 4 * blk_bytes + headroom)))

    # Pass 1: per-(batch, channel) spatial sums (resident (1,1,C) accumulator).
    ysum = pl.pallas_call(
        functools.partial(_squeeze_kernel, hw_total=HW, t_hw=t_hw),
        out_shape=jax.ShapeDtypeStruct((B, 1, C), jnp.float32),
        grid_spec=pltpu.PrefetchScalarGridSpec(
            num_scalar_prefetch=0,
            grid=(B, n_hw),
            in_specs=[pl.BlockSpec((1, C, t_hw), lambda b, h: (b, 0, h))],
            out_specs=pl.BlockSpec((1, 1, C), lambda b, h: (b, 0, 0)),
        ),
        compiler_params=pltpu.CompilerParams(
            dimension_semantics=("parallel", "arbitrary"),
            vmem_limit_bytes=vmem_limit,
        ),
    )(x3)

    # Tiny excitation FCs on (B, C) — negligible FLOPs, plain JAX.
    y = ysum[:, 0, :] * (1.0 / HW)
    s = jax.nn.sigmoid(jnp.maximum(y @ w1.astype(jnp.float32), 0.0) @ w2.astype(jnp.float32))
    gate = s.reshape(B, 1, C).astype(jnp.float32)

    # Pass 2: stream x and apply the gate.
    out = pl.pallas_call(
        _scale_kernel,
        out_shape=jax.ShapeDtypeStruct((B, C, HW), x.dtype),
        grid_spec=pltpu.PrefetchScalarGridSpec(
            num_scalar_prefetch=0,
            grid=(B, n_hw),
            in_specs=[
                pl.BlockSpec((1, 1, C), lambda b, h: (b, 0, 0)),
                pl.BlockSpec((1, C, t_hw), lambda b, h: (b, 0, h)),
            ],
            out_specs=pl.BlockSpec((1, C, t_hw), lambda b, h: (b, 0, h)),
        ),
        compiler_params=pltpu.CompilerParams(
            dimension_semantics=("parallel", "parallel"),
            vmem_limit_bytes=vmem_limit,
        ),
    )(gate, x3)
    return out.reshape(B, C, H, W)


def se_block(x, w1, w2, *, donate_x=False, _budget=None):
    """x: (B, C, H, W); w1: (C, C//r); w2: (C//r, C).  Matches PyTorch SE_Block."""
    B, C, H, W = x.shape
    Cr = w1.shape[1]
    HW = H * W
    itemsize = jnp.dtype(x.dtype).itemsize
    bytes_per_batch = C * HW * itemsize
    w_bytes = 2 * (w1.size + w2.size) * 4
    headroom = 2 << 20

    budget = _budget if _budget is not None else _tpu_budget()
    target, clamp, min_grid = budget["target_bytes"], budget["vmem_clamp"], budget["min_grid"]

    # Fallback: a single (C, HW) slab cannot be double-buffered inside the budget.
    if 4 * bytes_per_batch + w_bytes + headroom > clamp:
        return _se_block_two_pass(x, w1, w2, budget)

    lane_dense = (HW % 128) == 0
    pool_bytes = 2 * (C * HW * C) * 4                     # P (C*HW,C) + E (C,C*HW), f32
    use_flat = (not lane_dense) and ((C * HW) % 128 == 0) and pool_bytes <= (8 << 20)

    if use_flat:
        extras = w_bytes + 2 * pool_bytes
        bb = _pick_batch_block(B, bytes_per_batch, target, clamp, extras, min_grid)
        if bb != B and bb % 8 != 0:                       # keep the sublane dim of the 2-D block aligned
            bb_al = B if B <= 8 else max(8, (bb // 8) * 8)
            if 4 * bb_al * bytes_per_batch + extras + headroom <= clamp:
                bb = bb_al
            else:
                use_flat = False
    if not use_flat:
        extras = w_bytes
        bb = _pick_batch_block(B, bytes_per_batch, target, clamp, extras, min_grid)

    num_blocks = -(-B // bb)                              # cdiv: tail block is masked
    vmem_limit = int(min(clamp, max(32 << 20, 4 * bb * bytes_per_batch + extras + headroom)))
    alias = {0: 0} if donate_x else {}
    cparams = pltpu.CompilerParams(
        dimension_semantics=("parallel",),
        vmem_limit_bytes=vmem_limit,
    )

    if use_flat:
        # Lane-dense (BB, C*HW) path: squeeze/broadcast as block-diagonal matmuls.
        N = C * HW
        x2 = x.reshape(B, N)
        eye = jnp.eye(C, dtype=jnp.float32)
        pool = jnp.repeat(eye, HW, axis=0) / float(HW)    # (C*HW, C): mean pool
        bcast = jnp.repeat(eye, HW, axis=1)               # (C, C*HW): gate broadcast
        out = pl.pallas_call(
            _se_kernel_flat,
            out_shape=jax.ShapeDtypeStruct((B, N), x.dtype),
            grid_spec=pltpu.PrefetchScalarGridSpec(
                num_scalar_prefetch=0,
                grid=(num_blocks,),
                in_specs=[
                    pl.BlockSpec((bb, N), lambda b: (b, 0)),
                    pl.BlockSpec((N, C), lambda b: (0, 0)),
                    pl.BlockSpec((C, N), lambda b: (0, 0)),
                    pl.BlockSpec((C, Cr), lambda b: (0, 0)),
                    pl.BlockSpec((Cr, C), lambda b: (0, 0)),
                ],
                out_specs=pl.BlockSpec((bb, N), lambda b: (b, 0)),
            ),
            compiler_params=cparams,
            input_output_aliases=alias,
        )(x2, pool, bcast, w1.astype(jnp.float32), w2.astype(jnp.float32))
        return out.reshape(B, C, H, W)

    # (BB, C, HW) path: HW already lane-dense (or pooling matrices too large).
    x3 = x.reshape(B, C, HW)
    w1_scaled = w1.astype(jnp.float32) * (1.0 / HW)       # fold avg-pool's 1/HW into FC1
    out = pl.pallas_call(
        _se_kernel_3d,
        out_shape=jax.ShapeDtypeStruct((B, C, HW), x.dtype),
        grid_spec=pltpu.PrefetchScalarGridSpec(
            num_scalar_prefetch=0,
            grid=(num_blocks,),
            in_specs=[
                pl.BlockSpec((bb, C, HW), lambda b: (b, 0, 0)),
                pl.BlockSpec((C, Cr), lambda b: (0, 0)),
                pl.BlockSpec((Cr, C), lambda b: (0, 0)),
            ],
            out_specs=pl.BlockSpec((bb, C, HW), lambda b: (b, 0, 0)),
        ),
        compiler_params=cparams,
        input_output_aliases=alias,
    )(x3, w1_scaled, w2.astype(jnp.float32))
    return out.reshape(B, C, H, W)


def se_block_ref(x, w1, w2):
    # Pure-JAX reference matching the PyTorch forward.
    y = jnp.mean(x, axis=(2, 3))                          # (B, C)
    h = jnp.maximum(y @ w1, 0.0)                          # (B, C//r)
    s = jax.nn.sigmoid(h @ w2)                            # (B, C)
    return x * s[:, :, None, None]


if __name__ == "__main__":
    C, reduction = 64, 16
    Cr = C // reduction

    key = jax.random.PRNGKey(0)
    kx, k1, k2, k3, k4 = jax.random.split(key, 5)

    # Linear weights (no bias), stored transposed so the kernel computes y @ w1, h @ w2.
    w1 = jax.random.uniform(k1, (C, Cr), dtype=jnp.float32, minval=-1.0, maxval=1.0) / jnp.sqrt(C)
    w2 = jax.random.uniform(k2, (Cr, C), dtype=jnp.float32, minval=-1.0, maxval=1.0) / jnp.sqrt(Cr)

    # Case 1: HW=64 (not a multiple of 128) -> lane-dense flat matmul-pool path.
    x1 = jax.random.normal(kx, (2, C, 8, 8), dtype=jnp.float32)
    o1 = jax.block_until_ready(se_block(x1, w1, w2))
    assert o1.shape == x1.shape
    assert jnp.allclose(o1, se_block_ref(x1, w1, w2), atol=1e-5, rtol=1e-5), "case 1 mismatch"

    # Case 2: HW=256 (multiple of 128), odd batch -> (BB, C, HW) path with cdiv tail
    # when the batch is split across grid steps.
    x2 = jax.random.normal(k3, (5, C, 16, 16), dtype=jnp.float32)
    o2 = jax.block_until_ready(se_block(x2, w1, w2))
    assert jnp.allclose(o2, se_block_ref(x2, w1, w2), atol=1e-5, rtol=1e-5), "case 2 mismatch"

    # Case 3: force the big-feature-map two-pass fallback with an artificially small budget.
    x3 = jax.random.normal(k4, (2, C, 80, 80), dtype=jnp.float32)
    tiny_budget = dict(target_bytes=1 << 20, vmem_clamp=8 << 20, min_grid=2)
    o3 = jax.block_until_ready(se_block(x3, w1, w2, _budget=tiny_budget))
    assert jnp.allclose(o3, se_block_ref(x3, w1, w2), atol=1e-4, rtol=1e-4), "case 3 mismatch"

    print("KERNEL_OK")
</pallas_src>

<mosaic_0001>
module attributes {stable_mosaic.version = 11 : i64} {
  func.func @_se_kernel_flat(%arg0: i32, %arg1: memref<2x4096xf32, #tpu.memory_space<vmem>>, %arg2: memref<4096x64xf32, #tpu.memory_space<vmem>>, %arg3: memref<64x4096xf32, #tpu.memory_space<vmem>>, %arg4: memref<64x4xf32, #tpu.memory_space<vmem>>, %arg5: memref<4x64xf32, #tpu.memory_space<vmem>>, %arg6: memref<2x4096xf32, #tpu.memory_space<vmem>>) attributes {dimension_semantics = [#tpu.dimension_semantics<parallel>], iteration_bounds = array<i64: 1>, scalar_prefetch = 0 : i64, scratch_operands = 0 : i64, tpu.core_type = #tpu.core_type<tc>, window_params = [{transform_indices = @transform_0, window_bounds = array<i64: 2, 4096>}, {pipeline_mode = #tpu.pipeline_mode<synchronous>, transform_indices = @transform_1, window_bounds = array<i64: 4096, 64>}, {pipeline_mode = #tpu.pipeline_mode<synchronous>, transform_indices = @transform_2, window_bounds = array<i64: 64, 4096>}, {pipeline_mode = #tpu.pipeline_mode<synchronous>, transform_indices = @transform_3, window_bounds = array<i64: 64, 4>}, {pipeline_mode = #tpu.pipeline_mode<synchronous>, transform_indices = @transform_4, window_bounds = array<i64: 4, 64>}, {transform_indices = @transform_5, window_bounds = array<i64: 2, 4096>}]} {
    %c0 = arith.constant 0 : index
    %c0_0 = arith.constant 0 : index
    %0 = vector.load %arg1[%c0, %c0_0] : memref<2x4096xf32, #tpu.memory_space<vmem>>, vector<2x4096xf32>
    %c0_1 = arith.constant 0 : index
    %c0_2 = arith.constant 0 : index
    %1 = vector.load %arg2[%c0_1, %c0_2] : memref<4096x64xf32, #tpu.memory_space<vmem>>, vector<4096x64xf32>
    %cst = arith.constant dense<0.000000e+00> : vector<2x64xf32>
    %2 = tpu.matmul %0, %1, %cst {dimension_numbers = #tpu.dot_dimension_numbers<[1], [0], [0], [1], [0, 0, 1, 1], [], []>} : vector<2x4096xf32>, vector<4096x64xf32>, vector<2x64xf32> -> vector<2x64xf32>
    %c0_3 = arith.constant 0 : index
    %c0_4 = arith.constant 0 : index
    %3 = vector.load %arg4[%c0_3, %c0_4] : memref<64x4xf32, #tpu.memory_space<vmem>>, vector<64x4xf32>
    %cst_5 = arith.constant dense<0.000000e+00> : vector<2x4xf32>
    %4 = tpu.matmul %2, %3, %cst_5 {dimension_numbers = #tpu.dot_dimension_numbers<[1], [0], [0], [1], [0, 0, 1, 1], [], []>} : vector<2x64xf32>, vector<64x4xf32>, vector<2x4xf32> -> vector<2x4xf32>
    %cst_6 = arith.constant 0.000000e+00 : f32
    %5 = vector.broadcast %cst_6 : f32 to vector<2x4xf32>
    %6 = arith.maximumf %4, %5 : vector<2x4xf32>
    %c0_7 = arith.constant 0 : index
    %c0_8 = arith.constant 0 : index
    %7 = vector.load %arg5[%c0_7, %c0_8] : memref<4x64xf32, #tpu.memory_space<vmem>>, vector<4x64xf32>
    %cst_9 = arith.constant dense<0.000000e+00> : vector<2x64xf32>
    %8 = tpu.matmul %6, %7, %cst_9 {dimension_numbers = #tpu.dot_dimension_numbers<[1], [0], [0], [1], [0, 0, 1, 1], [], []>} : vector<2x4xf32>, vector<4x64xf32>, vector<2x64xf32> -> vector<2x64xf32>
    %9 = arith.negf %8 : vector<2x64xf32>
    %10 = math.exp %9 : vector<2x64xf32>
    %cst_10 = arith.constant 1.000000e+00 : f32
    %11 = vector.broadcast %cst_10 : f32 to vector<2x64xf32>
    %12 = arith.addf %11, %10 : vector<2x64xf32>
    %13 = arith.divf %11, %12 : vector<2x64xf32>
    %c0_11 = arith.constant 0 : index
    %c0_12 = arith.constant 0 : index
    %14 = vector.load %arg3[%c0_11, %c0_12] : memref<64x4096xf32, #tpu.memory_space<vmem>>, vector<64x4096xf32>
    %cst_13 = arith.constant dense<0.000000e+00> : vector<2x4096xf32>
    %15 = tpu.matmul %13, %14, %cst_13 {dimension_numbers = #tpu.dot_dimension_numbers<[1], [0], [0], [1], [0, 0, 1, 1], [], []>} : vector<2x64xf32>, vector<64x4096xf32>, vector<2x4096xf32> -> vector<2x4096xf32>
    %16 = arith.mulf %0, %15 : vector<2x4096xf32>
    %c0_14 = arith.constant 0 : index
    %c0_15 = arith.constant 0 : index
    %17 = vector.load %arg6[%c0_14, %c0_15] : memref<2x4096xf32, #tpu.memory_space<vmem>>, vector<2x4096xf32>
    tpu.vector_store %arg6[%c0_14, %c0_15], %16 {strides = array<i32>} : memref<2x4096xf32, #tpu.memory_space<vmem>>, vector<2x4096xf32>,
    return
  }
  func.func @transform_0(%arg0: i32) -> (i32, i32) {
    %c0_i32 = arith.constant 0 : i32
    %c0_i32_0 = arith.constant 0 : i32
    return %arg0, %c0_i32 : i32, i32
  }
  func.func @transform_1(%arg0: i32) -> (i32, i32) {
    %c0_i32 = arith.constant 0 : i32
    %c0_i32_0 = arith.constant 0 : i32
    %c0_i32_1 = arith.constant 0 : i32
    return %c0_i32, %c0_i32_0 : i32, i32
  }
  func.func @transform_2(%arg0: i32) -> (i32, i32) {
    %c0_i32 = arith.constant 0 : i32
    %c0_i32_0 = arith.constant 0 : i32
    %c0_i32_1 = arith.constant 0 : i32
    return %c0_i32, %c0_i32_0 : i32, i32
  }
  func.func @transform_3(%arg0: i32) -> (i32, i32) {
    %c0_i32 = arith.constant 0 : i32
    %c0_i32_0 = arith.constant 0 : i32
    %c0_i32_1 = arith.constant 0 : i32
    return %c0_i32, %c0_i32_0 : i32, i32
  }
  func.func @transform_4(%arg0: i32) -> (i32, i32) {
    %c0_i32 = arith.constant 0 : i32
    %c0_i32_0 = arith.constant 0 : i32
    %c0_i32_1 = arith.constant 0 : i32
    return %c0_i32, %c0_i32_0 : i32, i32
  }
  func.func @transform_5(%arg0: i32) -> (i32, i32) {
    %c0_i32 = arith.constant 0 : i32
    %c0_i32_0 = arith.constant 0 : i32
    return %arg0, %c0_i32 : i32, i32
  }
}

</mosaic_0001>

<llo_original>
// kernel: tpu_custom_call.1
$region0: #{tpu_custom_call.1}
  #allocation0 [shape = 'u32[]', space=smem, size = 0x4, offset = 0x4, fixed_abs, tag = 'smem constant byte address 0x4 - core index']
  #allocation1 [shape = 'u32[144,128]{1,0:T(1,128)}', space=vmem, size = 0x12000, scoped, tag = 'internal scratch']
  %s0 = inlined_call_operand.vmem [shape: f32[2,4096], index: 0, kind: input, shape index: {}]
  %s1 = inlined_call_operand.vmem [shape: f32[4096,64], index: 1, kind: input, shape index: {}]
  %s2 = inlined_call_operand.vmem [shape: f32[64,4096], index: 2, kind: input, shape index: {}]
  %s3 = inlined_call_operand.vmem [shape: f32[64,4], index: 3, kind: input, shape index: {}]
  %s4 = inlined_call_operand.vmem [shape: f32[4,64], index: 4, kind: input, shape index: {}]
  %s5 = inlined_call_operand.hbm [shape: f32[2,4096], index: 5, kind: output, shape index: {}]
  %s6 = sld [smem:[#allocation0]]
  $region30: #{tpu_custom_call.1} parent=0
    _
  %s8 = ssub.s32 1, %s6
  %s9 = scalar_select 0, %s8, %s6
  $region1: #{tpu_custom_call.1} parent=0
    #allocation2 [shape = 'u8[32768]{0}', space=vmem, size = 0x8000, scoped, tag = 'output window, operand 0, single buffered']
    #allocation3 [shape = 's32[1]{0}', space=sflag, size = 0x4, scoped, tag = 'scoped memory for tpu_custom_call.1']
    %10 = vsyncpa [#allocation3], 0
    // Predicated region
    $region2: #{tpu_custom_call.1} parent=1 // pred_check
      _
    $region3: #{tpu_custom_call.1} parent=1 // pred_check_branch
      %12 = sbr.rel (0) target = $region5
    $region4: #{tpu_custom_call.1} parent=1 // pred_region
      _
    $region5: #{tpu_custom_call.1} parent=1 // pred_fallthru
      _
    // Predicated region
    $region6: #{tpu_custom_call.1} parent=1 // pred_check
      _
    $region7: #{tpu_custom_call.1} parent=1 // pred_check_branch
      %14 = sbr.rel (0) target = $region9
    $region8: #{tpu_custom_call.1} parent=1 // pred_region
      _
    $region9: #{tpu_custom_call.1} parent=1 // pred_fallthru
      _
    // Predicated region
    $region10: #{tpu_custom_call.1} parent=1 // pred_check
      _
    $region11: #{tpu_custom_call.1} parent=1 // pred_check_branch
      %16 = sbr.rel (0) target = $region13
    $region12: #{tpu_custom_call.1} parent=1 // pred_region
      _
    $region13: #{tpu_custom_call.1} parent=1 // pred_fallthru
      _
    // Predicated region
    $region14: #{tpu_custom_call.1} parent=1 // pred_check
      _
    $region15: #{tpu_custom_call.1} parent=1 // pred_check_branch
      %18 = sbr.rel (0) target = $region17
    $region16: #{tpu_custom_call.1} parent=1 // pred_region
      _
    $region17: #{tpu_custom_call.1} parent=1 // pred_fallthru
      _
    // Predicated region
    $region18: #{tpu_custom_call.1} parent=1 // pred_check
      _
    $region19: #{tpu_custom_call.1} parent=1 // pred_check_branch
      %20 = sbr.rel (0) target = $region21
    $region20: #{tpu_custom_call.1} parent=1 // pred_region
      _
    $region21: #{tpu_custom_call.1} parent=1 // pred_fallthru
      _
    %v21 = vld [vmem:[%s0] sm:$0xff]
    %v22 = vld [vmem:[%s0 + $0x8] sm:$0xff]
    %v23 = vld [vmem:[%s0 + $0x10] sm:$0xff]
    %v24 = vld [vmem:[%s0 + $0x18] sm:$0xff]
    %v25 = vld [vmem:[%s0 + $0x20] sm:$0xff]
    %v26 = vld [vmem:[%s0 + $0x28] sm:$0xff]
    %v27 = vld [vmem:[%s0 + $0x30] sm:$0xff]
    %v28 = vld [vmem:[%s0 + $0x38] sm:$0xff]
    %v29 = vld [vmem:[%s1] sm:$0xff]
    %v30 = vld [vmem:[%s1 + $0x8] sm:$0xff]
    %v31 = vld [vmem:[%s1 + $0x10] sm:$0xff]
    %v32 = vld [vmem:[%s1 + $0x18] sm:$0xff]
    %v33 = vld [vmem:[%s1 + $0x20] sm:$0xff]
    %v34 = vld [vmem:[%s1 + $0x28] sm:$0xff]
    %v35 = vld [vmem:[%s1 + $0x30] sm:$0xff]
    %v36 = vld [vmem:[%s1 + $0x38] sm:$0xff]
    %v37 = vld [vmem:[%s1 + $0x40] sm:$0xff]
    %v38 = vld [vmem:[%s1 + $0x48] sm:$0xff]
    %v39 = vld [vmem:[%s1 + $0x50] sm:$0xff]
    %v40 = vld [vmem:[%s1 + $0x58] sm:$0xff]
    %v41 = vld [vmem:[%s1 + $0x60] sm:$0xff]
    %v42 = vld [vmem:[%s1 + $0x68] sm:$0xff]
    %v43 = vld [vmem:[%s1 + $0x70] sm:$0xff]
    %v44 = vld [vmem:[%s1 + $0x78] sm:$0xff]
    %v45 = vld [vmem:[%s1 + $0x80] sm:$0xff]
    %v46 = vld [vmem:[%s1 + $0x88] sm:$0xff]
    %v47 = vld [vmem:[%s1 + $0x90] sm:$0xff]
    %v48 = vld [vmem:[%s1 + $0x98] sm:$0xff]
    %v49 = vld [vmem:[%s1 + $0xa0] sm:$0xff]
    %v50 = vld [vmem:[%s1 + $0xa8] sm:$0xff]
    %v51 = vld [vmem:[%s1 + $0xb0] sm:$0xff]
    %v52 = vld [vmem:[%s1 + $0xb8] sm:$0xff]
    %v53 = vld [vmem:[%s1 + $0xc0] sm:$0xff]
    %v54 = vld [vmem:[%s1 + $0xc8] sm:$0xff]
    %v55 = vld [vmem:[%s1 + $0xd0] sm:$0xff]
    %v56 = vld [vmem:[%s1 + $0xd8] sm:$0xff]
    %v57 = vld [vmem:[%s1 + $0xe0] sm:$0xff]
    %v58 = vld [vmem:[%s1 + $0xe8] sm:$0xff]
    %v59 = vld [vmem:[%s1 + $0xf0] sm:$0xff]
    %v60 = vld [vmem:[%s1 + $0xf8] sm:$0xff]
    %v61 = vld [vmem:[%s1 + $0x100] sm:$0xff]
    %v62 = vld [vmem:[%s1 + $0x108] sm:$0xff]
    %v63 = vld [vmem:[%s1 + $0x110] sm:$0xff]
    %v64 = vld [vmem:[%s1 + $0x118] sm:$0xff]
    %v65 = vld [vmem:[%s1 + $0x120] sm:$0xff]
    %v66 = vld [vmem:[%s1 + $0x128] sm:$0xff]
    %v67 = vld [vmem:[%s1 + $0x130] sm:$0xff]
    %v68 = vld [vmem:[%s1 + $0x138] sm:$0xff]
    %v69 = vld [vmem:[%s1 + $0x140] sm:$0xff]
    %v70 = vld [vmem:[%s1 + $0x148] sm:$0xff]
    %v71 = vld [vmem:[%s1 + $0x150] sm:$0xff]
    %v72 = vld [vmem:[%s1 + $0x158] sm:$0xff]
    %v73 = vld [vmem:[%s1 + $0x160] sm:$0xff]
    %v74 = vld [vmem:[%s1 + $0x168] sm:$0xff]
    %v75 = vld [vmem:[%s1 + $0x170] sm:$0xff]
    %v76 = vld [vmem:[%s1 + $0x178] sm:$0xff]
    %v77 = vld [vmem:[%s1 + $0x180] sm:$0xff]
    %v78 = vld [vmem:[%s1 + $0x188] sm:$0xff]
    %v79 = vld [vmem:[%s1 + $0x190] sm:$0xff]
    %v80 = vld [vmem:[%s1 + $0x198] sm:$0xff]
    %v81 = vld [vmem:[%s1 + $0x1a0] sm:$0xff]
    %v82 = vld [vmem:[%s1 + $0x1a8] sm:$0xff]
    %v83 = vld [vmem:[%s1 + $0x1b0] sm:$0xff]
    %v84 = vld [vmem:[%s1 + $0x1b8] sm:$0xff]
    %v85 = vld [vmem:[%s1 + $0x1c0] sm:$0xff]
    %v86 = vld [vmem:[%s1 + $0x1c8] sm:$0xff]
    %v87 = vld [vmem:[%s1 + $0x1d0] sm:$0xff]
    %v88 = vld [vmem:[%s1 + $0x1d8] sm:$0xff]
    %v89 = vld [vmem:[%s1 + $0x1e0] sm:$0xff]
    %v90 = vld [vmem:[%s1 + $0x1e8] sm:$0xff]
    %v91 = vld [vmem:[%s1 + $0x1f0] sm:$0xff]
    %v92 = vld [vmem:[%s1 + $0x1f8] sm:$0xff]
    %v93 = vld [vmem:[%s1 + $0x200] sm:$0xff]
    %v94 = vld [vmem:[%s1 + $0x208] sm:$0xff]
    %v95 = vld [vmem:[%s1 + $0x210] sm:$0xff]
    %v96 = vld [vmem:[%s1 + $0x218] sm:$0xff]
    %v97 = vld [vmem:[%s1 + $0x220] sm:$0xff]
    %v98 = vld [vmem:[%s1 + $0x228] sm:$0xff]
    %v99 = vld [vmem:[%s1 + $0x230] sm:$0xff]
    %v100 = vld [vmem:[%s1 + $0x238] sm:$0xff]
    %v101 = vld [vmem:[%s1 + $0x240] sm:$0xff]
    %v102 = vld [vmem:[%s1 + $0x248] sm:$0xff]
    %v103 = vld [vmem:[%s1 + $0x250] sm:$0xff]
    %v104 = vld [vmem:[%s1 + $0x258] sm:$0xff]
    %v105 = vld [vmem:[%s1 + $0x260] sm:$0xff]
    %v106 = vld [vmem:[%s1 + $0x268] sm:$0xff]
    %v107 = vld [vmem:[%s1 + $0x270] sm:$0xff]
    %v108 = vld [vmem:[%s1 + $0x278] sm:$0xff]
    %v109 = vld [vmem:[%s1 + $0x280] sm:$0xff]
    %v110 = vld [vmem:[%s1 + $0x288] sm:$0xff]
    %v111 = vld [vmem:[%s1 + $0x290] sm:$0xff]
    %v112 = vld [vmem:[%s1 + $0x298] sm:$0xff]
    %v113 = vld [vmem:[%s1 + $0x2a0] sm:$0xff]
    %v114 = vld [vmem:[%s1 + $0x2a8] sm:$0xff]
    %v115 = vld [vmem:[%s1 + $0x2b0] sm:$0xff]
    %v116 = vld [vmem:[%s1 + $0x2b8] sm:$0xff]
    %v117 = vld [vmem:[%s1 + $0x2c0] sm:$0xff]
    %v118 = vld [vmem:[%s1 + $0x2c8] sm:$0xff]
    %v119 = vld [vmem:[%s1 + $0x2d0] sm:$0xff]
    %v120 = vld [vmem:[%s1 + $0x2d8] sm:$0xff]
    %v121 = vld [vmem:[%s1 + $0x2e0] sm:$0xff]
    %v122 = vld [vmem:[%s1 + $0x2e8] sm:$0xff]
    %v123 = vld [vmem:[%s1 + $0x2f0] sm:$0xff]
    %v124 = vld [vmem:[%s1 + $0x2f8] sm:$0xff]
    %v125 = vld [vmem:[%s1 + $0x300] sm:$0xff]
    %v126 = vld [vmem:[%s1 + $0x308] sm:$0xff]
    %v127 = vld [vmem:[%s1 + $0x310] sm:$0xff]
    %v128 = vld [vmem:[%s1 + $0x318] sm:$0xff]
    %v129 = vld [vmem:[%s1 + $0x320] sm:$0xff]
    %v130 = vld [vmem:[%s1 + $0x328] sm:$0xff]
    %v131 = vld [vmem:[%s1 + $0x330] sm:$0xff]
    %v132 = vld [vmem:[%s1 + $0x338] sm:$0xff]
    %v133 = vld [vmem:[%s1 + $0x340] sm:$0xff]
    %v134 = vld [vmem:[%s1 + $0x348] sm:$0xff]
    %v135 = vld [vmem:[%s1 + $0x350] sm:$0xff]
    %v136 = vld [vmem:[%s1 + $0x358] sm:$0xff]
    %v137 = vld [vmem:[%s1 + $0x360] sm:$0xff]
    %v138 = vld [vmem:[%s1 + $0x368] sm:$0xff]
    %v139 = vld [vmem:[%s1 + $0x370] sm:$0xff]
    %v140 = vld [vmem:[%s1 + $0x378] sm:$0xff]
    %v141 = vld [vmem:[%s1 + $0x380] sm:$0xff]
    %v142 = vld [vmem:[%s1 + $0x388] sm:$0xff]
    %v143 = vld [vmem:[%s1 + $0x390] sm:$0xff]
    %v144 = vld [vmem:[%s1 + $0x398] sm:$0xff]
    %v145 = vld [vmem:[%s1 + $0x3a0] sm:$0xff]
    %v146 = vld [vmem:[%s1 + $0x3a8] sm:$0xff]
    %v147 = vld [vmem:[%s1 + $0x3b0] sm:$0xff]
    %v148 = vld [vmem:[%s1 + $0x3b8] sm:$0xff]
    %v149 = vld [vmem:[%s1 + $0x3c0] sm:$0xff]
    %v150 = vld [vmem:[%s1 + $0x3c8] sm:$0xff]
    %v151 = vld [vmem:[%s1 + $0x3d0] sm:$0xff]
    %v152 = vld [vmem:[%s1 + $0x3d8] sm:$0xff]
    %v153 = vld [vmem:[%s1 + $0x3e0] sm:$0xff]
    %v154 = vld [vmem:[%s1 + $0x3e8] sm:$0xff]
    %v155 = vld [vmem:[%s1 + $0x3f0] sm:$0xff]
    %v156 = vld [vmem:[%s1 + $0x3f8] sm:$0xff]
    %v157 = vld [vmem:[%s1 + $0x400] sm:$0xff]
    %v158 = vld [vmem:[%s1 + $0x408] sm:$0xff]
    %v159 = vld [vmem:[%s1 + $0x410] sm:$0xff]
    %v160 = vld [vmem:[%s1 + $0x418] sm:$0xff]
    %v161 = vld [vmem:[%s1 + $0x420] sm:$0xff]
    %v162 = vld [vmem:[%s1 + $0x428] sm:$0xff]
    %v163 = vld [vmem:[%s1 + $0x430] sm:$0xff]
    %v164 = vld [vmem:[%s1 + $0x438] sm:$0xff]
    %v165 = vld [vmem:[%s1 + $0x440] sm:$0xff]
    %v166 = vld [vmem:[%s1 + $0x448] sm:$0xff]
    %v167 = vld [vmem:[%s1 + $0x450] sm:$0xff]
    %v168 = vld [vmem:[%s1 + $0x458] sm:$0xff]
    %v169 = vld [vmem:[%s1 + $0x460] sm:$0xff]
    %v170 = vld [vmem:[%s1 + $0x468] sm:$0xff]
    %v171 = vld [vmem:[%s1 + $0x470] sm:$0xff]
    %v172 = vld [vmem:[%s1 + $0x478] sm:$0xff]
    %v173 = vld [vmem:[%s1 + $0x480] sm:$0xff]
    %v174 = vld [vmem:[%s1 + $0x488] sm:$0xff]
    %v175 = vld [vmem:[%s1 + $0x490] sm:$0xff]
    %v176 = vld [vmem:[%s1 + $0x498] sm:$0xff]
    %v177 = vld [vmem:[%s1 + $0x4a0] sm:$0xff]
    %v178 = vld [vmem:[%s1 + $0x4a8] sm:$0xff]
    %v179 = vld [vmem:[%s1 + $0x4b0] sm:$0xff]
    %v180 = vld [vmem:[%s1 + $0x4b8] sm:$0xff]
    %v181 = vld [vmem:[%s1 + $0x4c0] sm:$0xff]
    %v182 = vld [vmem:[%s1 + $0x4c8] sm:$0xff]
    %v183 = vld [vmem:[%s1 + $0x4d0] sm:$0xff]
    %v184 = vld [vmem:[%s1 + $0x4d8] sm:$0xff]
    %v185 = vld [vmem:[%s1 + $0x4e0] sm:$0xff]
    %v186 = vld [vmem:[%s1 + $0x4e8] sm:$0xff]
    %v187 = vld [vmem:[%s1 + $0x4f0] sm:$0xff]
    %v188 = vld [vmem:[%s1 + $0x4f8] sm:$0xff]
    %v189 = vld [vmem:[%s1 + $0x500] sm:$0xff]
    %v190 = vld [vmem:[%s1 + $0x508] sm:$0xff]
    %v191 = vld [vmem:[%s1 + $0x510] sm:$0xff]
    %v192 = vld [vmem:[%s1 + $0x518] sm:$0xff]
    %v193 = vld [vmem:[%s1 + $0x520] sm:$0xff]
    %v194 = vld [vmem:[%s1 + $0x528] sm:$0xff]
    %v195 = vld [vmem:[%s1 + $0x530] sm:$0xff]
    %v196 = vld [vmem:[%s1 + $0x538] sm:$0xff]
    %v197 = vld [vmem:[%s1 + $0x540] sm:$0xff]
    %v198 = vld [vmem:[%s1 + $0x548] sm:$0xff]
    %v199 = vld [vmem:[%s1 + $0x550] sm:$0xff]
    %v200 = vld [vmem:[%s1 + $0x558] sm:$0xff]
    %v201 = vld [vmem:[%s1 + $0x560] sm:$0xff]
    %v202 = vld [vmem:[%s1 + $0x568] sm:$0xff]
    %v203 = vld [vmem:[%s1 + $0x570] sm:$0xff]
    %v204 = vld [vmem:[%s1 + $0x578] sm:$0xff]
    %v205 = vld [vmem:[%s1 + $0x580] sm:$0xff]
    %v206 = vld [vmem:[%s1 + $0x588] sm:$0xff]
    %v207 = vld [vmem:[%s1 + $0x590] sm:$0xff]
    %v208 = vld [vmem:[%s1 + $0x598] sm:$0xff]
    %v209 = vld [vmem:[%s1 + $0x5a0] sm:$0xff]
    %v210 = vld [vmem:[%s1 + $0x5a8] sm:$0xff]
    %v211 = vld [vmem:[%s1 + $0x5b0] sm:$0xff]
    %v212 = vld [vmem:[%s1 + $0x5b8] sm:$0xff]
    %v213 = vld [vmem:[%s1 + $0x5c0] sm:$0xff]
    %v214 = vld [vmem:[%s1 + $0x5c8] sm:$0xff]
    %v215 = vld [vmem:[%s1 + $0x5d0] sm:$0xff]
    %v216 = vld [vmem:[%s1 + $0x5d8] sm:$0xff]
    %v217 = vld [vmem:[%s1 + $0x5e0] sm:$0xff]
    %v218 = vld [vmem:[%s1 + $0x5e8] sm:$0xff]
    %v219 = vld [vmem:[%s1 + $0x5f0] sm:$0xff]
    %v220 = vld [vmem:[%s1 + $0x5f8] sm:$0xff]
    %v221 = vld [vmem:[%s1 + $0x600] sm:$0xff]
    %v222 = vld [vmem:[%s1 + $0x608] sm:$0xff]
    %v223 = vld [vmem:[%s1 + $0x610] sm:$0xff]
    %v224 = vld [vmem:[%s1 + $0x618] sm:$0xff]
    %v225 = vld [vmem:[%s1 + $0x620] sm:$0xff]
    %v226 = vld [vmem:[%s1 + $0x628] sm:$0xff]
    %v227 = vld [vmem:[%s1 + $0x630] sm:$0xff]
    %v228 = vld [vmem:[%s1 + $0x638] sm:$0xff]
    %v229 = vld [vmem:[%s1 + $0x640] sm:$0xff]
    %v230 = vld [vmem:[%s1 + $0x648] sm:$0xff]
    %v231 = vld [vmem:[%s1 + $0x650] sm:$0xff]
    %v232 = vld [vmem:[%s1 + $0x658] sm:$0xff]
    %v233 = vld [vmem:[%s1 + $0x660] sm:$0xff]
    %v234 = vld [vmem:[%s1 + $0x668] sm:$0xff]
    %v235 = vld [vmem:[%s1 + $0x670] sm:$0xff]
    %v236 = vld [vmem:[%s1 + $0x678] sm:$0xff]
    %v237 = vld [vmem:[%s1 + $0x680] sm:$0xff]
    %v238 = vld [vmem:[%s1 + $0x688] sm:$0xff]
    %v239 = vld [vmem:[%s1 + $0x690] sm:$0xff]
    %v240 = vld [vmem:[%s1 + $0x698] sm:$0xff]
    %v241 = vld [vmem:[%s1 + $0x6a0] sm:$0xff]
    %v242 = vld [vmem:[%s1 + $0x6a8] sm:$0xff]
    %v243 = vld [vmem:[%s1 + $0x6b0] sm:$0xff]
    %v244 = vld [vmem:[%s1 + $0x6b8] sm:$0xff]
    %v245 = vld [vmem:[%s1 + $0x6c0] sm:$0xff]
    %v246 = vld [vmem:[%s1 + $0x6c8] sm:$0xff]
    %v247 = vld [vmem:[%s1 + $0x6d0] sm:$0xff]
    %v248 = vld [vmem:[%s1 + $0x6d8] sm:$0xff]
    %v249 = vld [vmem:[%s1 + $0x6e0] sm:$0xff]
    %v250 = vld [vmem:[%s1 + $0x6e8] sm:$0xff]
    %v251 = vld [vmem:[%s1 + $0x6f0] sm:$0xff]
    %v252 = vld [vmem:[%s1 + $0x6f8] sm:$0xff]
    %v253 = vld [vmem:[%s1 + $0x700] sm:$0xff]
    %v254 = vld [vmem:[%s1 + $0x708] sm:$0xff]
    %v255 = vld [vmem:[%s1 + $0x710] sm:$0xff]
    %v256 = vld [vmem:[%s1 + $0x718] sm:$0xff]
    %v257 = vld [vmem:[%s1 + $0x720] sm:$0xff]
    %v258 = vld [vmem:[%s1 + $0x728] sm:$0xff]
    %v259 = vld [vmem:[%s1 + $0x730] sm:$0xff]
    %v260 = vld [vmem:[%s1 + $0x738] sm:$0xff]
    %v261 = vld [vmem:[%s1 + $0x740] sm:$0xff]
    %v262 = vld [vmem:[%s1 + $0x748] sm:$0xff]
    %v263 = vld [vmem:[%s1 + $0x750] sm:$0xff]
    %v264 = vld [vmem:[%s1 + $0x758] sm:$0xff]
    %v265 = vld [vmem:[%s1 + $0x760] sm:$0xff]
    %v266 = vld [vmem:[%s1 + $0x768] sm:$0xff]
    %v267 = vld [vmem:[%s1 + $0x770] sm:$0xff]
    %v268 = vld [vmem:[%s1 + $0x778] sm:$0xff]
    %v269 = vld [vmem:[%s1 + $0x780] sm:$0xff]
    %v270 = vld [vmem:[%s1 + $0x788] sm:$0xff]
    %v271 = vld [vmem:[%s1 + $0x790] sm:$0xff]
    %v272 = vld [vmem:[%s1 + $0x798] sm:$0xff]
    %v273 = vld [vmem:[%s1 + $0x7a0] sm:$0xff]
    %v274 = vld [vmem:[%s1 + $0x7a8] sm:$0xff]
    %v275 = vld [vmem:[%s1 + $0x7b0] sm:$0xff]
    %v276 = vld [vmem:[%s1 + $0x7b8] sm:$0xff]
    %v277 = vld [vmem:[%s1 + $0x7c0] sm:$0xff]
    %v278 = vld [vmem:[%s1 + $0x7c8] sm:$0xff]
    %v279 = vld [vmem:[%s1 + $0x7d0] sm:$0xff]
    %v280 = vld [vmem:[%s1 + $0x7d8] sm:$0xff]
    %v281 = vld [vmem:[%s1 + $0x7e0] sm:$0xff]
    %v282 = vld [vmem:[%s1 + $0x7e8] sm:$0xff]
    %v283 = vld [vmem:[%s1 + $0x7f0] sm:$0xff]
    %v284 = vld [vmem:[%s1 + $0x7f8] sm:$0xff]
    %v285 = vld [vmem:[%s1 + $0x800] sm:$0xff]
    %v286 = vld [vmem:[%s1 + $0x808] sm:$0xff]
    %v287 = vld [vmem:[%s1 + $0x810] sm:$0xff]
    %v288 = vld [vmem:[%s1 + $0x818] sm:$0xff]
    %v289 = vld [vmem:[%s1 + $0x820] sm:$0xff]
    %v290 = vld [vmem:[%s1 + $0x828] sm:$0xff]
    %v291 = vld [vmem:[%s1 + $0x830] sm:$0xff]
    %v292 = vld [vmem:[%s1 + $0x838] sm:$0xff]
    %v293 = vld [vmem:[%s1 + $0x840] sm:$0xff]
    %v294 = vld [vmem:[%s1 + $0x848] sm:$0xff]
    %v295 = vld [vmem:[%s1 + $0x850] sm:$0xff]
    %v296 = vld [vmem:[%s1 + $0x858] sm:$0xff]
    %v297 = vld [vmem:[%s1 + $0x860] sm:$0xff]
    %v298 = vld [vmem:[%s1 + $0x868] sm:$0xff]
    %v299 = vld [vmem:[%s1 + $0x870] sm:$0xff]
    %v300 = vld [vmem:[%s1 + $0x878] sm:$0xff]
    %v301 = vld [vmem:[%s1 + $0x880] sm:$0xff]
    %v302 = vld [vmem:[%s1 + $0x888] sm:$0xff]
    %v303 = vld [vmem:[%s1 + $0x890] sm:$0xff]
    %v304 = vld [vmem:[%s1 + $0x898] sm:$0xff]
    %v305 = vld [vmem:[%s1 + $0x8a0] sm:$0xff]
    %v306 = vld [vmem:[%s1 + $0x8a8] sm:$0xff]
    %v307 = vld [vmem:[%s1 + $0x8b0] sm:$0xff]
    %v308 = vld [vmem:[%s1 + $0x8b8] sm:$0xff]
    %v309 = vld [vmem:[%s1 + $0x8c0] sm:$0xff]
    %v310 = vld [vmem:[%s1 + $0x8c8] sm:$0xff]
    %v311 = vld [vmem:[%s1 + $0x8d0] sm:$0xff]
    %v312 = vld [vmem:[%s1 + $0x8d8] sm:$0xff]
    %v313 = vld [vmem:[%s1 + $0x8e0] sm:$0xff]
    %v314 = vld [vmem:[%s1 + $0x8e8] sm:$0xff]
    %v315 = vld [vmem:[%s1 + $0x8f0] sm:$0xff]
    %v316 = vld [vmem:[%s1 + $0x8f8] sm:$0xff]
    %v317 = vld [vmem:[%s1 + $0x900] sm:$0xff]
    %v318 = vld [vmem:[%s1 + $0x908] sm:$0xff]
    %v319 = vld [vmem:[%s1 + $0x910] sm:$0xff]
    %v320 = vld [vmem:[%s1 + $0x918] sm:$0xff]
    %v321 = vld [vmem:[%s1 + $0x920] sm:$0xff]
    %v322 = vld [vmem:[%s1 + $0x928] sm:$0xff]
    %v323 = vld [vmem:[%s1 + $0x930] sm:$0xff]
    %v324 = vld [vmem:[%s1 + $0x938] sm:$0xff]
    %v325 = vld [vmem:[%s1 + $0x940] sm:$0xff]
    %v326 = vld [vmem:[%s1 + $0x948] sm:$0xff]
    %v327 = vld [vmem:[%s1 + $0x950] sm:$0xff]
    %v328 = vld [vmem:[%s1 + $0x958] sm:$0xff]
    %v329 = vld [vmem:[%s1 + $0x960] sm:$0xff]
    %v330 = vld [vmem:[%s1 + $0x968] sm:$0xff]
    %v331 = vld [vmem:[%s1 + $0x970] sm:$0xff]
    %v332 = vld [vmem:[%s1 + $0x978] sm:$0xff]
    %v333 = vld [vmem:[%s1 + $0x980] sm:$0xff]
    %v334 = vld [vmem:[%s1 + $0x988] sm:$0xff]
    %v335 = vld [vmem:[%s1 + $0x990] sm:$0xff]
    %v336 = vld [vmem:[%s1 + $0x998] sm:$0xff]
    %v337 = vld [vmem:[%s1 + $0x9a0] sm:$0xff]
    %v338 = vld [vmem:[%s1 + $0x9a8] sm:$0xff]
    %v339 = vld [vmem:[%s1 + $0x9b0] sm:$0xff]
    %v340 = vld [vmem:[%s1 + $0x9b8] sm:$0xff]
    %v341 = vld [vmem:[%s1 + $0x9c0] sm:$0xff]
    %v342 = vld [vmem:[%s1 + $0x9c8] sm:$0xff]
    %v343 = vld [vmem:[%s1 + $0x9d0] sm:$0xff]
    %v344 = vld [vmem:[%s1 + $0x9d8] sm:$0xff]
    %v345 = vld [vmem:[%s1 + $0x9e0] sm:$0xff]
    %v346 = vld [vmem:[%s1 + $0x9e8] sm:$0xff]
    %v347 = vld [vmem:[%s1 + $0x9f0] sm:$0xff]
    %v348 = vld [vmem:[%s1 + $0x9f8] sm:$0xff]
    %v349 = vld [vmem:[%s1 + $0xa00] sm:$0xff]
    %v350 = vld [vmem:[%s1 + $0xa08] sm:$0xff]
    %v351 = vld [vmem:[%s1 + $0xa10] sm:$0xff]
    %v352 = vld [vmem:[%s1 + $0xa18] sm:$0xff]
    %v353 = vld [vmem:[%s1 + $0xa20] sm:$0xff]
    %v354 = vld [vmem:[%s1 + $0xa28] sm:$0xff]
    %v355 = vld [vmem:[%s1 + $0xa30] sm:$0xff]
    %v356 = vld [vmem:[%s1 + $0xa38] sm:$0xff]
    %v357 = vld [vmem:[%s1 + $0xa40] sm:$0xff]
    %v358 = vld [vmem:[%s1 + $0xa48] sm:$0xff]
    %v359 = vld [vmem:[%s1 + $0xa50] sm:$0xff]
    %v360 = vld [vmem:[%s1 + $0xa58] sm:$0xff]
    %v361 = vld [vmem:[%s1 + $0xa60] sm:$0xff]
    %v362 = vld [vmem:[%s1 + $0xa68] sm:$0xff]
    %v363 = vld [vmem:[%s1 + $0xa70] sm:$0xff]
    %v364 = vld [vmem:[%s1 + $0xa78] sm:$0xff]
    %v365 = vld [vmem:[%s1 + $0xa80] sm:$0xff]
    %v366 = vld [vmem:[%s1 + $0xa88] sm:$0xff]
    %v367 = vld [vmem:[%s1 + $0xa90] sm:$0xff]
    %v368 = vld [vmem:[%s1 + $0xa98] sm:$0xff]
    %v369 = vld [vmem:[%s1 + $0xaa0] sm:$0xff]
    %v370 = vld [vmem:[%s1 + $0xaa8] sm:$0xff]
    %v371 = vld [vmem:[%s1 + $0xab0] sm:$0xff]
    %v372 = vld [vmem:[%s1 + $0xab8] sm:$0xff]
    %v373 = vld [vmem:[%s1 + $0xac0] sm:$0xff]
    %v374 = vld [vmem:[%s1 + $0xac8] sm:$0xff]
    %v375 = vld [vmem:[%s1 + $0xad0] sm:$0xff]
    %v376 = vld [vmem:[%s1 + $0xad8] sm:$0xff]
    %v377 = vld [vmem:[%s1 + $0xae0] sm:$0xff]
    %v378 = vld [vmem:[%s1 + $0xae8] sm:$0xff]
    %v379 = vld [vmem:[%s1 + $0xaf0] sm:$0xff]
    %v380 = vld [vmem:[%s1 + $0xaf8] sm:$0xff]
    %v381 = vld [vmem:[%s1 + $0xb00] sm:$0xff]
    %v382 = vld [vmem:[%s1 + $0xb08] sm:$0xff]
    %v383 = vld [vmem:[%s1 + $0xb10] sm:$0xff]
    %v384 = vld [vmem:[%s1 + $0xb18] sm:$0xff]
    %v385 = vld [vmem:[%s1 + $0xb20] sm:$0xff]
    %v386 = vld [vmem:[%s1 + $0xb28] sm:$0xff]
    %v387 = vld [vmem:[%s1 + $0xb30] sm:$0xff]
    %v388 = vld [vmem:[%s1 + $0xb38] sm:$0xff]
    %v389 = vld [vmem:[%s1 + $0xb40] sm:$0xff]
    %v390 = vld [vmem:[%s1 + $0xb48] sm:$0xff]
    %v391 = vld [vmem:[%s1 + $0xb50] sm:$0xff]
    %v392 = vld [vmem:[%s1 + $0xb58] sm:$0xff]
    %v393 = vld [vmem:[%s1 + $0xb60] sm:$0xff]
    %v394 = vld [vmem:[%s1 + $0xb68] sm:$0xff]
    %v395 = vld [vmem:[%s1 + $0xb70] sm:$0xff]
    %v396 = vld [vmem:[%s1 + $0xb78] sm:$0xff]
    %v397 = vld [vmem:[%s1 + $0xb80] sm:$0xff]
    %v398 = vld [vmem:[%s1 + $0xb88] sm:$0xff]
    %v399 = vld [vmem:[%s1 + $0xb90] sm:$0xff]
    %v400 = vld [vmem:[%s1 + $0xb98] sm:$0xff]
    %v401 = vld [vmem:[%s1 + $0xba0] sm:$0xff]
    %v402 = vld [vmem:[%s1 + $0xba8] sm:$0xff]
    %v403 = vld [vmem:[%s1 + $0xbb0] sm:$0xff]
    %v404 = vld [vmem:[%s1 + $0xbb8] sm:$0xff]
    %v405 = vld [vmem:[%s1 + $0xbc0] sm:$0xff]
    %v406 = vld [vmem:[%s1 + $0xbc8] sm:$0xff]
    %v407 = vld [vmem:[%s1 + $0xbd0] sm:$0xff]
    %v408 = vld [vmem:[%s1 + $0xbd8] sm:$0xff]
    %v409 = vld [vmem:[%s1 + $0xbe0] sm:$0xff]
    %v410 = vld [vmem:[%s1 + $0xbe8] sm:$0xff]
    %v411 = vld [vmem:[%s1 + $0xbf0] sm:$0xff]
    %v412 = vld [vmem:[%s1 + $0xbf8] sm:$0xff]
    %v413 = vld [vmem:[%s1 + $0xc00] sm:$0xff]
    %v414 = vld [vmem:[%s1 + $0xc08] sm:$0xff]
    %v415 = vld [vmem:[%s1 + $0xc10] sm:$0xff]
    %v416 = vld [vmem:[%s1 + $0xc18] sm:$0xff]
    %v417 = vld [vmem:[%s1 + $0xc20] sm:$0xff]
    %v418 = vld [vmem:[%s1 + $0xc28] sm:$0xff]
    %v419 = vld [vmem:[%s1 + $0xc30] sm:$0xff]
    %v420 = vld [vmem:[%s1 + $0xc38] sm:$0xff]
    %v421 = vld [vmem:[%s1 + $0xc40] sm:$0xff]
    %v422 = vld [vmem:[%s1 + $0xc48] sm:$0xff]
    %v423 = vld [vmem:[%s1 + $0xc50] sm:$0xff]
    %v424 = vld [vmem:[%s1 + $0xc58] sm:$0xff]
    %v425 = vld [vmem:[%s1 + $0xc60] sm:$0xff]
    %v426 = vld [vmem:[%s1 + $0xc68] sm:$0xff]
    %v427 = vld [vmem:[%s1 + $0xc70] sm:$0xff]
    %v428 = vld [vmem:[%s1 + $0xc78] sm:$0xff]
    %v429 = vld [vmem:[%s1 + $0xc80] sm:$0xff]
    %v430 = vld [vmem:[%s1 + $0xc88] sm:$0xff]
    %v431 = vld [vmem:[%s1 + $0xc90] sm:$0xff]
    %v432 = vld [vmem:[%s1 + $0xc98] sm:$0xff]
    %v433 = vld [vmem:[%s1 + $0xca0] sm:$0xff]
    %v434 = vld [vmem:[%s1 + $0xca8] sm:$0xff]
    %v435 = vld [vmem:[%s1 + $0xcb0] sm:$0xff]
    %v436 = vld [vmem:[%s1 + $0xcb8] sm:$0xff]
    %v437 = vld [vmem:[%s1 + $0xcc0] sm:$0xff]
    %v438 = vld [vmem:[%s1 + $0xcc8] sm:$0xff]
    %v439 = vld [vmem:[%s1 + $0xcd0] sm:$0xff]
    %v440 = vld [vmem:[%s1 + $0xcd8] sm:$0xff]
    %v441 = vld [vmem:[%s1 + $0xce0] sm:$0xff]
    %v442 = vld [vmem:[%s1 + $0xce8] sm:$0xff]
    %v443 = vld [vmem:[%s1 + $0xcf0] sm:$0xff]
    %v444 = vld [vmem:[%s1 + $0xcf8] sm:$0xff]
    %v445 = vld [vmem:[%s1 + $0xd00] sm:$0xff]
    %v446 = vld [vmem:[%s1 + $0xd08] sm:$0xff]
    %v447 = vld [vmem:[%s1 + $0xd10] sm:$0xff]
    %v448 = vld [vmem:[%s1 + $0xd18] sm:$0xff]
    %v449 = vld [vmem:[%s1 + $0xd20] sm:$0xff]
    %v450 = vld [vmem:[%s1 + $0xd28] sm:$0xff]
    %v451 = vld [vmem:[%s1 + $0xd30] sm:$0xff]
    %v452 = vld [vmem:[%s1 + $0xd38] sm:$0xff]
    %v453 = vld [vmem:[%s1 + $0xd40] sm:$0xff]
    %v454 = vld [vmem:[%s1 + $0xd48] sm:$0xff]
    %v455 = vld [vmem:[%s1 + $0xd50] sm:$0xff]
    %v456 = vld [vmem:[%s1 + $0xd58] sm:$0xff]
    %v457 = vld [vmem:[%s1 + $0xd60] sm:$0xff]
    %v458 = vld [vmem:[%s1 + $0xd68] sm:$0xff]
    %v459 = vld [vmem:[%s1 + $0xd70] sm:$0xff]
    %v460 = vld [vmem:[%s1 + $0xd78] sm:$0xff]
    %v461 = vld [vmem:[%s1 + $0xd80] sm:$0xff]
    %v462 = vld [vmem:[%s1 + $0xd88] sm:$0xff]
    %v463 = vld [vmem:[%s1 + $0xd90] sm:$0xff]
    %v464 = vld [vmem:[%s1 + $0xd98] sm:$0xff]
    %v465 = vld [vmem:[%s1 + $0xda0] sm:$0xff]
    %v466 = vld [vmem:[%s1 + $0xda8] sm:$0xff]
    %v467 = vld [vmem:[%s1 + $0xdb0] sm:$0xff]
    %v468 = vld [vmem:[%s1 + $0xdb8] sm:$0xff]
    %v469 = vld [vmem:[%s1 + $0xdc0] sm:$0xff]
    %v470 = vld [vmem:[%s1 + $0xdc8] sm:$0xff]
    %v471 = vld [vmem:[%s1 + $0xdd0] sm:$0xff]
    %v472 = vld [vmem:[%s1 + $0xdd8] sm:$0xff]
    %v473 = vld [vmem:[%s1 + $0xde0] sm:$0xff]
    %v474 = vld [vmem:[%s1 + $0xde8] sm:$0xff]
    %v475 = vld [vmem:[%s1 + $0xdf0] sm:$0xff]
    %v476 = vld [vmem:[%s1 + $0xdf8] sm:$0xff]
    %v477 = vld [vmem:[%s1 + $0xe00] sm:$0xff]
    %v478 = vld [vmem:[%s1 + $0xe08] sm:$0xff]
    %v479 = vld [vmem:[%s1 + $0xe10] sm:$0xff]
    %v480 = vld [vmem:[%s1 + $0xe18] sm:$0xff]
    %v481 = vld [vmem:[%s1 + $0xe20] sm:$0xff]
    %v482 = vld [vmem:[%s1 + $0xe28] sm:$0xff]
    %v483 = vld [vmem:[%s1 + $0xe30] sm:$0xff]
    %v484 = vld [vmem:[%s1 + $0xe38] sm:$0xff]
    %v485 = vld [vmem:[%s1 + $0xe40] sm:$0xff]
    %v486 = vld [vmem:[%s1 + $0xe48] sm:$0xff]
    %v487 = vld [vmem:[%s1 + $0xe50] sm:$0xff]
    %v488 = vld [vmem:[%s1 + $0xe58] sm:$0xff]
    %v489 = vld [vmem:[%s1 + $0xe60] sm:$0xff]
    %v490 = vld [vmem:[%s1 + $0xe68] sm:$0xff]
    %v491 = vld [vmem:[%s1 + $0xe70] sm:$0xff]
    %v492 = vld [vmem:[%s1 + $0xe78] sm:$0xff]
    %v493 = vld [vmem:[%s1 + $0xe80] sm:$0xff]
    %v494 = vld [vmem:[%s1 + $0xe88] sm:$0xff]
    %v495 = vld [vmem:[%s1 + $0xe90] sm:$0xff]
    %v496 = vld [vmem:[%s1 + $0xe98] sm:$0xff]
    %v497 = vld [vmem:[%s1 + $0xea0] sm:$0xff]
    %v498 = vld [vmem:[%s1 + $0xea8] sm:$0xff]
    %v499 = vld [vmem:[%s1 + $0xeb0] sm:$0xff]
    %v500 = vld [vmem:[%s1 + $0xeb8] sm:$0xff]
    %v501 = vld [vmem:[%s1 + $0xec0] sm:$0xff]
    %v502 = vld [vmem:[%s1 + $0xec8] sm:$0xff]
    %v503 = vld [vmem:[%s1 + $0xed0] sm:$0xff]
    %v504 = vld [vmem:[%s1 + $0xed8] sm:$0xff]
    %v505 = vld [vmem:[%s1 + $0xee0] sm:$0xff]
    %v506 = vld [vmem:[%s1 + $0xee8] sm:$0xff]
    %v507 = vld [vmem:[%s1 + $0xef0] sm:$0xff]
    %v508 = vld [vmem:[%s1 + $0xef8] sm:$0xff]
    %v509 = vld [vmem:[%s1 + $0xf00] sm:$0xff]
    %v510 = vld [vmem:[%s1 + $0xf08] sm:$0xff]
    %v511 = vld [vmem:[%s1 + $0xf10] sm:$0xff]
    %v512 = vld [vmem:[%s1 + $0xf18] sm:$0xff]
    %v513 = vld [vmem:[%s1 + $0xf20] sm:$0xff]
    %v514 = vld [vmem:[%s1 + $0xf28] sm:$0xff]
    %v515 = vld [vmem:[%s1 + $0xf30] sm:$0xff]
    %v516 = vld [vmem:[%s1 + $0xf38] sm:$0xff]
    %v517 = vld [vmem:[%s1 + $0xf40] sm:$0xff]
    %v518 = vld [vmem:[%s1 + $0xf48] sm:$0xff]
    %v519 = vld [vmem:[%s1 + $0xf50] sm:$0xff]
    %v520 = vld [vmem:[%s1 + $0xf58] sm:$0xff]
    %v521 = vld [vmem:[%s1 + $0xf60] sm:$0xff]
    %v522 = vld [vmem:[%s1 + $0xf68] sm:$0xff]
    %v523 = vld [vmem:[%s1 + $0xf70] sm:$0xff]
    %v524 = vld [vmem:[%s1 + $0xf78] sm:$0xff]
    %v525 = vld [vmem:[%s1 + $0xf80] sm:$0xff]
    %v526 = vld [vmem:[%s1 + $0xf88] sm:$0xff]
    %v527 = vld [vmem:[%s1 + $0xf90] sm:$0xff]
    %v528 = vld [vmem:[%s1 + $0xf98] sm:$0xff]
    %v529 = vld [vmem:[%s1 + $0xfa0] sm:$0xff]
    %v530 = vld [vmem:[%s1 + $0xfa8] sm:$0xff]
    %v531 = vld [vmem:[%s1 + $0xfb0] sm:$0xff]
    %v532 = vld [vmem:[%s1 + $0xfb8] sm:$0xff]
    %v533 = vld [vmem:[%s1 + $0xfc0] sm:$0xff]
    %v534 = vld [vmem:[%s1 + $0xfc8] sm:$0xff]
    %v535 = vld [vmem:[%s1 + $0xfd0] sm:$0xff]
    %v536 = vld [vmem:[%s1 + $0xfd8] sm:$0xff]
    %v537 = vld [vmem:[%s1 + $0xfe0] sm:$0xff]
    %v538 = vld [vmem:[%s1 + $0xfe8] sm:$0xff]
    %v539 = vld [vmem:[%s1 + $0xff0] sm:$0xff]
    %v540 = vld [vmem:[%s1 + $0xff8] sm:$0xff]
    %v549 = vcombine.high %v21, %v21
    %v551 = vunpack.c.l.s4 1983009808
    %v552 = vunpack.c.0.s8 %v551
    %v553 = vlaneseq
    %v554 = vshrl.u32 %v553, 7
    %v555 = vsub.s32 %v552, %v554
    %v556 = vrot.slane %v21, %v555
    %v558 = vunpack.c.l.s4 1983009808
    %v559 = vunpack.c.0.s8 %v558
    %v560 = vlaneseq
    %v561 = vshrl.u32 %v560, 7
    %v562 = vsub.s32 %v559, %v561
    %v563 = vrot.slane %v549, %v562
    %v564 = vcombine.high %v556, %v556
    %v565 = vcombine.high %v563, %v563
    %v566 = vcombine.high %v22, %v22
    %v568 = vunpack.c.l.s4 1983009808
    %v569 = vunpack.c.0.s8 %v568
    %v570 = vlaneseq
    %v571 = vshrl.u32 %v570, 7
    %v572 = vsub.s32 %v569, %v571
    %v573 = vrot.slane %v22, %v572
    %v575 = vunpack.c.l.s4 1983009808
    %v576 = vunpack.c.0.s8 %v575
    %v577 = vlaneseq
    %v578 = vshrl.u32 %v577, 7
    %v579 = vsub.s32 %v576, %v578
    %v580 = vrot.slane %v566, %v579
    %v581 = vcombine.high %v573, %v573
    %v582 = vcombine.high %v580, %v580
    %v583 = vcombine.high %v23, %v23
    %v585 = vunpack.c.l.s4 1983009808
    %v586 = vunpack.c.0.s8 %v585
    %v587 = vlaneseq
    %v588 = vshrl.u32 %v587, 7
    %v589 = vsub.s32 %v586, %v588
    %v590 = vrot.slane %v23, %v589
    %v592 = vunpack.c.l.s4 1983009808
    %v593 = vunpack.c.0.s8 %v592
    %v594 = vlaneseq
    %v595 = vshrl.u32 %v594, 7
    %v596 = vsub.s32 %v593, %v595
    %v597 = vrot.slane %v583, %v596
    %v598 = vcombine.high %v590, %v590
    %v599 = vcombine.high %v597, %v597
    %v600 = vcombine.high %v24, %v24
    %v602 = vunpack.c.l.s4 1983009808
    %v603 = vunpack.c.0.s8 %v602
    %v604 = vlaneseq
    %v605 = vshrl.u32 %v604, 7
    %v606 = vsub.s32 %v603, %v605
    %v607 = vrot.slane %v24, %v606
    %v609 = vunpack.c.l.s4 1983009808
    %v610 = vunpack.c.0.s8 %v609
    %v611 = vlaneseq
    %v612 = vshrl.u32 %v611, 7
    %v613 = vsub.s32 %v610, %v612
    %v614 = vrot.slane %v600, %v613
    %v615 = vcombine.high %v607, %v607
    %v616 = vcombine.high %v614, %v614
    %v617 = vcombine.high %v25, %v25
    %v619 = vunpack.c.l.s4 1983009808
    %v620 = vunpack.c.0.s8 %v619
    %v621 = vlaneseq
    %v622 = vshrl.u32 %v621, 7
    %v623 = vsub.s32 %v620, %v622
    %v624 = vrot.slane %v25, %v623
    %v626 = vunpack.c.l.s4 1983009808
    %v627 = vunpack.c.0.s8 %v626
    %v628 = vlaneseq
    %v629 = vshrl.u32 %v628, 7
    %v630 = vsub.s32 %v627, %v629
    %v631 = vrot.slane %v617, %v630
    %v632 = vcombine.high %v624, %v624
    %v633 = vcombine.high %v631, %v631
    %v634 = vcombine.high %v26, %v26
    %v636 = vunpack.c.l.s4 1983009808
    %v637 = vunpack.c.0.s8 %v636
    %v638 = vlaneseq
    %v639 = vshrl.u32 %v638, 7
    %v640 = vsub.s32 %v637, %v639
    %v641 = vrot.slane %v26, %v640
    %v643 = vunpack.c.l.s4 1983009808
    %v644 = vunpack.c.0.s8 %v643
    %v645 = vlaneseq
    %v646 = vshrl.u32 %v645, 7
    %v647 = vsub.s32 %v644, %v646
    %v648 = vrot.slane %v634, %v647
    %v649 = vcombine.high %v641, %v641
    %v650 = vcombine.high %v648, %v648
    %v651 = vcombine.high %v27, %v27
    %v653 = vunpack.c.l.s4 1983009808
    %v654 = vunpack.c.0.s8 %v653
    %v655 = vlaneseq
    %v656 = vshrl.u32 %v655, 7
    %v657 = vsub.s32 %v654, %v656
    %v658 = vrot.slane %v27, %v657
    %v660 = vunpack.c.l.s4 1983009808
    %v661 = vunpack.c.0.s8 %v660
    %v662 = vlaneseq
    %v663 = vshrl.u32 %v662, 7
    %v664 = vsub.s32 %v661, %v663
    %v665 = vrot.slane %v651, %v664
    %v666 = vcombine.high %v658, %v658
    %v667 = vcombine.high %v665, %v665
    %v668 = vcombine.high %v28, %v28
    %v670 = vunpack.c.l.s4 1983009808
    %v671 = vunpack.c.0.s8 %v670
    %v672 = vlaneseq
    %v673 = vshrl.u32 %v672, 7
    %v674 = vsub.s32 %v671, %v673
    %v675 = vrot.slane %v28, %v674
    %v677 = vunpack.c.l.s4 1983009808
    %v678 = vunpack.c.0.s8 %v677
    %v679 = vlaneseq
    %v680 = vshrl.u32 %v679, 7
    %v681 = vsub.s32 %v678, %v680
    %v682 = vrot.slane %v668, %v681
    %v683 = vcombine.high %v675, %v675
    %v684 = vcombine.high %v682, %v682
    %717 = vmatprep.subr.mxu0 0.0
    %718 = vmatpush1.msra.mxu0 %v29
    %719 = vmatprep.subr.mxu0 0.0
    %720 = vmatpush1.msra.mxu0 %v30
    %721 = vmatprep.subr.mxu0 0.0
    %722 = vmatpush1.msra.mxu0 %v31
    %723 = vmatprep.subr.mxu0 0.0
    %724 = vmatpush1.msra.mxu0 %v32
    %725 = vmatprep.subr.mxu0 0.0
    %726 = vmatpush1.msra.mxu0 %v33
    %727 = vmatprep.subr.mxu0 0.0
    %728 = vmatpush1.msra.mxu0 %v34
    %729 = vmatprep.subr.mxu0 0.0
    %730 = vmatpush1.msra.mxu0 %v35
    %731 = vmatprep.subr.mxu0 0.0
    %732 = vmatpush1.msra.mxu0 %v36
    %733 = vmatprep.subr.mxu0 0.0
    %734 = vmatpush1.msra.mxu0 %v37
    %735 = vmatprep.subr.mxu0 0.0
    %736 = vmatpush1.msra.mxu0 %v38
    %737 = vmatprep.subr.mxu0 0.0
    %738 = vmatpush1.msra.mxu0 %v39
    %739 = vmatprep.subr.mxu0 0.0
    %740 = vmatpush1.msra.mxu0 %v40
    %741 = vmatprep.subr.mxu0 0.0
    %742 = vmatpush1.msra.mxu0 %v41
    %743 = vmatprep.subr.mxu0 0.0
    %744 = vmatpush1.msra.mxu0 %v42
    %745 = vmatprep.subr.mxu0 0.0
    %746 = vmatpush1.msra.mxu0 %v43
    %747 = vmatprep.subr.mxu0 0.0
    %748 = vmatpush1.msra.mxu0 %v44
    %749 = vmatprep.subr.mxu0 0.0
    %750 = vmatpush1.msra.mxu0 %v45
    %751 = vmatprep.subr.mxu0 0.0
    %752 = vmatpush1.msra.mxu0 %v46
    %753 = vmatprep.subr.mxu0 0.0
    %754 = vmatpush1.msra.mxu0 %v47
    %755 = vmatprep.subr.mxu0 0.0
    %756 = vmatpush1.msra.mxu0 %v48
    %757 = vmatprep.subr.mxu0 0.0
    %758 = vmatpush1.msra.mxu0 %v49
    %759 = vmatprep.subr.mxu0 0.0
    %760 = vmatpush1.msra.mxu0 %v50
    %761 = vmatprep.subr.mxu0 0.0
    %762 = vmatpush1.msra.mxu0 %v51
    %763 = vmatprep.subr.mxu0 0.0
    %764 = vmatpush1.msra.mxu0 %v52
    %765 = vmatprep.subr.mxu0 0.0
    %766 = vmatpush1.msra.mxu0 %v53
    %767 = vmatprep.subr.mxu0 0.0
    %768 = vmatpush1.msra.mxu0 %v54
    %769 = vmatprep.subr.mxu0 0.0
    %770 = vmatpush1.msra.mxu0 %v55
    %771 = vmatprep.subr.mxu0 0.0
    %772 = vmatpush1.msra.mxu0 %v56
    %773 = vmatprep.subr.mxu0 0.0
    %774 = vmatpush1.msra.mxu0 %v57
    %775 = vmatprep.subr.mxu0 0.0
    %776 = vmatpush1.msra.mxu0 %v58
    %777 = vmatprep.subr.mxu0 0.0
    %778 = vmatpush1.msra.mxu0 %v59
    %779 = vmatprep.subr.mxu0 0.0
    %780 = vmatpush1.msra.mxu0 %v60
    %781 = vmatprep.mubr.f32.mxu0 %v564
    %782 = vmatmul.mubr.f32.gmra.mrb[0].mxu0 %v556
    %v783 = vpop.f32.mrb[0].mxu0
    %v784 = vadd.f32 0.0, %v783
    %v785 = vpop.f32.mrb[0].mxu0
    %786 = vdwg.mxu0
    %787 = vmatprep.subr.mxu0 0.0
    %788 = vmatpush1.msra.mxu0 %v61
    %789 = vmatprep.subr.mxu0 0.0
    %790 = vmatpush1.msra.mxu0 %v62
    %791 = vmatprep.subr.mxu0 0.0
    %792 = vmatpush1.msra.mxu0 %v63
    %793 = vmatprep.subr.mxu0 0.0
    %794 = vmatpush1.msra.mxu0 %v64
    %795 = vmatprep.subr.mxu0 0.0
    %796 = vmatpush1.msra.mxu0 %v65
    %797 = vmatprep.subr.mxu0 0.0
    %798 = vmatpush1.msra.mxu0 %v66
    %799 = vmatprep.subr.mxu0 0.0
    %800 = vmatpush1.msra.mxu0 %v67
    %801 = vmatprep.subr.mxu0 0.0
    %802 = vmatpush1.msra.mxu0 %v68
    %803 = vmatprep.subr.mxu0 0.0
    %804 = vmatpush1.msra.mxu0 %v69
    %805 = vmatprep.subr.mxu0 0.0
    %806 = vmatpush1.msra.mxu0 %v70
    %807 = vmatprep.subr.mxu0 0.0
    %808 = vmatpush1.msra.mxu0 %v71
    %809 = vmatprep.subr.mxu0 0.0
    %810 = vmatpush1.msra.mxu0 %v72
    %811 = vmatprep.subr.mxu0 0.0
    %812 = vmatpush1.msra.mxu0 %v73
    %813 = vmatprep.subr.mxu0 0.0
    %814 = vmatpush1.msra.mxu0 %v74
    %815 = vmatprep.subr.mxu0 0.0
    %816 = vmatpush1.msra.mxu0 %v75
    %817 = vmatprep.subr.mxu0 0.0
    %818 = vmatpush1.msra.mxu0 %v76
    %819 = vmatprep.subr.mxu0 0.0
    %820 = vmatpush1.msra.mxu0 %v77
    %821 = vmatprep.subr.mxu0 0.0
    %822 = vmatpush1.msra.mxu0 %v78
    %823 = vmatprep.subr.mxu0 0.0
    %824 = vmatpush1.msra.mxu0 %v79
    %825 = vmatprep.subr.mxu0 0.0
    %826 = vmatpush1.msra.mxu0 %v80
    %827 = vmatprep.subr.mxu0 0.0
    %828 = vmatpush1.msra.mxu0 %v81
    %829 = vmatprep.subr.mxu0 0.0
    %830 = vmatpush1.msra.mxu0 %v82
    %831 = vmatprep.subr.mxu0 0.0
    %832 = vmatpush1.msra.mxu0 %v83
    %833 = vmatprep.subr.mxu0 0.0
    %834 = vmatpush1.msra.mxu0 %v84
    %835 = vmatprep.subr.mxu0 0.0
    %836 = vmatpush1.msra.mxu0 %v85
    %837 = vmatprep.subr.mxu0 0.0
    %838 = vmatpush1.msra.mxu0 %v86
    %839 = vmatprep.subr.mxu0 0.0
    %840 = vmatpush1.msra.mxu0 %v87
    %841 = vmatprep.subr.mxu0 0.0
    %842 = vmatpush1.msra.mxu0 %v88
    %843 = vmatprep.subr.mxu0 0.0
    %844 = vmatpush1.msra.mxu0 %v89
    %845 = vmatprep.subr.mxu0 0.0
    %846 = vmatpush1.msra.mxu0 %v90
    %847 = vmatprep.subr.mxu0 0.0
    %848 = vmatpush1.msra.mxu0 %v91
    %849 = vmatprep.subr.mxu0 0.0
    %850 = vmatpush1.msra.mxu0 %v92
    %851 = vmatprep.mubr.f32.mxu0 %v565
    %852 = vmatmul.mubr.f32.gmra.mrb[0].mxu0 %v563
    %v853 = vpop.f32.mrb[0].mxu0
    %v854 = vadd.f32 %v784, %v853
    %v855 = vpop.f32.mrb[0].mxu0
    %856 = vdwg.mxu0
    %857 = vmatprep.subr.mxu0 0.0
    %858 = vmatpush1.msra.mxu0 %v93
    %859 = vmatprep.subr.mxu0 0.0
    %860 = vmatpush1.msra.mxu0 %v94
    %861 = vmatprep.subr.mxu0 0.0
    %862 = vmatpush1.msra.mxu0 %v95
    %863 = vmatprep.subr.mxu0 0.0
    %864 = vmatpush1.msra.mxu0 %v96
    %865 = vmatprep.subr.mxu0 0.0
    %866 = vmatpush1.msra.mxu0 %v97
    %867 = vmatprep.subr.mxu0 0.0
    %868 = vmatpush1.msra.mxu0 %v98
    %869 = vmatprep.subr.mxu0 0.0
    %870 = vmatpush1.msra.mxu0 %v99
    %871 = vmatprep.subr.mxu0 0.0
    %872 = vmatpush1.msra.mxu0 %v100
    %873 = vmatprep.subr.mxu0 0.0
    %874 = vmatpush1.msra.mxu0 %v101
    %875 = vmatprep.subr.mxu0 0.0
    %876 = vmatpush1.msra.mxu0 %v102
    %877 = vmatprep.subr.mxu0 0.0
    %878 = vmatpush1.msra.mxu0 %v103
    %879 = vmatprep.subr.mxu0 0.0
    %880 = vmatpush1.msra.mxu0 %v104
    %881 = vmatprep.subr.mxu0 0.0
    %882 = vmatpush1.msra.mxu0 %v105
    %883 = vmatprep.subr.mxu0 0.0
    %884 = vmatpush1.msra.mxu0 %v106
    %885 = vmatprep.subr.mxu0 0.0
    %886 = vmatpush1.msra.mxu0 %v107
    %887 = vmatprep.subr.mxu0 0.0
    %888 = vmatpush1.msra.mxu0 %v108
    %889 = vmatprep.subr.mxu0 0.0
    %890 = vmatpush1.msra.mxu0 %v109
    %891 = vmatprep.subr.mxu0 0.0
    %892 = vmatpush1.msra.mxu0 %v110
    %893 = vmatprep.subr.mxu0 0.0
    %894 = vmatpush1.msra.mxu0 %v111
    %895 = vmatprep.subr.mxu0 0.0
    %896 = vmatpush1.msra.mxu0 %v112
    %897 = vmatprep.subr.mxu0 0.0
    %898 = vmatpush1.msra.mxu0 %v113
    %899 = vmatprep.subr.mxu0 0.0
    %900 = vmatpush1.msra.mxu0 %v114
    %901 = vmatprep.subr.mxu0 0.0
    %902 = vmatpush1.msra.mxu0 %v115
    %903 = vmatprep.subr.mxu0 0.0
    %904 = vmatpush1.msra.mxu0 %v116
    %905 = vmatprep.subr.mxu0 0.0
    %906 = vmatpush1.msra.mxu0 %v117
    %907 = vmatprep.subr.mxu0 0.0
    %908 = vmatpush1.msra.mxu0 %v118
    %909 = vmatprep.subr.mxu0 0.0
    %910 = vmatpush1.msra.mxu0 %v119
    %911 = vmatprep.subr.mxu0 0.0
    %912 = vmatpush1.msra.mxu0 %v120
    %913 = vmatprep.subr.mxu0 0.0
    %914 = vmatpush1.msra.mxu0 %v121
    %915 = vmatprep.subr.mxu0 0.0
    %916 = vmatpush1.msra.mxu0 %v122
    %917 = vmatprep.subr.mxu0 0.0
    %918 = vmatpush1.msra.mxu0 %v123
    %919 = vmatprep.subr.mxu0 0.0
    %920 = vmatpush1.msra.mxu0 %v124
    %921 = vmatprep.mubr.f32.mxu0 %v581
    %922 = vmatmul.mubr.f32.gmra.mrb[0].mxu0 %v573
    %v923 = vpop.f32.mrb[0].mxu0
    %v924 = vadd.f32 %v854, %v923
    %v925 = vpop.f32.mrb[0].mxu0
    %926 = vdwg.mxu0
    %927 = vmatprep.subr.mxu0 0.0
    %928 = vmatpush1.msra.mxu0 %v125
    %929 = vmatprep.subr.mxu0 0.0
    %930 = vmatpush1.msra.mxu0 %v126
    %931 = vmatprep.subr.mxu0 0.0
    %932 = vmatpush1.msra.mxu0 %v127
    %933 = vmatprep.subr.mxu0 0.0
    %934 = vmatpush1.msra.mxu0 %v128
    %935 = vmatprep.subr.mxu0 0.0
    %936 = vmatpush1.msra.mxu0 %v129
    %937 = vmatprep.subr.mxu0 0.0
    %938 = vmatpush1.msra.mxu0 %v130
    %939 = vmatprep.subr.mxu0 0.0
    %940 = vmatpush1.msra.mxu0 %v131
    %941 = vmatprep.subr.mxu0 0.0
    %942 = vmatpush1.msra.mxu0 %v132
    %943 = vmatprep.subr.mxu0 0.0
    %944 = vmatpush1.msra.mxu0 %v133
    %945 = vmatprep.subr.mxu0 0.0
    %946 = vmatpush1.msra.mxu0 %v134
    %947 = vmatprep.subr.mxu0 0.0
    %948 = vmatpush1.msra.mxu0 %v135
    %949 = vmatprep.subr.mxu0 0.0
    %950 = vmatpush1.msra.mxu0 %v136
    %951 = vmatprep.subr.mxu0 0.0
    %952 = vmatpush1.msra.mxu0 %v137
    %953 = vmatprep.subr.mxu0 0.0
    %954 = vmatpush1.msra.mxu0 %v138
    %955 = vmatprep.subr.mxu0 0.0
    %956 = vmatpush1.msra.mxu0 %v139
    %957 = vmatprep.subr.mxu0 0.0
    %958 = vmatpush1.msra.mxu0 %v140
    %959 = vmatprep.subr.mxu0 0.0
    %960 = vmatpush1.msra.mxu0 %v141
    %961 = vmatprep.subr.mxu0 0.0
    %962 = vmatpush1.msra.mxu0 %v142
    %963 = vmatprep.subr.mxu0 0.0
    %964 = vmatpush1.msra.mxu0 %v143
    %965 = vmatprep.subr.mxu0 0.0
    %966 = vmatpush1.msra.mxu0 %v144
    %967 = vmatprep.subr.mxu0 0.0
    %968 = vmatpush1.msra.mxu0 %v145
    %969 = vmatprep.subr.mxu0 0.0
    %970 = vmatpush1.msra.mxu0 %v146
    %971 = vmatprep.subr.mxu0 0.0
    %972 = vmatpush1.msra.mxu0 %v147
    %973 = vmatprep.subr.mxu0 0.0
    %974 = vmatpush1.msra.mxu0 %v148
    %975 = vmatprep.subr.mxu0 0.0
    %976 = vmatpush1.msra.mxu0 %v149
    %977 = vmatprep.subr.mxu0 0.0
    %978 = vmatpush1.msra.mxu0 %v150
    %979 = vmatprep.subr.mxu0 0.0
    %980 = vmatpush1.msra.mxu0 %v151
    %981 = vmatprep.subr.mxu0 0.0
    %982 = vmatpush1.msra.mxu0 %v152
    %983 = vmatprep.subr.mxu0 0.0
    %984 = vmatpush1.msra.mxu0 %v153
    %985 = vmatprep.subr.mxu0 0.0
    %986 = vmatpush1.msra.mxu0 %v154
    %987 = vmatprep.subr.mxu0 0.0
    %988 = vmatpush1.msra.mxu0 %v155
    %989 = vmatprep.subr.mxu0 0.0
    %990 = vmatpush1.msra.mxu0 %v156
    %991 = vmatprep.mubr.f32.mxu0 %v582
    %992 = vmatmul.mubr.f32.gmra.mrb[0].mxu0 %v580
    %v993 = vpop.f32.mrb[0].mxu0
    %v994 = vadd.f32 %v924, %v993
    %v995 = vpop.f32.mrb[0].mxu0
    %996 = vdwg.mxu0
    %997 = vmatprep.subr.mxu0 0.0
    %998 = vmatpush1.msra.mxu0 %v157
    %999 = vmatprep.subr.mxu0 0.0
    %1000 = vmatpush1.msra.mxu0 %v158
    %1001 = vmatprep.subr.mxu0 0.0
    %1002 = vmatpush1.msra.mxu0 %v159
    %1003 = vmatprep.subr.mxu0 0.0
    %1004 = vmatpush1.msra.mxu0 %v160
    %1005 = vmatprep.subr.mxu0 0.0
    %1006 = vmatpush1.msra.mxu0 %v161
    %1007 = vmatprep.subr.mxu0 0.0
    %1008 = vmatpush1.msra.mxu0 %v162
    %1009 = vmatprep.subr.mxu0 0.0
    %1010 = vmatpush1.msra.mxu0 %v163
    %1011 = vmatprep.subr.mxu0 0.0
    %1012 = vmatpush1.msra.mxu0 %v164
    %1013 = vmatprep.subr.mxu0 0.0
    %1014 = vmatpush1.msra.mxu0 %v165
    %1015 = vmatprep.subr.mxu0 0.0
    %1016 = vmatpush1.msra.mxu0 %v166
    %1017 = vmatprep.subr.mxu0 0.0
    %1018 = vmatpush1.msra.mxu0 %v167
    %1019 = vmatprep.subr.mxu0 0.0
    %1020 = vmatpush1.msra.mxu0 %v168
    %1021 = vmatprep.subr.mxu0 0.0
    %1022 = vmatpush1.msra.mxu0 %v169
    %1023 = vmatprep.subr.mxu0 0.0
    %1024 = vmatpush1.msra.mxu0 %v170
    %1025 = vmatprep.subr.mxu0 0.0
    %1026 = vmatpush1.msra.mxu0 %v171
    %1027 = vmatprep.subr.mxu0 0.0
    %1028 = vmatpush1.msra.mxu0 %v172
    %1029 = vmatprep.subr.mxu0 0.0
    %1030 = vmatpush1.msra.mxu0 %v173
    %1031 = vmatprep.subr.mxu0 0.0
    %1032 = vmatpush1.msra.mxu0 %v174
    %1033 = vmatprep.subr.mxu0 0.0
    %1034 = vmatpush1.msra.mxu0 %v175
    %1035 = vmatprep.subr.mxu0 0.0
    %1036 = vmatpush1.msra.mxu0 %v176
    %1037 = vmatprep.subr.mxu0 0.0
    %1038 = vmatpush1.msra.mxu0 %v177
    %1039 = vmatprep.subr.mxu0 0.0
    %1040 = vmatpush1.msra.mxu0 %v178
    %1041 = vmatprep.subr.mxu0 0.0
    %1042 = vmatpush1.msra.mxu0 %v179
    %1043 = vmatprep.subr.mxu0 0.0
    %1044 = vmatpush1.msra.mxu0 %v180
    %1045 = vmatprep.subr.mxu0 0.0
    %1046 = vmatpush1.msra.mxu0 %v181
    %1047 = vmatprep.subr.mxu0 0.0
    %1048 = vmatpush1.msra.mxu0 %v182
    %1049 = vmatprep.subr.mxu0 0.0
    %1050 = vmatpush1.msra.mxu0 %v183
    %1051 = vmatprep.subr.mxu0 0.0
    %1052 = vmatpush1.msra.mxu0 %v184
    %1053 = vmatprep.subr.mxu0 0.0
    %1054 = vmatpush1.msra.mxu0 %v185
    %1055 = vmatprep.subr.mxu0 0.0
    %1056 = vmatpush1.msra.mxu0 %v186
    %1057 = vmatprep.subr.mxu0 0.0
    %1058 = vmatpush1.msra.mxu0 %v187
    %1059 = vmatprep.subr.mxu0 0.0
    %1060 = vmatpush1.msra.mxu0 %v188
    %1061 = vmatprep.mubr.f32.mxu0 %v598
    %1062 = vmatmul.mubr.f32.gmra.mrb[0].mxu0 %v590
    %v1063 = vpop.f32.mrb[0].mxu0
    %v1064 = vadd.f32 %v994, %v1063
    %v1065 = vpop.f32.mrb[0].mxu0
    %1066 = vdwg.mxu0
    %1067 = vmatprep.subr.mxu0 0.0
    %1068 = vmatpush1.msra.mxu0 %v189
    %1069 = vmatprep.subr.mxu0 0.0
    %1070 = vmatpush1.msra.mxu0 %v190
    %1071 = vmatprep.subr.mxu0 0.0
    %1072 = vmatpush1.msra.mxu0 %v191
    %1073 = vmatprep.subr.mxu0 0.0
    %1074 = vmatpush1.msra.mxu0 %v192
    %1075 = vmatprep.subr.mxu0 0.0
    %1076 = vmatpush1.msra.mxu0 %v193
    %1077 = vmatprep.subr.mxu0 0.0
    %1078 = vmatpush1.msra.mxu0 %v194
    %1079 = vmatprep.subr.mxu0 0.0
    %1080 = vmatpush1.msra.mxu0 %v195
    %1081 = vmatprep.subr.mxu0 0.0
    %1082 = vmatpush1.msra.mxu0 %v196
    %1083 = vmatprep.subr.mxu0 0.0
    %1084 = vmatpush1.msra.mxu0 %v197
    %1085 = vmatprep.subr.mxu0 0.0
    %1086 = vmatpush1.msra.mxu0 %v198
    %1087 = vmatprep.subr.mxu0 0.0
    %1088 = vmatpush1.msra.mxu0 %v199
    %1089 = vmatprep.subr.mxu0 0.0
    %1090 = vmatpush1.msra.mxu0 %v200
    %1091 = vmatprep.subr.mxu0 0.0
    %1092 = vmatpush1.msra.mxu0 %v201
    %1093 = vmatprep.subr.mxu0 0.0
    %1094 = vmatpush1.msra.mxu0 %v202
    %1095 = vmatprep.subr.mxu0 0.0
    %1096 = vmatpush1.msra.mxu0 %v203
    %1097 = vmatprep.subr.mxu0 0.0
    %1098 = vmatpush1.msra.mxu0 %v204
    %1099 = vmatprep.subr.mxu0 0.0
    %1100 = vmatpush1.msra.mxu0 %v205
    %1101 = vmatprep.subr.mxu0 0.0
    %1102 = vmatpush1.msra.mxu0 %v206
    %1103 = vmatprep.subr.mxu0 0.0
    %1104 = vmatpush1.msra.mxu0 %v207
    %1105 = vmatprep.subr.mxu0 0.0
    %1106 = vmatpush1.msra.mxu0 %v208
    %1107 = vmatprep.subr.mxu0 0.0
    %1108 = vmatpush1.msra.mxu0 %v209
    %1109 = vmatprep.subr.mxu0 0.0
    %1110 = vmatpush1.msra.mxu0 %v210
    %1111 = vmatprep.subr.mxu0 0.0
    %1112 = vmatpush1.msra.mxu0 %v211
    %1113 = vmatprep.subr.mxu0 0.0
    %1114 = vmatpush1.msra.mxu0 %v212
    %1115 = vmatprep.subr.mxu0 0.0
    %1116 = vmatpush1.msra.mxu0 %v213
    %1117 = vmatprep.subr.mxu0 0.0
    %1118 = vmatpush1.msra.mxu0 %v214
    %1119 = vmatprep.subr.mxu0 0.0
    %1120 = vmatpush1.msra.mxu0 %v215
    %1121 = vmatprep.subr.mxu0 0.0
    %1122 = vmatpush1.msra.mxu0 %v216
    %1123 = vmatprep.subr.mxu0 0.0
    %1124 = vmatpush1.msra.mxu0 %v217
    %1125 = vmatprep.subr.mxu0 0.0
    %1126 = vmatpush1.msra.mxu0 %v218
    %1127 = vmatprep.subr.mxu0 0.0
    %1128 = vmatpush1.msra.mxu0 %v219
    %1129 = vmatprep.subr.mxu0 0.0
    %1130 = vmatpush1.msra.mxu0 %v220
    %1131 = vmatprep.mubr.f32.mxu0 %v599
    %1132 = vmatmul.mubr.f32.gmra.mrb[0].mxu0 %v597
    %v1133 = vpop.f32.mrb[0].mxu0
    %v1134 = vadd.f32 %v1064, %v1133
    %v1135 = vpop.f32.mrb[0].mxu0
    %1136 = vdwg.mxu0
    %1137 = vmatprep.subr.mxu0 0.0
    %1138 = vmatpush1.msra.mxu0 %v221
    %1139 = vmatprep.subr.mxu0 0.0
    %1140 = vmatpush1.msra.mxu0 %v222
    %1141 = vmatprep.subr.mxu0 0.0
    %1142 = vmatpush1.msra.mxu0 %v223
    %1143 = vmatprep.subr.mxu0 0.0
    %1144 = vmatpush1.msra.mxu0 %v224
    %1145 = vmatprep.subr.mxu0 0.0
    %1146 = vmatpush1.msra.mxu0 %v225
    %1147 = vmatprep.subr.mxu0 0.0
    %1148 = vmatpush1.msra.mxu0 %v226
    %1149 = vmatprep.subr.mxu0 0.0
    %1150 = vmatpush1.msra.mxu0 %v227
    %1151 = vmatprep.subr.mxu0 0.0
    %1152 = vmatpush1.msra.mxu0 %v228
    %1153 = vmatprep.subr.mxu0 0.0
    %1154 = vmatpush1.msra.mxu0 %v229
    %1155 = vmatprep.subr.mxu0 0.0
    %1156 = vmatpush1.msra.mxu0 %v230
    %1157 = vmatprep.subr.mxu0 0.0
    %1158 = vmatpush1.msra.mxu0 %v231
    %1159 = vmatprep.subr.mxu0 0.0
    %1160 = vmatpush1.msra.mxu0 %v232
    %1161 = vmatprep.subr.mxu0 0.0
    %1162 = vmatpush1.msra.mxu0 %v233
    %1163 = vmatprep.subr.mxu0 0.0
    %1164 = vmatpush1.msra.mxu0 %v234
    %1165 = vmatprep.subr.mxu0 0.0
    %1166 = vmatpush1.msra.mxu0 %v235
    %1167 = vmatprep.subr.mxu0 0.0
    %1168 = vmatpush1.msra.mxu0 %v236
    %1169 = vmatprep.subr.mxu0 0.0
    %1170 = vmatpush1.msra.mxu0 %v237
    %1171 = vmatprep.subr.mxu0 0.0
    %1172 = vmatpush1.msra.mxu0 %v238
    %1173 = vmatprep.subr.mxu0 0.0
    %1174 = vmatpush1.msra.mxu0 %v239
    %1175 = vmatprep.subr.mxu0 0.0
    %1176 = vmatpush1.msra.mxu0 %v240
    %1177 = vmatprep.subr.mxu0 0.0
    %1178 = vmatpush1.msra.mxu0 %v241
    %1179 = vmatprep.subr.mxu0 0.0
    %1180 = vmatpush1.msra.mxu0 %v242
    %1181 = vmatprep.subr.mxu0 0.0
    %1182 = vmatpush1.msra.mxu0 %v243
    %1183 = vmatprep.subr.mxu0 0.0
    %1184 = vmatpush1.msra.mxu0 %v244
    %1185 = vmatprep.subr.mxu0 0.0
    %1186 = vmatpush1.msra.mxu0 %v245
    %1187 = vmatprep.subr.mxu0 0.0
    %1188 = vmatpush1.msra.mxu0 %v246
    %1189 = vmatprep.subr.mxu0 0.0
    %1190 = vmatpush1.msra.mxu0 %v247
    %1191 = vmatprep.subr.mxu0 0.0
    %1192 = vmatpush1.msra.mxu0 %v248
    %1193 = vmatprep.subr.mxu0 0.0
    %1194 = vmatpush1.msra.mxu0 %v249
    %1195 = vmatprep.subr.mxu0 0.0
    %1196 = vmatpush1.msra.mxu0 %v250
    %1197 = vmatprep.subr.mxu0 0.0
    %1198 = vmatpush1.msra.mxu0 %v251
    %1199 = vmatprep.subr.mxu0 0.0
    %1200 = vmatpush1.msra.mxu0 %v252
    %1201 = vmatprep.mubr.f32.mxu0 %v615
    %1202 = vmatmul.mubr.f32.gmra.mrb[0].mxu0 %v607
    %v1203 = vpop.f32.mrb[0].mxu0
    %v1204 = vadd.f32 %v1134, %v1203
    %v1205 = vpop.f32.mrb[0].mxu0
    %1206 = vdwg.mxu0
    %1207 = vmatprep.subr.mxu0 0.0
    %1208 = vmatpush1.msra.mxu0 %v253
    %1209 = vmatprep.subr.mxu0 0.0
    %1210 = vmatpush1.msra.mxu0 %v254
    %1211 = vmatprep.subr.mxu0 0.0
    %1212 = vmatpush1.msra.mxu0 %v255
    %1213 = vmatprep.subr.mxu0 0.0
    %1214 = vmatpush1.msra.mxu0 %v256
    %1215 = vmatprep.subr.mxu0 0.0
    %1216 = vmatpush1.msra.mxu0 %v257
    %1217 = vmatprep.subr.mxu0 0.0
    %1218 = vmatpush1.msra.mxu0 %v258
    %1219 = vmatprep.subr.mxu0 0.0
    %1220 = vmatpush1.msra.mxu0 %v259
    %1221 = vmatprep.subr.mxu0 0.0
    %1222 = vmatpush1.msra.mxu0 %v260
    %1223 = vmatprep.subr.mxu0 0.0
    %1224 = vmatpush1.msra.mxu0 %v261
    %1225 = vmatprep.subr.mxu0 0.0
    %1226 = vmatpush1.msra.mxu0 %v262
    %1227 = vmatprep.subr.mxu0 0.0
    %1228 = vmatpush1.msra.mxu0 %v263
    %1229 = vmatprep.subr.mxu0 0.0
    %1230 = vmatpush1.msra.mxu0 %v264
    %1231 = vmatprep.subr.mxu0 0.0
    %1232 = vmatpush1.msra.mxu0 %v265
    %1233 = vmatprep.subr.mxu0 0.0
    %1234 = vmatpush1.msra.mxu0 %v266
    %1235 = vmatprep.subr.mxu0 0.0
    %1236 = vmatpush1.msra.mxu0 %v267
    %1237 = vmatprep.subr.mxu0 0.0
    %1238 = vmatpush1.msra.mxu0 %v268
    %1239 = vmatprep.subr.mxu0 0.0
    %1240 = vmatpush1.msra.mxu0 %v269
    %1241 = vmatprep.subr.mxu0 0.0
    %1242 = vmatpush1.msra.mxu0 %v270
    %1243 = vmatprep.subr.mxu0 0.0
    %1244 = vmatpush1.msra.mxu0 %v271
    %1245 = vmatprep.subr.mxu0 0.0
    %1246 = vmatpush1.msra.mxu0 %v272
    %1247 = vmatprep.subr.mxu0 0.0
    %1248 = vmatpush1.msra.mxu0 %v273
    %1249 = vmatprep.subr.mxu0 0.0
    %1250 = vmatpush1.msra.mxu0 %v274
    %1251 = vmatprep.subr.mxu0 0.0
    %1252 = vmatpush1.msra.mxu0 %v275
    %1253 = vmatprep.subr.mxu0 0.0
    %1254 = vmatpush1.msra.mxu0 %v276
    %1255 = vmatprep.subr.mxu0 0.0
    %1256 = vmatpush1.msra.mxu0 %v277
    %1257 = vmatprep.subr.mxu0 0.0
    %1258 = vmatpush1.msra.mxu0 %v278
    %1259 = vmatprep.subr.mxu0 0.0
    %1260 = vmatpush1.msra.mxu0 %v279
    %1261 = vmatprep.subr.mxu0 0.0
    %1262 = vmatpush1.msra.mxu0 %v280
    %1263 = vmatprep.subr.mxu0 0.0
    %1264 = vmatpush1.msra.mxu0 %v281
    %1265 = vmatprep.subr.mxu0 0.0
    %1266 = vmatpush1.msra.mxu0 %v282
    %1267 = vmatprep.subr.mxu0 0.0
    %1268 = vmatpush1.msra.mxu0 %v283
    %1269 = vmatprep.subr.mxu0 0.0
    %1270 = vmatpush1.msra.mxu0 %v284
    %1271 = vmatprep.mubr.f32.mxu0 %v616
    %1272 = vmatmul.mubr.f32.gmra.mrb[0].mxu0 %v614
    %v1273 = vpop.f32.mrb[0].mxu0
    %v1274 = vadd.f32 %v1204, %v1273
    %v1275 = vpop.f32.mrb[0].mxu0
    %1276 = vdwg.mxu0
    %1277 = vmatprep.subr.mxu0 0.0
    %1278 = vmatpush1.msra.mxu0 %v285
    %1279 = vmatprep.subr.mxu0 0.0
    %1280 = vmatpush1.msra.mxu0 %v286
    %1281 = vmatprep.subr.mxu0 0.0
    %1282 = vmatpush1.msra.mxu0 %v287
    %1283 = vmatprep.subr.mxu0 0.0
    %1284 = vmatpush1.msra.mxu0 %v288
    %1285 = vmatprep.subr.mxu0 0.0
    %1286 = vmatpush1.msra.mxu0 %v289
    %1287 = vmatprep.subr.mxu0 0.0
    %1288 = vmatpush1.msra.mxu0 %v290
    %1289 = vmatprep.subr.mxu0 0.0
    %1290 = vmatpush1.msra.mxu0 %v291
    %1291 = vmatprep.subr.mxu0 0.0
    %1292 = vmatpush1.msra.mxu0 %v292
    %1293 = vmatprep.subr.mxu0 0.0
    %1294 = vmatpush1.msra.mxu0 %v293
    %1295 = vmatprep.subr.mxu0 0.0
    %1296 = vmatpush1.msra.mxu0 %v294
    %1297 = vmatprep.subr.mxu0 0.0
    %1298 = vmatpush1.msra.mxu0 %v295
    %1299 = vmatprep.subr.mxu0 0.0
    %1300 = vmatpush1.msra.mxu0 %v296
    %1301 = vmatprep.subr.mxu0 0.0
    %1302 = vmatpush1.msra.mxu0 %v297
    %1303 = vmatprep.subr.mxu0 0.0
    %1304 = vmatpush1.msra.mxu0 %v298
    %1305 = vmatprep.subr.mxu0 0.0
    %1306 = vmatpush1.msra.mxu0 %v299
    %1307 = vmatprep.subr.mxu0 0.0
    %1308 = vmatpush1.msra.mxu0 %v300
    %1309 = vmatprep.subr.mxu0 0.0
    %1310 = vmatpush1.msra.mxu0 %v301
    %1311 = vmatprep.subr.mxu0 0.0
    %1312 = vmatpush1.msra.mxu0 %v302
    %1313 = vmatprep.subr.mxu0 0.0
    %1314 = vmatpush1.msra.mxu0 %v303
    %1315 = vmatprep.subr.mxu0 0.0
    %1316 = vmatpush1.msra.mxu0 %v304
    %1317 = vmatprep.subr.mxu0 0.0
    %1318 = vmatpush1.msra.mxu0 %v305
    %1319 = vmatprep.subr.mxu0 0.0
    %1320 = vmatpush1.msra.mxu0 %v306
    %1321 = vmatprep.subr.mxu0 0.0
    %1322 = vmatpush1.msra.mxu0 %v307
    %1323 = vmatprep.subr.mxu0 0.0
    %1324 = vmatpush1.msra.mxu0 %v308
    %1325 = vmatprep.subr.mxu0 0.0
    %1326 = vmatpush1.msra.mxu0 %v309
    %1327 = vmatprep.subr.mxu0 0.0
    %1328 = vmatpush1.msra.mxu0 %v310
    %1329 = vmatprep.subr.mxu0 0.0
    %1330 = vmatpush1.msra.mxu0 %v311
    %1331 = vmatprep.subr.mxu0 0.0
    %1332 = vmatpush1.msra.mxu0 %v312
    %1333 = vmatprep.subr.mxu0 0.0
    %1334 = vmatpush1.msra.mxu0 %v313
    %1335 = vmatprep.subr.mxu0 0.0
    %1336 = vmatpush1.msra.mxu0 %v314
    %1337 = vmatprep.subr.mxu0 0.0
    %1338 = vmatpush1.msra.mxu0 %v315
    %1339 = vmatprep.subr.mxu0 0.0
    %1340 = vmatpush1.msra.mxu0 %v316
    %1341 = vmatprep.mubr.f32.mxu0 %v632
    %1342 = vmatmul.mubr.f32.gmra.mrb[0].mxu0 %v624
    %v1343 = vpop.f32.mrb[0].mxu0
    %v1344 = vadd.f32 %v1274, %v1343
    %v1345 = vpop.f32.mrb[0].mxu0
    %1346 = vdwg.mxu0
    %1347 = vmatprep.subr.mxu0 0.0
    %1348 = vmatpush1.msra.mxu0 %v317
    %1349 = vmatprep.subr.mxu0 0.0
    %1350 = vmatpush1.msra.mxu0 %v318
    %1351 = vmatprep.subr.mxu0 0.0
    %1352 = vmatpush1.msra.mxu0 %v319
    %1353 = vmatprep.subr.mxu0 0.0
    %1354 = vmatpush1.msra.mxu0 %v320
    %1355 = vmatprep.subr.mxu0 0.0
    %1356 = vmatpush1.msra.mxu0 %v321
    %1357 = vmatprep.subr.mxu0 0.0
    %1358 = vmatpush1.msra.mxu0 %v322
    %1359 = vmatprep.subr.mxu0 0.0
    %1360 = vmatpush1.msra.mxu0 %v323
    %1361 = vmatprep.subr.mxu0 0.0
    %1362 = vmatpush1.msra.mxu0 %v324
    %1363 = vmatprep.subr.mxu0 0.0
    %1364 = vmatpush1.msra.mxu0 %v325
    %1365 = vmatprep.subr.mxu0 0.0
    %1366 = vmatpush1.msra.mxu0 %v326
    %1367 = vmatprep.subr.mxu0 0.0
    %1368 = vmatpush1.msra.mxu0 %v327
    %1369 = vmatprep.subr.mxu0 0.0
    %1370 = vmatpush1.msra.mxu0 %v328
    %1371 = vmatprep.subr.mxu0 0.0
    %1372 = vmatpush1.msra.mxu0 %v329
    %1373 = vmatprep.subr.mxu0 0.0
    %1374 = vmatpush1.msra.mxu0 %v330
    %1375 = vmatprep.subr.mxu0 0.0
    %1376 = vmatpush1.msra.mxu0 %v331
    %1377 = vmatprep.subr.mxu0 0.0
    %1378 = vmatpush1.msra.mxu0 %v332
    %1379 = vmatprep.subr.mxu0 0.0
    %1380 = vmatpush1.msra.mxu0 %v333
    %1381 = vmatprep.subr.mxu0 0.0
    %1382 = vmatpush1.msra.mxu0 %v334
    %1383 = vmatprep.subr.mxu0 0.0
    %1384 = vmatpush1.msra.mxu0 %v335
    %1385 = vmatprep.subr.mxu0 0.0
    %1386 = vmatpush1.msra.mxu0 %v336
    %1387 = vmatprep.subr.mxu0 0.0
    %1388 = vmatpush1.msra.mxu0 %v337
    %1389 = vmatprep.subr.mxu0 0.0
    %1390 = vmatpush1.msra.mxu0 %v338
    %1391 = vmatprep.subr.mxu0 0.0
    %1392 = vmatpush1.msra.mxu0 %v339
    %1393 = vmatprep.subr.mxu0 0.0
    %1394 = vmatpush1.msra.mxu0 %v340
    %1395 = vmatprep.subr.mxu0 0.0
    %1396 = vmatpush1.msra.mxu0 %v341
    %1397 = vmatprep.subr.mxu0 0.0
    %1398 = vmatpush1.msra.mxu0 %v342
    %1399 = vmatprep.subr.mxu0 0.0
    %1400 = vmatpush1.msra.mxu0 %v343
    %1401 = vmatprep.subr.mxu0 0.0
    %1402 = vmatpush1.msra.mxu0 %v344
    %1403 = vmatprep.subr.mxu0 0.0
    %1404 = vmatpush1.msra.mxu0 %v345
    %1405 = vmatprep.subr.mxu0 0.0
    %1406 = vmatpush1.msra.mxu0 %v346
    %1407 = vmatprep.subr.mxu0 0.0
    %1408 = vmatpush1.msra.mxu0 %v347
    %1409 = vmatprep.subr.mxu0 0.0
    %1410 = vmatpush1.msra.mxu0 %v348
    %1411 = vmatprep.mubr.f32.mxu0 %v633
    %1412 = vmatmul.mubr.f32.gmra.mrb[0].mxu0 %v631
    %v1413 = vpop.f32.mrb[0].mxu0
    %v1414 = vadd.f32 %v1344, %v1413
    %v1415 = vpop.f32.mrb[0].mxu0
    %1416 = vdwg.mxu0
    %1417 = vmatprep.subr.mxu0 0.0
    %1418 = vmatpush1.msra.mxu0 %v349
    %1419 = vmatprep.subr.mxu0 0.0
    %1420 = vmatpush1.msra.mxu0 %v350
    %1421 = vmatprep.subr.mxu0 0.0
    %1422 = vmatpush1.msra.mxu0 %v351
    %1423 = vmatprep.subr.mxu0 0.0
    %1424 = vmatpush1.msra.mxu0 %v352
    %1425 = vmatprep.subr.mxu0 0.0
    %1426 = vmatpush1.msra.mxu0 %v353
    %1427 = vmatprep.subr.mxu0 0.0
    %1428 = vmatpush1.msra.mxu0 %v354
    %1429 = vmatprep.subr.mxu0 0.0
    %1430 = vmatpush1.msra.mxu0 %v355
    %1431 = vmatprep.subr.mxu0 0.0
    %1432 = vmatpush1.msra.mxu0 %v356
    %1433 = vmatprep.subr.mxu0 0.0
    %1434 = vmatpush1.msra.mxu0 %v357
    %1435 = vmatprep.subr.mxu0 0.0
    %1436 = vmatpush1.msra.mxu0 %v358
    %1437 = vmatprep.subr.mxu0 0.0
    %1438 = vmatpush1.msra.mxu0 %v359
    %1439 = vmatprep.subr.mxu0 0.0
    %1440 = vmatpush1.msra.mxu0 %v360
    %1441 = vmatprep.subr.mxu0 0.0
    %1442 = vmatpush1.msra.mxu0 %v361
    %1443 = vmatprep.subr.mxu0 0.0
    %1444 = vmatpush1.msra.mxu0 %v362
    %1445 = vmatprep.subr.mxu0 0.0
    %1446 = vmatpush1.msra.mxu0 %v363
    %1447 = vmatprep.subr.mxu0 0.0
    %1448 = vmatpush1.msra.mxu0 %v364
    %1449 = vmatprep.subr.mxu0 0.0
    %1450 = vmatpush1.msra.mxu0 %v365
    %1451 = vmatprep.subr.mxu0 0.0
    %1452 = vmatpush1.msra.mxu0 %v366
    %1453 = vmatprep.subr.mxu0 0.0
    %1454 = vmatpush1.msra.mxu0 %v367
    %1455 = vmatprep.subr.mxu0 0.0
    %1456 = vmatpush1.msra.mxu0 %v368
    %1457 = vmatprep.subr.mxu0 0.0
    %1458 = vmatpush1.msra.mxu0 %v369
    %1459 = vmatprep.subr.mxu0 0.0
    %1460 = vmatpush1.msra.mxu0 %v370
    %1461 = vmatprep.subr.mxu0 0.0
    %1462 = vmatpush1.msra.mxu0 %v371
    %1463 = vmatprep.subr.mxu0 0.0
    %1464 = vmatpush1.msra.mxu0 %v372
    %1465 = vmatprep.subr.mxu0 0.0
    %1466 = vmatpush1.msra.mxu0 %v373
    %1467 = vmatprep.subr.mxu0 0.0
    %1468 = vmatpush1.msra.mxu0 %v374
    %1469 = vmatprep.subr.mxu0 0.0
    %1470 = vmatpush1.msra.mxu0 %v375
    %1471 = vmatprep.subr.mxu0 0.0
    %1472 = vmatpush1.msra.mxu0 %v376
    %1473 = vmatprep.subr.mxu0 0.0
    %1474 = vmatpush1.msra.mxu0 %v377
    %1475 = vmatprep.subr.mxu0 0.0
    %1476 = vmatpush1.msra.mxu0 %v378
    %1477 = vmatprep.subr.mxu0 0.0
    %1478 = vmatpush1.msra.mxu0 %v379
    %1479 = vmatprep.subr.mxu0 0.0
    %1480 = vmatpush1.msra.mxu0 %v380
    %1481 = vmatprep.mubr.f32.mxu0 %v649
    %1482 = vmatmul.mubr.f32.gmra.mrb[0].mxu0 %v641
    %v1483 = vpop.f32.mrb[0].mxu0
    %v1484 = vadd.f32 %v1414, %v1483
    %v1485 = vpop.f32.mrb[0].mxu0
    %1486 = vdwg.mxu0
    %1487 = vmatprep.subr.mxu0 0.0
    %1488 = vmatpush1.msra.mxu0 %v381
    %1489 = vmatprep.subr.mxu0 0.0
    %1490 = vmatpush1.msra.mxu0 %v382
    %1491 = vmatprep.subr.mxu0 0.0
    %1492 = vmatpush1.msra.mxu0 %v383
    %1493 = vmatprep.subr.mxu0 0.0
    %1494 = vmatpush1.msra.mxu0 %v384
    %1495 = vmatprep.subr.mxu0 0.0
    %1496 = vmatpush1.msra.mxu0 %v385
    %1497 = vmatprep.subr.mxu0 0.0
    %1498 = vmatpush1.msra.mxu0 %v386
    %1499 = vmatprep.subr.mxu0 0.0
    %1500 = vmatpush1.msra.mxu0 %v387
    %1501 = vmatprep.subr.mxu0 0.0
    %1502 = vmatpush1.msra.mxu0 %v388
    %1503 = vmatprep.subr.mxu0 0.0
    %1504 = vmatpush1.msra.mxu0 %v389
    %1505 = vmatprep.subr.mxu0 0.0
    %1506 = vmatpush1.msra.mxu0 %v390
    %1507 = vmatprep.subr.mxu0 0.0
    %1508 = vmatpush1.msra.mxu0 %v391
    %1509 = vmatprep.subr.mxu0 0.0
    %1510 = vmatpush1.msra.mxu0 %v392
    %1511 = vmatprep.subr.mxu0 0.0
    %1512 = vmatpush1.msra.mxu0 %v393
    %1513 = vmatprep.subr.mxu0 0.0
    %1514 = vmatpush1.msra.mxu0 %v394
    %1515 = vmatprep.subr.mxu0 0.0
    %1516 = vmatpush1.msra.mxu0 %v395
    %1517 = vmatprep.subr.mxu0 0.0
    %1518 = vmatpush1.msra.mxu0 %v396
    %1519 = vmatprep.subr.mxu0 0.0
    %1520 = vmatpush1.msra.mxu0 %v397
    %1521 = vmatprep.subr.mxu0 0.0
    %1522 = vmatpush1.msra.mxu0 %v398
    %1523 = vmatprep.subr.mxu0 0.0
    %1524 = vmatpush1.msra.mxu0 %v399
    %1525 = vmatprep.subr.mxu0 0.0
    %1526 = vmatpush1.msra.mxu0 %v400
    %1527 = vmatprep.subr.mxu0 0.0
    %1528 = vmatpush1.msra.mxu0 %v401
    %1529 = vmatprep.subr.mxu0 0.0
    %1530 = vmatpush1.msra.mxu0 %v402
    %1531 = vmatprep.subr.mxu0 0.0
    %1532 = vmatpush1.msra.mxu0 %v403
    %1533 = vmatprep.subr.mxu0 0.0
    %1534 = vmatpush1.msra.mxu0 %v404
    %1535 = vmatprep.subr.mxu0 0.0
    %1536 = vmatpush1.msra.mxu0 %v405
    %1537 = vmatprep.subr.mxu0 0.0
    %1538 = vmatpush1.msra.mxu0 %v406
    %1539 = vmatprep.subr.mxu0 0.0
    %1540 = vmatpush1.msra.mxu0 %v407
    %1541 = vmatprep.subr.mxu0 0.0
    %1542 = vmatpush1.msra.mxu0 %v408
    %1543 = vmatprep.subr.mxu0 0.0
    %1544 = vmatpush1.msra.mxu0 %v409
    %1545 = vmatprep.subr.mxu0 0.0
    %1546 = vmatpush1.msra.mxu0 %v410
    %1547 = vmatprep.subr.mxu0 0.0
    %1548 = vmatpush1.msra.mxu0 %v411
    %1549 = vmatprep.subr.mxu0 0.0
    %1550 = vmatpush1.msra.mxu0 %v412
    %1551 = vmatprep.mubr.f32.mxu0 %v650
    %1552 = vmatmul.mubr.f32.gmra.mrb[0].mxu0 %v648
    %v1553 = vpop.f32.mrb[0].mxu0
    %v1554 = vadd.f32 %v1484, %v1553
    %v1555 = vpop.f32.mrb[0].mxu0
    %1556 = vdwg.mxu0
    %1557 = vmatprep.subr.mxu0 0.0
    %1558 = vmatpush1.msra.mxu0 %v413
    %1559 = vmatprep.subr.mxu0 0.0
    %1560 = vmatpush1.msra.mxu0 %v414
    %1561 = vmatprep.subr.mxu0 0.0
    %1562 = vmatpush1.msra.mxu0 %v415
    %1563 = vmatprep.subr.mxu0 0.0
    %1564 = vmatpush1.msra.mxu0 %v416
    %1565 = vmatprep.subr.mxu0 0.0
    %1566 = vmatpush1.msra.mxu0 %v417
    %1567 = vmatprep.subr.mxu0 0.0
    %1568 = vmatpush1.msra.mxu0 %v418
    %1569 = vmatprep.subr.mxu0 0.0
    %1570 = vmatpush1.msra.mxu0 %v419
    %1571 = vmatprep.subr.mxu0 0.0
    %1572 = vmatpush1.msra.mxu0 %v420
    %1573 = vmatprep.subr.mxu0 0.0
    %1574 = vmatpush1.msra.mxu0 %v421
    %1575 = vmatprep.subr.mxu0 0.0
    %1576 = vmatpush1.msra.mxu0 %v422
    %1577 = vmatprep.subr.mxu0 0.0
    %1578 = vmatpush1.msra.mxu0 %v423
    %1579 = vmatprep.subr.mxu0 0.0
    %1580 = vmatpush1.msra.mxu0 %v424
    %1581 = vmatprep.subr.mxu0 0.0
    %1582 = vmatpush1.msra.mxu0 %v425
    %1583 = vmatprep.subr.mxu0 0.0
    %1584 = vmatpush1.msra.mxu0 %v426
    %1585 = vmatprep.subr.mxu0 0.0
    %1586 = vmatpush1.msra.mxu0 %v427
    %1587 = vmatprep.subr.mxu0 0.0
    %1588 = vmatpush1.msra.mxu0 %v428
    %1589 = vmatprep.subr.mxu0 0.0
    %1590 = vmatpush1.msra.mxu0 %v429
    %1591 = vmatprep.subr.mxu0 0.0
    %1592 = vmatpush1.msra.mxu0 %v430
    %1593 = vmatprep.subr.mxu0 0.0
    %1594 = vmatpush1.msra.mxu0 %v431
    %1595 = vmatprep.subr.mxu0 0.0
    %1596 = vmatpush1.msra.mxu0 %v432
    %1597 = vmatprep.subr.mxu0 0.0
    %1598 = vmatpush1.msra.mxu0 %v433
    %1599 = vmatprep.subr.mxu0 0.0
    %1600 = vmatpush1.msra.mxu0 %v434
    %1601 = vmatprep.subr.mxu0 0.0
    %1602 = vmatpush1.msra.mxu0 %v435
    %1603 = vmatprep.subr.mxu0 0.0
    %1604 = vmatpush1.msra.mxu0 %v436
    %1605 = vmatprep.subr.mxu0 0.0
    %1606 = vmatpush1.msra.mxu0 %v437
    %1607 = vmatprep.subr.mxu0 0.0
    %1608 = vmatpush1.msra.mxu0 %v438
    %1609 = vmatprep.subr.mxu0 0.0
    %1610 = vmatpush1.msra.mxu0 %v439
    %1611 = vmatprep.subr.mxu0 0.0
    %1612 = vmatpush1.msra.mxu0 %v440
    %1613 = vmatprep.subr.mxu0 0.0
    %1614 = vmatpush1.msra.mxu0 %v441
    %1615 = vmatprep.subr.mxu0 0.0
    %1616 = vmatpush1.msra.mxu0 %v442
    %1617 = vmatprep.subr.mxu0 0.0
    %1618 = vmatpush1.msra.mxu0 %v443
    %1619 = vmatprep.subr.mxu0 0.0
    %1620 = vmatpush1.msra.mxu0 %v444
    %1621 = vmatprep.mubr.f32.mxu0 %v666
    %1622 = vmatmul.mubr.f32.gmra.mrb[0].mxu0 %v658
    %v1623 = vpop.f32.mrb[0].mxu0
    %v1624 = vadd.f32 %v1554, %v1623
    %v1625 = vpop.f32.mrb[0].mxu0
    %1626 = vdwg.mxu0
    %1627 = vmatprep.subr.mxu0 0.0
    %1628 = vmatpush1.msra.mxu0 %v445
    %1629 = vmatprep.subr.mxu0 0.0
    %1630 = vmatpush1.msra.mxu0 %v446
    %1631 = vmatprep.subr.mxu0 0.0
    %1632 = vmatpush1.msra.mxu0 %v447
    %1633 = vmatprep.subr.mxu0 0.0
    %1634 = vmatpush1.msra.mxu0 %v448
    %1635 = vmatprep.subr.mxu0 0.0
    %1636 = vmatpush1.msra.mxu0 %v449
    %1637 = vmatprep.subr.mxu0 0.0
    %1638 = vmatpush1.msra.mxu0 %v450
    %1639 = vmatprep.subr.mxu0 0.0
    %1640 = vmatpush1.msra.mxu0 %v451
    %1641 = vmatprep.subr.mxu0 0.0
    %1642 = vmatpush1.msra.mxu0 %v452
    %1643 = vmatprep.subr.mxu0 0.0
    %1644 = vmatpush1.msra.mxu0 %v453
    %1645 = vmatprep.subr.mxu0 0.0
    %1646 = vmatpush1.msra.mxu0 %v454
    %1647 = vmatprep.subr.mxu0 0.0
    %1648 = vmatpush1.msra.mxu0 %v455
    %1649 = vmatprep.subr.mxu0 0.0
    %1650 = vmatpush1.msra.mxu0 %v456
    %1651 = vmatprep.subr.mxu0 0.0
    %1652 = vmatpush1.msra.mxu0 %v457
    %1653 = vmatprep.subr.mxu0 0.0
    %1654 = vmatpush1.msra.mxu0 %v458
    %1655 = vmatprep.subr.mxu0 0.0
    %1656 = vmatpush1.msra.mxu0 %v459
    %1657 = vmatprep.subr.mxu0 0.0
    %1658 = vmatpush1.msra.mxu0 %v460
    %1659 = vmatprep.subr.mxu0 0.0
    %1660 = vmatpush1.msra.mxu0 %v461
    %1661 = vmatprep.subr.mxu0 0.0
    %1662 = vmatpush1.msra.mxu0 %v462
    %1663 = vmatprep.subr.mxu0 0.0
    %1664 = vmatpush1.msra.mxu0 %v463
    %1665 = vmatprep.subr.mxu0 0.0
    %1666 = vmatpush1.msra.mxu0 %v464
    %1667 = vmatprep.subr.mxu0 0.0
    %1668 = vmatpush1.msra.mxu0 %v465
    %1669 = vmatprep.subr.mxu0 0.0
    %1670 = vmatpush1.msra.mxu0 %v466
    %1671 = vmatprep.subr.mxu0 0.0
    %1672 = vmatpush1.msra.mxu0 %v467
    %1673 = vmatprep.subr.mxu0 0.0
    %1674 = vmatpush1.msra.mxu0 %v468
    %1675 = vmatprep.subr.mxu0 0.0
    %1676 = vmatpush1.msra.mxu0 %v469
    %1677 = vmatprep.subr.mxu0 0.0
    %1678 = vmatpush1.msra.mxu0 %v470
    %1679 = vmatprep.subr.mxu0 0.0
    %1680 = vmatpush1.msra.mxu0 %v471
    %1681 = vmatprep.subr.mxu0 0.0
    %1682 = vmatpush1.msra.mxu0 %v472
    %1683 = vmatprep.subr.mxu0 0.0
    %1684 = vmatpush1.msra.mxu0 %v473
    %1685 = vmatprep.subr.mxu0 0.0
    %1686 = vmatpush1.msra.mxu0 %v474
    %1687 = vmatprep.subr.mxu0 0.0
    %1688 = vmatpush1.msra.mxu0 %v475
    %1689 = vmatprep.subr.mxu0 0.0
    %1690 = vmatpush1.msra.mxu0 %v476
    %1691 = vmatprep.mubr.f32.mxu0 %v667
    %1692 = vmatmul.mubr.f32.gmra.mrb[0].mxu0 %v665
    %v1693 = vpop.f32.mrb[0].mxu0
    %v1694 = vadd.f32 %v1624, %v1693
    %v1695 = vpop.f32.mrb[0].mxu0
    %1696 = vdwg.mxu0
    %1697 = vmatprep.subr.mxu0 0.0
    %1698 = vmatpush1.msra.mxu0 %v477
    %1699 = vmatprep.subr.mxu0 0.0
    %1700 = vmatpush1.msra.mxu0 %v478
    %1701 = vmatprep.subr.mxu0 0.0
    %1702 = vmatpush1.msra.mxu0 %v479
    %1703 = vmatprep.subr.mxu0 0.0
    %1704 = vmatpush1.msra.mxu0 %v480
    %1705 = vmatprep.subr.mxu0 0.0
    %1706 = vmatpush1.msra.mxu0 %v481
    %1707 = vmatprep.subr.mxu0 0.0
    %1708 = vmatpush1.msra.mxu0 %v482
    %1709 = vmatprep.subr.mxu0 0.0
    %1710 = vmatpush1.msra.mxu0 %v483
    %1711 = vmatprep.subr.mxu0 0.0
    %1712 = vmatpush1.msra.mxu0 %v484
    %1713 = vmatprep.subr.mxu0 0.0
    %1714 = vmatpush1.msra.mxu0 %v485
    %1715 = vmatprep.subr.mxu0 0.0
    %1716 = vmatpush1.msra.mxu0 %v486
    %1717 = vmatprep.subr.mxu0 0.0
    %1718 = vmatpush1.msra.mxu0 %v487
    %1719 = vmatprep.subr.mxu0 0.0
    %1720 = vmatpush1.msra.mxu0 %v488
    %1721 = vmatprep.subr.mxu0 0.0
    %1722 = vmatpush1.msra.mxu0 %v489
    %1723 = vmatprep.subr.mxu0 0.0
    %1724 = vmatpush1.msra.mxu0 %v490
    %1725 = vmatprep.subr.mxu0 0.0
    %1726 = vmatpush1.msra.mxu0 %v491
    %1727 = vmatprep.subr.mxu0 0.0
    %1728 = vmatpush1.msra.mxu0 %v492
    %1729 = vmatprep.subr.mxu0 0.0
    %1730 = vmatpush1.msra.mxu0 %v493
    %1731 = vmatprep.subr.mxu0 0.0
    %1732 = vmatpush1.msra.mxu0 %v494
    %1733 = vmatprep.subr.mxu0 0.0
    %1734 = vmatpush1.msra.mxu0 %v495
    %1735 = vmatprep.subr.mxu0 0.0
    %1736 = vmatpush1.msra.mxu0 %v496
    %1737 = vmatprep.subr.mxu0 0.0
    %1738 = vmatpush1.msra.mxu0 %v497
    %1739 = vmatprep.subr.mxu0 0.0
    %1740 = vmatpush1.msra.mxu0 %v498
    %1741 = vmatprep.subr.mxu0 0.0
    %1742 = vmatpush1.msra.mxu0 %v499
    %1743 = vmatprep.subr.mxu0 0.0
    %1744 = vmatpush1.msra.mxu0 %v500
    %1745 = vmatprep.subr.mxu0 0.0
    %1746 = vmatpush1.msra.mxu0 %v501
    %1747 = vmatprep.subr.mxu0 0.0
    %1748 = vmatpush1.msra.mxu0 %v502
    %1749 = vmatprep.subr.mxu0 0.0
    %1750 = vmatpush1.msra.mxu0 %v503
    %1751 = vmatprep.subr.mxu0 0.0
    %1752 = vmatpush1.msra.mxu0 %v504
    %1753 = vmatprep.subr.mxu0 0.0
    %1754 = vmatpush1.msra.mxu0 %v505
    %1755 = vmatprep.subr.mxu0 0.0
    %1756 = vmatpush1.msra.mxu0 %v506
    %1757 = vmatprep.subr.mxu0 0.0
    %1758 = vmatpush1.msra.mxu0 %v507
    %1759 = vmatprep.subr.mxu0 0.0
    %1760 = vmatpush1.msra.mxu0 %v508
    %1761 = vmatprep.mubr.f32.mxu0 %v683
    %1762 = vmatmul.mubr.f32.gmra.mrb[0].mxu0 %v675
    %v1763 = vpop.f32.mrb[0].mxu0
    %v1764 = vadd.f32 %v1694, %v1763
    %v1765 = vpop.f32.mrb[0].mxu0
    %1766 = vdwg.mxu0
    %1767 = vmatprep.subr.mxu0 0.0
    %1768 = vmatpush1.msra.mxu0 %v509
    %1769 = vmatprep.subr.mxu0 0.0
    %1770 = vmatpush1.msra.mxu0 %v510
    %1771 = vmatprep.subr.mxu0 0.0
    %1772 = vmatpush1.msra.mxu0 %v511
    %1773 = vmatprep.subr.mxu0 0.0
    %1774 = vmatpush1.msra.mxu0 %v512
    %1775 = vmatprep.subr.mxu0 0.0
    %1776 = vmatpush1.msra.mxu0 %v513
    %1777 = vmatprep.subr.mxu0 0.0
    %1778 = vmatpush1.msra.mxu0 %v514
    %1779 = vmatprep.subr.mxu0 0.0
    %1780 = vmatpush1.msra.mxu0 %v515
    %1781 = vmatprep.subr.mxu0 0.0
    %1782 = vmatpush1.msra.mxu0 %v516
    %1783 = vmatprep.subr.mxu0 0.0
    %1784 = vmatpush1.msra.mxu0 %v517
    %1785 = vmatprep.subr.mxu0 0.0
    %1786 = vmatpush1.msra.mxu0 %v518
    %1787 = vmatprep.subr.mxu0 0.0
    %1788 = vmatpush1.msra.mxu0 %v519
    %1789 = vmatprep.subr.mxu0 0.0
    %1790 = vmatpush1.msra.mxu0 %v520
    %1791 = vmatprep.subr.mxu0 0.0
    %1792 = vmatpush1.msra.mxu0 %v521
    %1793 = vmatprep.subr.mxu0 0.0
    %1794 = vmatpush1.msra.mxu0 %v522
    %1795 = vmatprep.subr.mxu0 0.0
    %1796 = vmatpush1.msra.mxu0 %v523
    %1797 = vmatprep.subr.mxu0 0.0
    %1798 = vmatpush1.msra.mxu0 %v524
    %1799 = vmatprep.subr.mxu0 0.0
    %1800 = vmatpush1.msra.mxu0 %v525
    %1801 = vmatprep.subr.mxu0 0.0
    %1802 = vmatpush1.msra.mxu0 %v526
    %1803 = vmatprep.subr.mxu0 0.0
    %1804 = vmatpush1.msra.mxu0 %v527
    %1805 = vmatprep.subr.mxu0 0.0
    %1806 = vmatpush1.msra.mxu0 %v528
    %1807 = vmatprep.subr.mxu0 0.0
    %1808 = vmatpush1.msra.mxu0 %v529
    %1809 = vmatprep.subr.mxu0 0.0
    %1810 = vmatpush1.msra.mxu0 %v530
    %1811 = vmatprep.subr.mxu0 0.0
    %1812 = vmatpush1.msra.mxu0 %v531
    %1813 = vmatprep.subr.mxu0 0.0
    %1814 = vmatpush1.msra.mxu0 %v532
    %1815 = vmatprep.subr.mxu0 0.0
    %1816 = vmatpush1.msra.mxu0 %v533
    %1817 = vmatprep.subr.mxu0 0.0
    %1818 = vmatpush1.msra.mxu0 %v534
    %1819 = vmatprep.subr.mxu0 0.0
    %1820 = vmatpush1.msra.mxu0 %v535
    %1821 = vmatprep.subr.mxu0 0.0
    %1822 = vmatpush1.msra.mxu0 %v536
    %1823 = vmatprep.subr.mxu0 0.0
    %1824 = vmatpush1.msra.mxu0 %v537
    %1825 = vmatprep.subr.mxu0 0.0
    %1826 = vmatpush1.msra.mxu0 %v538
    %1827 = vmatprep.subr.mxu0 0.0
    %1828 = vmatpush1.msra.mxu0 %v539
    %1829 = vmatprep.subr.mxu0 0.0
    %1830 = vmatpush1.msra.mxu0 %v540
    %1831 = vmatprep.mubr.f32.mxu0 %v684
    %1832 = vmatmul.mubr.f32.gmra.mrb[0].mxu0 %v682
    %v1833 = vpop.f32.mrb[0].mxu0
    %v1834 = vadd.f32 %v1764, %v1833
    %v1835 = vpop.f32.mrb[0].mxu0
    %1836 = vdwg.mxu0
    %v1837 = vld [vmem:[%s3] sm:$0xff]
    %v1838 = vld [vmem:[%s3 + $0x8] sm:$0xff]
    %v1839 = vld [vmem:[%s3 + $0x10] sm:$0xff]
    %v1840 = vld [vmem:[%s3 + $0x18] sm:$0xff]
    %v1841 = vld [vmem:[%s3 + $0x20] sm:$0xff]
    %v1842 = vld [vmem:[%s3 + $0x28] sm:$0xff]
    %v1843 = vld [vmem:[%s3 + $0x30] sm:$0xff]
    %v1844 = vld [vmem:[%s3 + $0x38] sm:$0xff]
    %vm1845 = vcmask 523264
    %v1847 = vsel %vm1845, %v1834, 0
    %1849 = vmatprep.subr.mxu0 0.0
    %1850 = vmatpush1.msra.mxu0 %v1837
    %1851 = vmatprep.subr.mxu0 0.0
    %1852 = vmatpush1.msra.mxu0 %v1838
    %1853 = vmatprep.subr.mxu0 0.0
    %1854 = vmatpush1.msra.mxu0 %v1839
    %1855 = vmatprep.subr.mxu0 0.0
    %1856 = vmatpush1.msra.mxu0 %v1840
    %1857 = vmatprep.subr.mxu0 0.0
    %1858 = vmatpush1.msra.mxu0 %v1841
    %1859 = vmatprep.subr.mxu0 0.0
    %1860 = vmatpush1.msra.mxu0 %v1842
    %1861 = vmatprep.subr.mxu0 0.0
    %1862 = vmatpush1.msra.mxu0 %v1843
    %1863 = vmatprep.subr.mxu0 0.0
    %1864 = vmatpush1.msra.mxu0 %v1844
    %1865 = vmatprep.subr.mxu0 0.0
    %1866 = vmatpush1.msra.mxu0 0.0
    %1867 = vmatprep.subr.mxu0 0.0
    %1868 = vmatpush1.msra.mxu0 0.0
    %1869 = vmatprep.subr.mxu0 0.0
    %1870 = vmatpush1.msra.mxu0 0.0
    %1871 = vmatprep.subr.mxu0 0.0
    %1872 = vmatpush1.msra.mxu0 0.0
    %1873 = vmatprep.subr.mxu0 0.0
    %1874 = vmatpush1.msra.mxu0 0.0
    %1875 = vmatprep.subr.mxu0 0.0
    %1876 = vmatpush1.msra.mxu0 0.0
    %1877 = vmatprep.subr.mxu0 0.0
    %1878 = vmatpush1.msra.mxu0 0.0
    %1879 = vmatprep.subr.mxu0 0.0
    %1880 = vmatpush1.msra.mxu0 0.0
    %1881 = vmatprep.subr.mxu0 0.0
    %1882 = vmatpush1.msra.mxu0 0.0
    %1883 = vmatprep.subr.mxu0 0.0
    %1884 = vmatpush1.msra.mxu0 0.0
    %1885 = vmatprep.subr.mxu0 0.0
    %1886 = vmatpush1.msra.mxu0 0.0
    %1887 = vmatprep.subr.mxu0 0.0
    %1888 = vmatpush1.msra.mxu0 0.0
    %1889 = vmatprep.subr.mxu0 0.0
    %1890 = vmatpush1.msra.mxu0 0.0
    %1891 = vmatprep.subr.mxu0 0.0
    %1892 = vmatpush1.msra.mxu0 0.0
    %1893 = vmatprep.subr.mxu0 0.0
    %1894 = vmatpush1.msra.mxu0 0.0
    %1895 = vmatprep.subr.mxu0 0.0
    %1896 = vmatpush1.msra.mxu0 0.0
    %1897 = vmatprep.subr.mxu0 0.0
    %1898 = vmatpush1.msra.mxu0 0.0
    %1899 = vmatprep.subr.mxu0 0.0
    %1900 = vmatpush1.msra.mxu0 0.0
    %1901 = vmatprep.subr.mxu0 0.0
    %1902 = vmatpush1.msra.mxu0 0.0
    %1903 = vmatprep.subr.mxu0 0.0
    %1904 = vmatpush1.msra.mxu0 0.0
    %1905 = vmatprep.subr.mxu0 0.0
    %1906 = vmatpush1.msra.mxu0 0.0
    %1907 = vmatprep.subr.mxu0 0.0
    %1908 = vmatpush1.msra.mxu0 0.0
    %1909 = vmatprep.subr.mxu0 0.0
    %1910 = vmatpush1.msra.mxu0 0.0
    %1911 = vmatprep.subr.mxu0 0.0
    %1912 = vmatpush1.msra.mxu0 0.0
    %1913 = vmatprep.mubr.f32.mxu0 0.0
    %1914 = vmatmul.mubr.f32.gmra.mrb[0].mxu0 %v1847
    %v1915 = vpop.f32.mrb[0].mxu0
    %v1916 = vadd.f32 0.0, %v1915
    %v1917 = vpop.f32.mrb[0].mxu0
    %1918 = vdwg.mxu0
    %v1919 = vmax.f32 %v1916, 0.0
    %v1920 = vld [vmem:[%s4] sm:$0xf]
    %vm1921 = vcmask 31744
    %v1923 = vsel %vm1921, %v1919, 0
    %vm1925 = vcmask 1043456
    %v1927 = vsel %vm1925, %v1920, 0
    %1929 = vmatprep.subr.mxu0 0.0
    %1930 = vmatpush1.msra.mxu0 %v1927
    %1931 = vmatprep.subr.mxu0 0.0
    %1932 = vmatpush1.msra.mxu0 0.0
    %1933 = vmatprep.subr.mxu0 0.0
    %1934 = vmatpush1.msra.mxu0 0.0
    %1935 = vmatprep.subr.mxu0 0.0
    %1936 = vmatpush1.msra.mxu0 0.0
    %1937 = vmatprep.subr.mxu0 0.0
    %1938 = vmatpush1.msra.mxu0 0.0
    %1939 = vmatprep.subr.mxu0 0.0
    %1940 = vmatpush1.msra.mxu0 0.0
    %1941 = vmatprep.subr.mxu0 0.0
    %1942 = vmatpush1.msra.mxu0 0.0
    %1943 = vmatprep.subr.mxu0 0.0
    %1944 = vmatpush1.msra.mxu0 0.0
    %1945 = vmatprep.subr.mxu0 0.0
    %1946 = vmatpush1.msra.mxu0 0.0
    %1947 = vmatprep.subr.mxu0 0.0
    %1948 = vmatpush1.msra.mxu0 0.0
    %1949 = vmatprep.subr.mxu0 0.0
    %1950 = vmatpush1.msra.mxu0 0.0
    %1951 = vmatprep.subr.mxu0 0.0
    %1952 = vmatpush1.msra.mxu0 0.0
    %1953 = vmatprep.subr.mxu0 0.0
    %1954 = vmatpush1.msra.mxu0 0.0
    %1955 = vmatprep.subr.mxu0 0.0
    %1956 = vmatpush1.msra.mxu0 0.0
    %1957 = vmatprep.subr.mxu0 0.0
    %1958 = vmatpush1.msra.mxu0 0.0
    %1959 = vmatprep.subr.mxu0 0.0
    %1960 = vmatpush1.msra.mxu0 0.0
    %1961 = vmatprep.subr.mxu0 0.0
    %1962 = vmatpush1.msra.mxu0 0.0
    %1963 = vmatprep.subr.mxu0 0.0
    %1964 = vmatpush1.msra.mxu0 0.0
    %1965 = vmatprep.subr.mxu0 0.0
    %1966 = vmatpush1.msra.mxu0 0.0
    %1967 = vmatprep.subr.mxu0 0.0
    %1968 = vmatpush1.msra.mxu0 0.0
    %1969 = vmatprep.subr.mxu0 0.0
    %1970 = vmatpush1.msra.mxu0 0.0
    %1971 = vmatprep.subr.mxu0 0.0
    %1972 = vmatpush1.msra.mxu0 0.0
    %1973 = vmatprep.subr.mxu0 0.0
    %1974 = vmatpush1.msra.mxu0 0.0
    %1975 = vmatprep.subr.mxu0 0.0
    %1976 = vmatpush1.msra.mxu0 0.0
    %1977 = vmatprep.subr.mxu0 0.0
    %1978 = vmatpush1.msra.mxu0 0.0
    %1979 = vmatprep.subr.mxu0 0.0
    %1980 = vmatpush1.msra.mxu0 0.0
    %1981 = vmatprep.subr.mxu0 0.0
    %1982 = vmatpush1.msra.mxu0 0.0
    %1983 = vmatprep.subr.mxu0 0.0
    %1984 = vmatpush1.msra.mxu0 0.0
    %1985 = vmatprep.subr.mxu0 0.0
    %1986 = vmatpush1.msra.mxu0 0.0
    %1987 = vmatprep.subr.mxu0 0.0
    %1988 = vmatpush1.msra.mxu0 0.0
    %1989 = vmatprep.subr.mxu0 0.0
    %1990 = vmatpush1.msra.mxu0 0.0
    %1991 = vmatprep.subr.mxu0 0.0
    %1992 = vmatpush1.msra.mxu0 0.0
    %1993 = vmatprep.mubr.f32.mxu0 0.0
    %1994 = vmatmul.mubr.f32.gmra.mrb[0].mxu0 %v1923
    %v1995 = vpop.f32.mrb[0].mxu0
    %v1996 = vadd.f32 0.0, %v1995
    %v1997 = vpop.f32.mrb[0].mxu0
    %1998 = vdwg.mxu0
    %v1999 = vxor.u32 %v1996, 2147483648
    %v2000 = vmul.f32 %v1999, 1.442695
    %v2001 = vpow.pop %v2000
    %v2002 = vadd.f32 %v2001, 1.0
    %v2003 = vrcp.pop %v2002
    %v2004 = vmul.f32 1.0, %v2003
    %v2005 = vld [vmem:[%s2] sm:$0xff]
    %v2006 = vld [vmem:[%s2 + $0x8] sm:$0xff]
    %v2007 = vld [vmem:[%s2 + $0x10] sm:$0xff]
    %v2008 = vld [vmem:[%s2 + $0x18] sm:$0xff]
    %v2009 = vld [vmem:[%s2 + $0x20] sm:$0xff]
    %v2010 = vld [vmem:[%s2 + $0x28] sm:$0xff]
    %v2011 = vld [vmem:[%s2 + $0x30] sm:$0xff]
    %v2012 = vld [vmem:[%s2 + $0x38] sm:$0xff]
    %v2013 = vld [vmem:[%s2 + $0x40] sm:$0xff]
    %v2014 = vld [vmem:[%s2 + $0x48] sm:$0xff]
    %v2015 = vld [vmem:[%s2 + $0x50] sm:$0xff]
    %v2016 = vld [vmem:[%s2 + $0x58] sm:$0xff]
    %v2017 = vld [vmem:[%s2 + $0x60] sm:$0xff]
    %v2018 = vld [vmem:[%s2 + $0x68] sm:$0xff]
    %v2019 = vld [vmem:[%s2 + $0x70] sm:$0xff]
    %v2020 = vld [vmem:[%s2 + $0x78] sm:$0xff]
    %v2021 = vld [vmem:[%s2 + $0x80] sm:$0xff]
    %v2022 = vld [vmem:[%s2 + $0x88] sm:$0xff]
    %v2023 = vld [vmem:[%s2 + $0x90] sm:$0xff]
    %v2024 = vld [vmem:[%s2 + $0x98] sm:$0xff]
    %v2025 = vld [vmem:[%s2 + $0xa0] sm:$0xff]
    %v2026 = vld [vmem:[%s2 + $0xa8] sm:$0xff]
    %v2027 = vld [vmem:[%s2 + $0xb0] sm:$0xff]
    %v2028 = vld [vmem:[%s2 + $0xb8] sm:$0xff]
    %v2029 = vld [vmem:[%s2 + $0xc0] sm:$0xff]
    %v2030 = vld [vmem:[%s2 + $0xc8] sm:$0xff]
    %v2031 = vld [vmem:[%s2 + $0xd0] sm:$0xff]
    %v2032 = vld [vmem:[%s2 + $0xd8] sm:$0xff]
    %v2033 = vld [vmem:[%s2 + $0xe0] sm:$0xff]
    %v2034 = vld [vmem:[%s2 + $0xe8] sm:$0xff]
    %v2035 = vld [vmem:[%s2 + $0xf0] sm:$0xff]
    %v2036 = vld [vmem:[%s2 + $0xf8] sm:$0xff]
    %v2037 = vld [vmem:[%s2 + $0x100] sm:$0xff]
    %v2038 = vld [vmem:[%s2 + $0x108] sm:$0xff]
    %v2039 = vld [vmem:[%s2 + $0x110] sm:$0xff]
    %v2040 = vld [vmem:[%s2 + $0x118] sm:$0xff]
    %v2041 = vld [vmem:[%s2 + $0x120] sm:$0xff]
    %v2042 = vld [vmem:[%s2 + $0x128] sm:$0xff]
    %v2043 = vld [vmem:[%s2 + $0x130] sm:$0xff]
    %v2044 = vld [vmem:[%s2 + $0x138] sm:$0xff]
    %v2045 = vld [vmem:[%s2 + $0x140] sm:$0xff]
    %v2046 = vld [vmem:[%s2 + $0x148] sm:$0xff]
    %v2047 = vld [vmem:[%s2 + $0x150] sm:$0xff]
    %v2048 = vld [vmem:[%s2 + $0x158] sm:$0xff]
    %v2049 = vld [vmem:[%s2 + $0x160] sm:$0xff]
    %v2050 = vld [vmem:[%s2 + $0x168] sm:$0xff]
    %v2051 = vld [vmem:[%s2 + $0x170] sm:$0xff]
    %v2052 = vld [vmem:[%s2 + $0x178] sm:$0xff]
    %v2053 = vld [vmem:[%s2 + $0x180] sm:$0xff]
    %v2054 = vld [vmem:[%s2 + $0x188] sm:$0xff]
    %v2055 = vld [vmem:[%s2 + $0x190] sm:$0xff]
    %v2056 = vld [vmem:[%s2 + $0x198] sm:$0xff]
    %v2057 = vld [vmem:[%s2 + $0x1a0] sm:$0xff]
    %v2058 = vld [vmem:[%s2 + $0x1a8] sm:$0xff]
    %v2059 = vld [vmem:[%s2 + $0x1b0] sm:$0xff]
    %v2060 = vld [vmem:[%s2 + $0x1b8] sm:$0xff]
    %v2061 = vld [vmem:[%s2 + $0x1c0] sm:$0xff]
    %v2062 = vld [vmem:[%s2 + $0x1c8] sm:$0xff]
    %v2063 = vld [vmem:[%s2 + $0x1d0] sm:$0xff]
    %v2064 = vld [vmem:[%s2 + $0x1d8] sm:$0xff]
    %v2065 = vld [vmem:[%s2 + $0x1e0] sm:$0xff]
    %v2066 = vld [vmem:[%s2 + $0x1e8] sm:$0xff]
    %v2067 = vld [vmem:[%s2 + $0x1f0] sm:$0xff]
    %v2068 = vld [vmem:[%s2 + $0x1f8] sm:$0xff]
    %v2069 = vld [vmem:[%s2 + $0x200] sm:$0xff]
    %v2070 = vld [vmem:[%s2 + $0x208] sm:$0xff]
    %v2071 = vld [vmem:[%s2 + $0x210] sm:$0xff]
    %v2072 = vld [vmem:[%s2 + $0x218] sm:$0xff]
    %v2073 = vld [vmem:[%s2 + $0x220] sm:$0xff]
    %v2074 = vld [vmem:[%s2 + $0x228] sm:$0xff]
    %v2075 = vld [vmem:[%s2 + $0x230] sm:$0xff]
    %v2076 = vld [vmem:[%s2 + $0x238] sm:$0xff]
    %v2077 = vld [vmem:[%s2 + $0x240] sm:$0xff]
    %v2078 = vld [vmem:[%s2 + $0x248] sm:$0xff]
    %v2079 = vld [vmem:[%s2 + $0x250] sm:$0xff]
    %v2080 = vld [vmem:[%s2 + $0x258] sm:$0xff]
    %v2081 = vld [vmem:[%s2 + $0x260] sm:$0xff]
    %v2082 = vld [vmem:[%s2 + $0x268] sm:$0xff]
    %v2083 = vld [vmem:[%s2 + $0x270] sm:$0xff]
    %v2084 = vld [vmem:[%s2 + $0x278] sm:$0xff]
    %v2085 = vld [vmem:[%s2 + $0x280] sm:$0xff]
    %v2086 = vld [vmem:[%s2 + $0x288] sm:$0xff]
    %v2087 = vld [vmem:[%s2 + $0x290] sm:$0xff]
    %v2088 = vld [vmem:[%s2 + $0x298] sm:$0xff]
    %v2089 = vld [vmem:[%s2 + $0x2a0] sm:$0xff]
    %v2090 = vld [vmem:[%s2 + $0x2a8] sm:$0xff]
    %v2091 = vld [vmem:[%s2 + $0x2b0] sm:$0xff]
    %v2092 = vld [vmem:[%s2 + $0x2b8] sm:$0xff]
    %v2093 = vld [vmem:[%s2 + $0x2c0] sm:$0xff]
    %v2094 = vld [vmem:[%s2 + $0x2c8] sm:$0xff]
    %v2095 = vld [vmem:[%s2 + $0x2d0] sm:$0xff]
    %v2096 = vld [vmem:[%s2 + $0x2d8] sm:$0xff]
    %v2097 = vld [vmem:[%s2 + $0x2e0] sm:$0xff]
    %v2098 = vld [vmem:[%s2 + $0x2e8] sm:$0xff]
    %v2099 = vld [vmem:[%s2 + $0x2f0] sm:$0xff]
    %v2100 = vld [vmem:[%s2 + $0x2f8] sm:$0xff]
    %v2101 = vld [vmem:[%s2 + $0x300] sm:$0xff]
    %v2102 = vld [vmem:[%s2 + $0x308] sm:$0xff]
    %v2103 = vld [vmem:[%s2 + $0x310] sm:$0xff]
    %v2104 = vld [vmem:[%s2 + $0x318] sm:$0xff]
    %v2105 = vld [vmem:[%s2 + $0x320] sm:$0xff]
    %v2106 = vld [vmem:[%s2 + $0x328] sm:$0xff]
    %v2107 = vld [vmem:[%s2 + $0x330] sm:$0xff]
    %v2108 = vld [vmem:[%s2 + $0x338] sm:$0xff]
    %v2109 = vld [vmem:[%s2 + $0x340] sm:$0xff]
    %v2110 = vld [vmem:[%s2 + $0x348] sm:$0xff]
    %v2111 = vld [vmem:[%s2 + $0x350] sm:$0xff]
    %v2112 = vld [vmem:[%s2 + $0x358] sm:$0xff]
    %v2113 = vld [vmem:[%s2 + $0x360] sm:$0xff]
    %v2114 = vld [vmem:[%s2 + $0x368] sm:$0xff]
    %v2115 = vld [vmem:[%s2 + $0x370] sm:$0xff]
    %v2116 = vld [vmem:[%s2 + $0x378] sm:$0xff]
    %v2117 = vld [vmem:[%s2 + $0x380] sm:$0xff]
    %v2118 = vld [vmem:[%s2 + $0x388] sm:$0xff]
    %v2119 = vld [vmem:[%s2 + $0x390] sm:$0xff]
    %v2120 = vld [vmem:[%s2 + $0x398] sm:$0xff]
    %v2121 = vld [vmem:[%s2 + $0x3a0] sm:$0xff]
    %v2122 = vld [vmem:[%s2 + $0x3a8] sm:$0xff]
    %v2123 = vld [vmem:[%s2 + $0x3b0] sm:$0xff]
    %v2124 = vld [vmem:[%s2 + $0x3b8] sm:$0xff]
    %v2125 = vld [vmem:[%s2 + $0x3c0] sm:$0xff]
    %v2126 = vld [vmem:[%s2 + $0x3c8] sm:$0xff]
    %v2127 = vld [vmem:[%s2 + $0x3d0] sm:$0xff]
    %v2128 = vld [vmem:[%s2 + $0x3d8] sm:$0xff]
    %v2129 = vld [vmem:[%s2 + $0x3e0] sm:$0xff]
    %v2130 = vld [vmem:[%s2 + $0x3e8] sm:$0xff]
    %v2131 = vld [vmem:[%s2 + $0x3f0] sm:$0xff]
    %v2132 = vld [vmem:[%s2 + $0x3f8] sm:$0xff]
    %v2133 = vld [vmem:[%s2 + $0x400] sm:$0xff]
    %v2134 = vld [vmem:[%s2 + $0x408] sm:$0xff]
    %v2135 = vld [vmem:[%s2 + $0x410] sm:$0xff]
    %v2136 = vld [vmem:[%s2 + $0x418] sm:$0xff]
    %v2137 = vld [vmem:[%s2 + $0x420] sm:$0xff]
    %v2138 = vld [vmem:[%s2 + $0x428] sm:$0xff]
    %v2139 = vld [vmem:[%s2 + $0x430] sm:$0xff]
    %v2140 = vld [vmem:[%s2 + $0x438] sm:$0xff]
    %v2141 = vld [vmem:[%s2 + $0x440] sm:$0xff]
    %v2142 = vld [vmem:[%s2 + $0x448] sm:$0xff]
    %v2143 = vld [vmem:[%s2 + $0x450] sm:$0xff]
    %v2144 = vld [vmem:[%s2 + $0x458] sm:$0xff]
    %v2145 = vld [vmem:[%s2 + $0x460] sm:$0xff]
    %v2146 = vld [vmem:[%s2 + $0x468] sm:$0xff]
    %v2147 = vld [vmem:[%s2 + $0x470] sm:$0xff]
    %v2148 = vld [vmem:[%s2 + $0x478] sm:$0xff]
    %v2149 = vld [vmem:[%s2 + $0x480] sm:$0xff]
    %v2150 = vld [vmem:[%s2 + $0x488] sm:$0xff]
    %v2151 = vld [vmem:[%s2 + $0x490] sm:$0xff]
    %v2152 = vld [vmem:[%s2 + $0x498] sm:$0xff]
    %v2153 = vld [vmem:[%s2 + $0x4a0] sm:$0xff]
    %v2154 = vld [vmem:[%s2 + $0x4a8] sm:$0xff]
    %v2155 = vld [vmem:[%s2 + $0x4b0] sm:$0xff]
    %v2156 = vld [vmem:[%s2 + $0x4b8] sm:$0xff]
    %v2157 = vld [vmem:[%s2 + $0x4c0] sm:$0xff]
    %v2158 = vld [vmem:[%s2 + $0x4c8] sm:$0xff]
    %v2159 = vld [vmem:[%s2 + $0x4d0] sm:$0xff]
    %v2160 = vld [vmem:[%s2 + $0x4d8] sm:$0xff]
    %v2161 = vld [vmem:[%s2 + $0x4e0] sm:$0xff]
    %v2162 = vld [vmem:[%s2 + $0x4e8] sm:$0xff]
    %v2163 = vld [vmem:[%s2 + $0x4f0] sm:$0xff]
    %v2164 = vld [vmem:[%s2 + $0x4f8] sm:$0xff]
    %v2165 = vld [vmem:[%s2 + $0x500] sm:$0xff]
    %v2166 = vld [vmem:[%s2 + $0x508] sm:$0xff]
    %v2167 = vld [vmem:[%s2 + $0x510] sm:$0xff]
    %v2168 = vld [vmem:[%s2 + $0x518] sm:$0xff]
    %v2169 = vld [vmem:[%s2 + $0x520] sm:$0xff]
    %v2170 = vld [vmem:[%s2 + $0x528] sm:$0xff]
    %v2171 = vld [vmem:[%s2 + $0x530] sm:$0xff]
    %v2172 = vld [vmem:[%s2 + $0x538] sm:$0xff]
    %v2173 = vld [vmem:[%s2 + $0x540] sm:$0xff]
    %v2174 = vld [vmem:[%s2 + $0x548] sm:$0xff]
    %v2175 = vld [vmem:[%s2 + $0x550] sm:$0xff]
    %v2176 = vld [vmem:[%s2 + $0x558] sm:$0xff]
    %v2177 = vld [vmem:[%s2 + $0x560] sm:$0xff]
    %v2178 = vld [vmem:[%s2 + $0x568] sm:$0xff]
    %v2179 = vld [vmem:[%s2 + $0x570] sm:$0xff]
    %v2180 = vld [vmem:[%s2 + $0x578] sm:$0xff]
    %v2181 = vld [vmem:[%s2 + $0x580] sm:$0xff]
    %v2182 = vld [vmem:[%s2 + $0x588] sm:$0xff]
    %v2183 = vld [vmem:[%s2 + $0x590] sm:$0xff]
    %v2184 = vld [vmem:[%s2 + $0x598] sm:$0xff]
    %v2185 = vld [vmem:[%s2 + $0x5a0] sm:$0xff]
    %v2186 = vld [vmem:[%s2 + $0x5a8] sm:$0xff]
    %v2187 = vld [vmem:[%s2 + $0x5b0] sm:$0xff]
    %v2188 = vld [vmem:[%s2 + $0x5b8] sm:$0xff]
    %v2189 = vld [vmem:[%s2 + $0x5c0] sm:$0xff]
    %v2190 = vld [vmem:[%s2 + $0x5c8] sm:$0xff]
    %v2191 = vld [vmem:[%s2 + $0x5d0] sm:$0xff]
    %v2192 = vld [vmem:[%s2 + $0x5d8] sm:$0xff]
    %v2193 = vld [vmem:[%s2 + $0x5e0] sm:$0xff]
    %v2194 = vld [vmem:[%s2 + $0x5e8] sm:$0xff]
    %v2195 = vld [vmem:[%s2 + $0x5f0] sm:$0xff]
    %v2196 = vld [vmem:[%s2 + $0x5f8] sm:$0xff]
    %v2197 = vld [vmem:[%s2 + $0x600] sm:$0xff]
    %v2198 = vld [vmem:[%s2 + $0x608] sm:$0xff]
    %v2199 = vld [vmem:[%s2 + $0x610] sm:$0xff]
    %v2200 = vld [vmem:[%s2 + $0x618] sm:$0xff]
    %v2201 = vld [vmem:[%s2 + $0x620] sm:$0xff]
    %v2202 = vld [vmem:[%s2 + $0x628] sm:$0xff]
    %v2203 = vld [vmem:[%s2 + $0x630] sm:$0xff]
    %v2204 = vld [vmem:[%s2 + $0x638] sm:$0xff]
    %v2205 = vld [vmem:[%s2 + $0x640] sm:$0xff]
    %v2206 = vld [vmem:[%s2 + $0x648] sm:$0xff]
    %v2207 = vld [vmem:[%s2 + $0x650] sm:$0xff]
    %v2208 = vld [vmem:[%s2 + $0x658] sm:$0xff]
    %v2209 = vld [vmem:[%s2 + $0x660] sm:$0xff]
    %v2210 = vld [vmem:[%s2 + $0x668] sm:$0xff]
    %v2211 = vld [vmem:[%s2 + $0x670] sm:$0xff]
    %v2212 = vld [vmem:[%s2 + $0x678] sm:$0xff]
    %v2213 = vld [vmem:[%s2 + $0x680] sm:$0xff]
    %v2214 = vld [vmem:[%s2 + $0x688] sm:$0xff]
    %v2215 = vld [vmem:[%s2 + $0x690] sm:$0xff]
    %v2216 = vld [vmem:[%s2 + $0x698] sm:$0xff]
    %v2217 = vld [vmem:[%s2 + $0x6a0] sm:$0xff]
    %v2218 = vld [vmem:[%s2 + $0x6a8] sm:$0xff]
    %v2219 = vld [vmem:[%s2 + $0x6b0] sm:$0xff]
    %v2220 = vld [vmem:[%s2 + $0x6b8] sm:$0xff]
    %v2221 = vld [vmem:[%s2 + $0x6c0] sm:$0xff]
    %v2222 = vld [vmem:[%s2 + $0x6c8] sm:$0xff]
    %v2223 = vld [vmem:[%s2 + $0x6d0] sm:$0xff]
    %v2224 = vld [vmem:[%s2 + $0x6d8] sm:$0xff]
    %v2225 = vld [vmem:[%s2 + $0x6e0] sm:$0xff]
    %v2226 = vld [vmem:[%s2 + $0x6e8] sm:$0xff]
    %v2227 = vld [vmem:[%s2 + $0x6f0] sm:$0xff]
    %v2228 = vld [vmem:[%s2 + $0x6f8] sm:$0xff]
    %v2229 = vld [vmem:[%s2 + $0x700] sm:$0xff]
    %v2230 = vld [vmem:[%s2 + $0x708] sm:$0xff]
    %v2231 = vld [vmem:[%s2 + $0x710] sm:$0xff]
    %v2232 = vld [vmem:[%s2 + $0x718] sm:$0xff]
    %v2233 = vld [vmem:[%s2 + $0x720] sm:$0xff]
    %v2234 = vld [vmem:[%s2 + $0x728] sm:$0xff]
    %v2235 = vld [vmem:[%s2 + $0x730] sm:$0xff]
    %v2236 = vld [vmem:[%s2 + $0x738] sm:$0xff]
    %v2237 = vld [vmem:[%s2 + $0x740] sm:$0xff]
    %v2238 = vld [vmem:[%s2 + $0x748] sm:$0xff]
    %v2239 = vld [vmem:[%s2 + $0x750] sm:$0xff]
    %v2240 = vld [vmem:[%s2 + $0x758] sm:$0xff]
    %v2241 = vld [vmem:[%s2 + $0x760] sm:$0xff]
    %v2242 = vld [vmem:[%s2 + $0x768] sm:$0xff]
    %v2243 = vld [vmem:[%s2 + $0x770] sm:$0xff]
    %v2244 = vld [vmem:[%s2 + $0x778] sm:$0xff]
    %v2245 = vld [vmem:[%s2 + $0x780] sm:$0xff]
    %v2246 = vld [vmem:[%s2 + $0x788] sm:$0xff]
    %v2247 = vld [vmem:[%s2 + $0x790] sm:$0xff]
    %v2248 = vld [vmem:[%s2 + $0x798] sm:$0xff]
    %v2249 = vld [vmem:[%s2 + $0x7a0] sm:$0xff]
    %v2250 = vld [vmem:[%s2 + $0x7a8] sm:$0xff]
    %v2251 = vld [vmem:[%s2 + $0x7b0] sm:$0xff]
    %v2252 = vld [vmem:[%s2 + $0x7b8] sm:$0xff]
    %v2253 = vld [vmem:[%s2 + $0x7c0] sm:$0xff]
    %v2254 = vld [vmem:[%s2 + $0x7c8] sm:$0xff]
    %v2255 = vld [vmem:[%s2 + $0x7d0] sm:$0xff]
    %v2256 = vld [vmem:[%s2 + $0x7d8] sm:$0xff]
    %v2257 = vld [vmem:[%s2 + $0x7e0] sm:$0xff]
    %v2258 = vld [vmem:[%s2 + $0x7e8] sm:$0xff]
    %v2259 = vld [vmem:[%s2 + $0x7f0] sm:$0xff]
    %v2260 = vld [vmem:[%s2 + $0x7f8] sm:$0xff]
    %v2262 = vsel %vm1845, %v2004, 0
    %2264 = vmatprep.subr.mxu0 %v2006
    %2265 = vmatpush1.msra.mxu0 %v2005
    %2266 = vmatprep.subr.mxu0 %v2038
    %2267 = vmatpush1.msra.mxu0 %v2037
    %2268 = vmatprep.subr.mxu0 %v2070
    %2269 = vmatpush1.msra.mxu0 %v2069
    %2270 = vmatprep.subr.mxu0 %v2102
    %2271 = vmatpush1.msra.mxu0 %v2101
    %2272 = vmatprep.subr.mxu0 %v2134
    %2273 = vmatpush1.msra.mxu0 %v2133
    %2274 = vmatprep.subr.mxu0 %v2166
    %2275 = vmatpush1.msra.mxu0 %v2165
    %2276 = vmatprep.subr.mxu0 %v2198
    %2277 = vmatpush1.msra.mxu0 %v2197
    %2278 = vmatprep.subr.mxu0 %v2230
    %2279 = vmatpush1.msra.mxu0 %v2229
    %2280 = vmatprep.subr.mxu0 0.0
    %2281 = vmatpush1.msra.mxu0 0.0
    %2282 = vmatprep.subr.mxu0 0.0
    %2283 = vmatpush1.msra.mxu0 0.0
    %2284 = vmatprep.subr.mxu0 0.0
    %2285 = vmatpush1.msra.mxu0 0.0
    %2286 = vmatprep.subr.mxu0 0.0
    %2287 = vmatpush1.msra.mxu0 0.0
    %2288 = vmatprep.subr.mxu0 0.0
    %2289 = vmatpush1.msra.mxu0 0.0
    %2290 = vmatprep.subr.mxu0 0.0
    %2291 = vmatpush1.msra.mxu0 0.0
    %2292 = vmatprep.subr.mxu0 0.0
    %2293 = vmatpush1.msra.mxu0 0.0
    %2294 = vmatprep.subr.mxu0 0.0
    %2295 = vmatpush1.msra.mxu0 0.0
    %2296 = vmatprep.subr.mxu0 0.0
    %2297 = vmatpush1.msra.mxu0 0.0
    %2298 = vmatprep.subr.mxu0 0.0
    %2299 = vmatpush1.msra.mxu0 0.0
    %2300 = vmatprep.subr.mxu0 0.0
    %2301 = vmatpush1.msra.mxu0 0.0
    %2302 = vmatprep.subr.mxu0 0.0
    %2303 = vmatpush1.msra.mxu0 0.0
    %2304 = vmatprep.subr.mxu0 0.0
    %2305 = vmatpush1.msra.mxu0 0.0
    %2306 = vmatprep.subr.mxu0 0.0
    %2307 = vmatpush1.msra.mxu0 0.0
    %2308 = vmatprep.subr.mxu0 0.0
    %2309 = vmatpush1.msra.mxu0 0.0
    %2310 = vmatprep.subr.mxu0 0.0
    %2311 = vmatpush1.msra.mxu0 0.0
    %2312 = vmatprep.subr.mxu0 0.0
    %2313 = vmatpush1.msra.mxu0 0.0
    %2314 = vmatprep.subr.mxu0 0.0
    %2315 = vmatpush1.msra.mxu0 0.0
    %2316 = vmatprep.subr.mxu0 0.0
    %2317 = vmatpush1.msra.mxu0 0.0
    %2318 = vmatprep.subr.mxu0 0.0
    %2319 = vmatpush1.msra.mxu0 0.0
    %2320 = vmatprep.subr.mxu0 0.0
    %2321 = vmatpush1.msra.mxu0 0.0
    %2322 = vmatprep.subr.mxu0 0.0
    %2323 = vmatpush1.msra.mxu0 0.0
    %2324 = vmatprep.subr.mxu0 0.0
    %2325 = vmatpush1.msra.mxu0 0.0
    %2326 = vmatprep.subr.mxu0 0.0
    %2327 = vmatpush1.msra.mxu0 0.0
    %2328 = vmatprep.mubr.f32.mxu0 0.0
    %2329 = vmatmul.mubr.f32.gmra.mrb[0].mxu0 %v2262
    %v2330 = vpop.f32.mrb[0].mxu0
    %v2331 = vadd.f32 0.0, %v2330
    %v2332 = vpop.f32.mrb[0].mxu0
    %v2333 = vadd.f32 0.0, %v2332
    %2334 = vdwg.mxu0
    %2335 = vmatprep.subr.mxu0 %v2008
    %2336 = vmatpush1.msra.mxu0 %v2007
    %2337 = vmatprep.subr.mxu0 %v2040
    %2338 = vmatpush1.msra.mxu0 %v2039
    %2339 = vmatprep.subr.mxu0 %v2072
    %2340 = vmatpush1.msra.mxu0 %v2071
    %2341 = vmatprep.subr.mxu0 %v2104
    %2342 = vmatpush1.msra.mxu0 %v2103
    %2343 = vmatprep.subr.mxu0 %v2136
    %2344 = vmatpush1.msra.mxu0 %v2135
    %2345 = vmatprep.subr.mxu0 %v2168
    %2346 = vmatpush1.msra.mxu0 %v2167
    %2347 = vmatprep.subr.mxu0 %v2200
    %2348 = vmatpush1.msra.mxu0 %v2199
    %2349 = vmatprep.subr.mxu0 %v2232
    %2350 = vmatpush1.msra.mxu0 %v2231
    %2351 = vmatprep.subr.mxu0 0.0
    %2352 = vmatpush1.msra.mxu0 0.0
    %2353 = vmatprep.subr.mxu0 0.0
    %2354 = vmatpush1.msra.mxu0 0.0
    %2355 = vmatprep.subr.mxu0 0.0
    %2356 = vmatpush1.msra.mxu0 0.0
    %2357 = vmatprep.subr.mxu0 0.0
    %2358 = vmatpush1.msra.mxu0 0.0
    %2359 = vmatprep.subr.mxu0 0.0
    %2360 = vmatpush1.msra.mxu0 0.0
    %2361 = vmatprep.subr.mxu0 0.0
    %2362 = vmatpush1.msra.mxu0 0.0
    %2363 = vmatprep.subr.mxu0 0.0
    %2364 = vmatpush1.msra.mxu0 0.0
    %2365 = vmatprep.subr.mxu0 0.0
    %2366 = vmatpush1.msra.mxu0 0.0
    %2367 = vmatprep.subr.mxu0 0.0
    %2368 = vmatpush1.msra.mxu0 0.0
    %2369 = vmatprep.subr.mxu0 0.0
    %2370 = vmatpush1.msra.mxu0 0.0
    %2371 = vmatprep.subr.mxu0 0.0
    %2372 = vmatpush1.msra.mxu0 0.0
    %2373 = vmatprep.subr.mxu0 0.0
    %2374 = vmatpush1.msra.mxu0 0.0
    %2375 = vmatprep.subr.mxu0 0.0
    %2376 = vmatpush1.msra.mxu0 0.0
    %2377 = vmatprep.subr.mxu0 0.0
    %2378 = vmatpush1.msra.mxu0 0.0
    %2379 = vmatprep.subr.mxu0 0.0
    %2380 = vmatpush1.msra.mxu0 0.0
    %2381 = vmatprep.subr.mxu0 0.0
    %2382 = vmatpush1.msra.mxu0 0.0
    %2383 = vmatprep.subr.mxu0 0.0
    %2384 = vmatpush1.msra.mxu0 0.0
    %2385 = vmatprep.subr.mxu0 0.0
    %2386 = vmatpush1.msra.mxu0 0.0
    %2387 = vmatprep.subr.mxu0 0.0
    %2388 = vmatpush1.msra.mxu0 0.0
    %2389 = vmatprep.subr.mxu0 0.0
    %2390 = vmatpush1.msra.mxu0 0.0
    %2391 = vmatprep.subr.mxu0 0.0
    %2392 = vmatpush1.msra.mxu0 0.0
    %2393 = vmatprep.subr.mxu0 0.0
    %2394 = vmatpush1.msra.mxu0 0.0
    %2395 = vmatprep.subr.mxu0 0.0
    %2396 = vmatpush1.msra.mxu0 0.0
    %2397 = vmatprep.subr.mxu0 0.0
    %2398 = vmatpush1.msra.mxu0 0.0
    %2399 = vmatprep.mubr.f32.mxu0 0.0
    %2400 = vmatmul.mubr.f32.gmra.mrb[0].mxu0 %v2262
    %v2401 = vpop.f32.mrb[0].mxu0
    %v2402 = vadd.f32 0.0, %v2401
    %v2403 = vpop.f32.mrb[0].mxu0
    %v2404 = vadd.f32 0.0, %v2403
    %2405 = vdwg.mxu0
    %2406 = vmatprep.subr.mxu0 %v2010
    %2407 = vmatpush1.msra.mxu0 %v2009
    %2408 = vmatprep.subr.mxu0 %v2042
    %2409 = vmatpush1.msra.mxu0 %v2041
    %2410 = vmatprep.subr.mxu0 %v2074
    %2411 = vmatpush1.msra.mxu0 %v2073
    %2412 = vmatprep.subr.mxu0 %v2106
    %2413 = vmatpush1.msra.mxu0 %v2105
    %2414 = vmatprep.subr.mxu0 %v2138
    %2415 = vmatpush1.msra.mxu0 %v2137
    %2416 = vmatprep.subr.mxu0 %v2170
    %2417 = vmatpush1.msra.mxu0 %v2169
    %2418 = vmatprep.subr.mxu0 %v2202
    %2419 = vmatpush1.msra.mxu0 %v2201
    %2420 = vmatprep.subr.mxu0 %v2234
    %2421 = vmatpush1.msra.mxu0 %v2233
    %2422 = vmatprep.subr.mxu0 0.0
    %2423 = vmatpush1.msra.mxu0 0.0
    %2424 = vmatprep.subr.mxu0 0.0
    %2425 = vmatpush1.msra.mxu0 0.0
    %2426 = vmatprep.subr.mxu0 0.0
    %2427 = vmatpush1.msra.mxu0 0.0
    %2428 = vmatprep.subr.mxu0 0.0
    %2429 = vmatpush1.msra.mxu0 0.0
    %2430 = vmatprep.subr.mxu0 0.0
    %2431 = vmatpush1.msra.mxu0 0.0
    %2432 = vmatprep.subr.mxu0 0.0
    %2433 = vmatpush1.msra.mxu0 0.0
    %2434 = vmatprep.subr.mxu0 0.0
    %2435 = vmatpush1.msra.mxu0 0.0
    %2436 = vmatprep.subr.mxu0 0.0
    %2437 = vmatpush1.msra.mxu0 0.0
    %2438 = vmatprep.subr.mxu0 0.0
    %2439 = vmatpush1.msra.mxu0 0.0
    %2440 = vmatprep.subr.mxu0 0.0
    %2441 = vmatpush1.msra.mxu0 0.0
    %2442 = vmatprep.subr.mxu0 0.0
    %2443 = vmatpush1.msra.mxu0 0.0
    %2444 = vmatprep.subr.mxu0 0.0
    %2445 = vmatpush1.msra.mxu0 0.0
    %2446 = vmatprep.subr.mxu0 0.0
    %2447 = vmatpush1.msra.mxu0 0.0
    %2448 = vmatprep.subr.mxu0 0.0
    %2449 = vmatpush1.msra.mxu0 0.0
    %2450 = vmatprep.subr.mxu0 0.0
    %2451 = vmatpush1.msra.mxu0 0.0
    %2452 = vmatprep.subr.mxu0 0.0
    %2453 = vmatpush1.msra.mxu0 0.0
    %2454 = vmatprep.subr.mxu0 0.0
    %2455 = vmatpush1.msra.mxu0 0.0
    %2456 = vmatprep.subr.mxu0 0.0
    %2457 = vmatpush1.msra.mxu0 0.0
    %2458 = vmatprep.subr.mxu0 0.0
    %2459 = vmatpush1.msra.mxu0 0.0
    %2460 = vmatprep.subr.mxu0 0.0
    %2461 = vmatpush1.msra.mxu0 0.0
    %2462 = vmatprep.subr.mxu0 0.0
    %2463 = vmatpush1.msra.mxu0 0.0
    %2464 = vmatprep.subr.mxu0 0.0
    %2465 = vmatpush1.msra.mxu0 0.0
    %2466 = vmatprep.subr.mxu0 0.0
    %2467 = vmatpush1.msra.mxu0 0.0
    %2468 = vmatprep.subr.mxu0 0.0
    %2469 = vmatpush1.msra.mxu0 0.0
    %2470 = vmatprep.mubr.f32.mxu0 0.0
    %2471 = vmatmul.mubr.f32.gmra.mrb[0].mxu0 %v2262
    %v2472 = vpop.f32.mrb[0].mxu0
    %v2473 = vadd.f32 0.0, %v2472
    %v2474 = vpop.f32.mrb[0].mxu0
    %v2475 = vadd.f32 0.0, %v2474
    %2476 = vdwg.mxu0
    %2477 = vmatprep.subr.mxu0 %v2012
    %2478 = vmatpush1.msra.mxu0 %v2011
    %2479 = vmatprep.subr.mxu0 %v2044
    %2480 = vmatpush1.msra.mxu0 %v2043
    %2481 = vmatprep.subr.mxu0 %v2076
    %2482 = vmatpush1.msra.mxu0 %v2075
    %2483 = vmatprep.subr.mxu0 %v2108
    %2484 = vmatpush1.msra.mxu0 %v2107
    %2485 = vmatprep.subr.mxu0 %v2140
    %2486 = vmatpush1.msra.mxu0 %v2139
    %2487 = vmatprep.subr.mxu0 %v2172
    %2488 = vmatpush1.msra.mxu0 %v2171
    %2489 = vmatprep.subr.mxu0 %v2204
    %2490 = vmatpush1.msra.mxu0 %v2203
    %2491 = vmatprep.subr.mxu0 %v2236
    %2492 = vmatpush1.msra.mxu0 %v2235
    %2493 = vmatprep.subr.mxu0 0.0
    %2494 = vmatpush1.msra.mxu0 0.0
    %2495 = vmatprep.subr.mxu0 0.0
    %2496 = vmatpush1.msra.mxu0 0.0
    %2497 = vmatprep.subr.mxu0 0.0
    %2498 = vmatpush1.msra.mxu0 0.0
    %2499 = vmatprep.subr.mxu0 0.0
    %2500 = vmatpush1.msra.mxu0 0.0
    %2501 = vmatprep.subr.mxu0 0.0
    %2502 = vmatpush1.msra.mxu0 0.0
    %2503 = vmatprep.subr.mxu0 0.0
    %2504 = vmatpush1.msra.mxu0 0.0
    %2505 = vmatprep.subr.mxu0 0.0
    %2506 = vmatpush1.msra.mxu0 0.0
    %2507 = vmatprep.subr.mxu0 0.0
    %2508 = vmatpush1.msra.mxu0 0.0
    %2509 = vmatprep.subr.mxu0 0.0
    %2510 = vmatpush1.msra.mxu0 0.0
    %2511 = vmatprep.subr.mxu0 0.0
    %2512 = vmatpush1.msra.mxu0 0.0
    %2513 = vmatprep.subr.mxu0 0.0
    %2514 = vmatpush1.msra.mxu0 0.0
    %2515 = vmatprep.subr.mxu0 0.0
    %2516 = vmatpush1.msra.mxu0 0.0
    %2517 = vmatprep.subr.mxu0 0.0
    %2518 = vmatpush1.msra.mxu0 0.0
    %2519 = vmatprep.subr.mxu0 0.0
    %2520 = vmatpush1.msra.mxu0 0.0
    %2521 = vmatprep.subr.mxu0 0.0
    %2522 = vmatpush1.msra.mxu0 0.0
    %2523 = vmatprep.subr.mxu0 0.0
    %2524 = vmatpush1.msra.mxu0 0.0
    %2525 = vmatprep.subr.mxu0 0.0
    %2526 = vmatpush1.msra.mxu0 0.0
    %2527 = vmatprep.subr.mxu0 0.0
    %2528 = vmatpush1.msra.mxu0 0.0
    %2529 = vmatprep.subr.mxu0 0.0
    %2530 = vmatpush1.msra.mxu0 0.0
    %2531 = vmatprep.subr.mxu0 0.0
    %2532 = vmatpush1.msra.mxu0 0.0
    %2533 = vmatprep.subr.mxu0 0.0
    %2534 = vmatpush1.msra.mxu0 0.0
    %2535 = vmatprep.subr.mxu0 0.0
    %2536 = vmatpush1.msra.mxu0 0.0
    %2537 = vmatprep.subr.mxu0 0.0
    %2538 = vmatpush1.msra.mxu0 0.0
    %2539 = vmatprep.subr.mxu0 0.0
    %2540 = vmatpush1.msra.mxu0 0.0
    %2541 = vmatprep.mubr.f32.mxu0 0.0
    %2542 = vmatmul.mubr.f32.gmra.mrb[0].mxu0 %v2262
    %v2543 = vpop.f32.mrb[0].mxu0
    %v2544 = vadd.f32 0.0, %v2543
    %v2545 = vpop.f32.mrb[0].mxu0
    %v2546 = vadd.f32 0.0, %v2545
    %2547 = vdwg.mxu0
    %2548 = vmatprep.subr.mxu0 %v2014
    %2549 = vmatpush1.msra.mxu0 %v2013
    %2550 = vmatprep.subr.mxu0 %v2046
    %2551 = vmatpush1.msra.mxu0 %v2045
    %2552 = vmatprep.subr.mxu0 %v2078
    %2553 = vmatpush1.msra.mxu0 %v2077
    %2554 = vmatprep.subr.mxu0 %v2110
    %2555 = vmatpush1.msra.mxu0 %v2109
    %2556 = vmatprep.subr.mxu0 %v2142
    %2557 = vmatpush1.msra.mxu0 %v2141
    %2558 = vmatprep.subr.mxu0 %v2174
    %2559 = vmatpush1.msra.mxu0 %v2173
    %2560 = vmatprep.subr.mxu0 %v2206
    %2561 = vmatpush1.msra.mxu0 %v2205
    %2562 = vmatprep.subr.mxu0 %v2238
    %2563 = vmatpush1.msra.mxu0 %v2237
    %2564 = vmatprep.subr.mxu0 0.0
    %2565 = vmatpush1.msra.mxu0 0.0
    %2566 = vmatprep.subr.mxu0 0.0
    %2567 = vmatpush1.msra.mxu0 0.0
    %2568 = vmatprep.subr.mxu0 0.0
    %2569 = vmatpush1.msra.mxu0 0.0
    %2570 = vmatprep.subr.mxu0 0.0
    %2571 = vmatpush1.msra.mxu0 0.0
    %2572 = vmatprep.subr.mxu0 0.0
    %2573 = vmatpush1.msra.mxu0 0.0
    %2574 = vmatprep.subr.mxu0 0.0
    %2575 = vmatpush1.msra.mxu0 0.0
    %2576 = vmatprep.subr.mxu0 0.0
    %2577 = vmatpush1.msra.mxu0 0.0
    %2578 = vmatprep.subr.mxu0 0.0
    %2579 = vmatpush1.msra.mxu0 0.0
    %2580 = vmatprep.subr.mxu0 0.0
    %2581 = vmatpush1.msra.mxu0 0.0
    %2582 = vmatprep.subr.mxu0 0.0
    %2583 = vmatpush1.msra.mxu0 0.0
    %2584 = vmatprep.subr.mxu0 0.0
    %2585 = vmatpush1.msra.mxu0 0.0
    %2586 = vmatprep.subr.mxu0 0.0
    %2587 = vmatpush1.msra.mxu0 0.0
    %2588 = vmatprep.subr.mxu0 0.0
    %2589 = vmatpush1.msra.mxu0 0.0
    %2590 = vmatprep.subr.mxu0 0.0
    %2591 = vmatpush1.msra.mxu0 0.0
    %2592 = vmatprep.subr.mxu0 0.0
    %2593 = vmatpush1.msra.mxu0 0.0
    %2594 = vmatprep.subr.mxu0 0.0
    %2595 = vmatpush1.msra.mxu0 0.0
    %2596 = vmatprep.subr.mxu0 0.0
    %2597 = vmatpush1.msra.mxu0 0.0
    %2598 = vmatprep.subr.mxu0 0.0
    %2599 = vmatpush1.msra.mxu0 0.0
    %2600 = vmatprep.subr.mxu0 0.0
    %2601 = vmatpush1.msra.mxu0 0.0
    %2602 = vmatprep.subr.mxu0 0.0
    %2603 = vmatpush1.msra.mxu0 0.0
    %2604 = vmatprep.subr.mxu0 0.0
    %2605 = vmatpush1.msra.mxu0 0.0
    %2606 = vmatprep.subr.mxu0 0.0
    %2607 = vmatpush1.msra.mxu0 0.0
    %2608 = vmatprep.subr.mxu0 0.0
    %2609 = vmatpush1.msra.mxu0 0.0
    %2610 = vmatprep.subr.mxu0 0.0
    %2611 = vmatpush1.msra.mxu0 0.0
    %2612 = vmatprep.mubr.f32.mxu0 0.0
    %2613 = vmatmul.mubr.f32.gmra.mrb[0].mxu0 %v2262
    %v2614 = vpop.f32.mrb[0].mxu0
    %v2615 = vadd.f32 0.0, %v2614
    %v2616 = vpop.f32.mrb[0].mxu0
    %v2617 = vadd.f32 0.0, %v2616
    %2618 = vdwg.mxu0
    %2619 = vmatprep.subr.mxu0 %v2016
    %2620 = vmatpush1.msra.mxu0 %v2015
    %2621 = vmatprep.subr.mxu0 %v2048
    %2622 = vmatpush1.msra.mxu0 %v2047
    %2623 = vmatprep.subr.mxu0 %v2080
    %2624 = vmatpush1.msra.mxu0 %v2079
    %2625 = vmatprep.subr.mxu0 %v2112
    %2626 = vmatpush1.msra.mxu0 %v2111
    %2627 = vmatprep.subr.mxu0 %v2144
    %2628 = vmatpush1.msra.mxu0 %v2143
    %2629 = vmatprep.subr.mxu0 %v2176
    %2630 = vmatpush1.msra.mxu0 %v2175
    %2631 = vmatprep.subr.mxu0 %v2208
    %2632 = vmatpush1.msra.mxu0 %v2207
    %2633 = vmatprep.subr.mxu0 %v2240
    %2634 = vmatpush1.msra.mxu0 %v2239
    %2635 = vmatprep.subr.mxu0 0.0
    %2636 = vmatpush1.msra.mxu0 0.0
    %2637 = vmatprep.subr.mxu0 0.0
    %2638 = vmatpush1.msra.mxu0 0.0
    %2639 = vmatprep.subr.mxu0 0.0
    %2640 = vmatpush1.msra.mxu0 0.0
    %2641 = vmatprep.subr.mxu0 0.0
    %2642 = vmatpush1.msra.mxu0 0.0
    %2643 = vmatprep.subr.mxu0 0.0
    %2644 = vmatpush1.msra.mxu0 0.0
    %2645 = vmatprep.subr.mxu0 0.0
    %2646 = vmatpush1.msra.mxu0 0.0
    %2647 = vmatprep.subr.mxu0 0.0
    %2648 = vmatpush1.msra.mxu0 0.0
    %2649 = vmatprep.subr.mxu0 0.0
    %2650 = vmatpush1.msra.mxu0 0.0
    %2651 = vmatprep.subr.mxu0 0.0
    %2652 = vmatpush1.msra.mxu0 0.0
    %2653 = vmatprep.subr.mxu0 0.0
    %2654 = vmatpush1.msra.mxu0 0.0
    %2655 = vmatprep.subr.mxu0 0.0
    %2656 = vmatpush1.msra.mxu0 0.0
    %2657 = vmatprep.subr.mxu0 0.0
    %2658 = vmatpush1.msra.mxu0 0.0
    %2659 = vmatprep.subr.mxu0 0.0
    %2660 = vmatpush1.msra.mxu0 0.0
    %2661 = vmatprep.subr.mxu0 0.0
    %2662 = vmatpush1.msra.mxu0 0.0
    %2663 = vmatprep.subr.mxu0 0.0
    %2664 = vmatpush1.msra.mxu0 0.0
    %2665 = vmatprep.subr.mxu0 0.0
    %2666 = vmatpush1.msra.mxu0 0.0
    %2667 = vmatprep.subr.mxu0 0.0
    %2668 = vmatpush1.msra.mxu0 0.0
    %2669 = vmatprep.subr.mxu0 0.0
    %2670 = vmatpush1.msra.mxu0 0.0
    %2671 = vmatprep.subr.mxu0 0.0
    %2672 = vmatpush1.msra.mxu0 0.0
    %2673 = vmatprep.subr.mxu0 0.0
    %2674 = vmatpush1.msra.mxu0 0.0
    %2675 = vmatprep.subr.mxu0 0.0
    %2676 = vmatpush1.msra.mxu0 0.0
    %2677 = vmatprep.subr.mxu0 0.0
    %2678 = vmatpush1.msra.mxu0 0.0
    %2679 = vmatprep.subr.mxu0 0.0
    %2680 = vmatpush1.msra.mxu0 0.0
    %2681 = vmatprep.subr.mxu0 0.0
    %2682 = vmatpush1.msra.mxu0 0.0
    %2683 = vmatprep.mubr.f32.mxu0 0.0
    %2684 = vmatmul.mubr.f32.gmra.mrb[0].mxu0 %v2262
    %v2685 = vpop.f32.mrb[0].mxu0
    %v2686 = vadd.f32 0.0, %v2685
    %v2687 = vpop.f32.mrb[0].mxu0
    %v2688 = vadd.f32 0.0, %v2687
    %2689 = vdwg.mxu0
    %2690 = vmatprep.subr.mxu0 %v2018
    %2691 = vmatpush1.msra.mxu0 %v2017
    %2692 = vmatprep.subr.mxu0 %v2050
    %2693 = vmatpush1.msra.mxu0 %v2049
    %2694 = vmatprep.subr.mxu0 %v2082
    %2695 = vmatpush1.msra.mxu0 %v2081
    %2696 = vmatprep.subr.mxu0 %v2114
    %2697 = vmatpush1.msra.mxu0 %v2113
    %2698 = vmatprep.subr.mxu0 %v2146
    %2699 = vmatpush1.msra.mxu0 %v2145
    %2700 = vmatprep.subr.mxu0 %v2178
    %2701 = vmatpush1.msra.mxu0 %v2177
    %2702 = vmatprep.subr.mxu0 %v2210
    %2703 = vmatpush1.msra.mxu0 %v2209
    %2704 = vmatprep.subr.mxu0 %v2242
    %2705 = vmatpush1.msra.mxu0 %v2241
    %2706 = vmatprep.subr.mxu0 0.0
    %2707 = vmatpush1.msra.mxu0 0.0
    %2708 = vmatprep.subr.mxu0 0.0
    %2709 = vmatpush1.msra.mxu0 0.0
    %2710 = vmatprep.subr.mxu0 0.0
    %2711 = vmatpush1.msra.mxu0 0.0
    %2712 = vmatprep.subr.mxu0 0.0
    %2713 = vmatpush1.msra.mxu0 0.0
    %2714 = vmatprep.subr.mxu0 0.0
    %2715 = vmatpush1.msra.mxu0 0.0
    %2716 = vmatprep.subr.mxu0 0.0
    %2717 = vmatpush1.msra.mxu0 0.0
    %2718 = vmatprep.subr.mxu0 0.0
    %2719 = vmatpush1.msra.mxu0 0.0
    %2720 = vmatprep.subr.mxu0 0.0
    %2721 = vmatpush1.msra.mxu0 0.0
    %2722 = vmatprep.subr.mxu0 0.0
    %2723 = vmatpush1.msra.mxu0 0.0
    %2724 = vmatprep.subr.mxu0 0.0
    %2725 = vmatpush1.msra.mxu0 0.0
    %2726 = vmatprep.subr.mxu0 0.0
    %2727 = vmatpush1.msra.mxu0 0.0
    %2728 = vmatprep.subr.mxu0 0.0
    %2729 = vmatpush1.msra.mxu0 0.0
    %2730 = vmatprep.subr.mxu0 0.0
    %2731 = vmatpush1.msra.mxu0 0.0
    %2732 = vmatprep.subr.mxu0 0.0
    %2733 = vmatpush1.msra.mxu0 0.0
    %2734 = vmatprep.subr.mxu0 0.0
    %2735 = vmatpush1.msra.mxu0 0.0
    %2736 = vmatprep.subr.mxu0 0.0
    %2737 = vmatpush1.msra.mxu0 0.0
    %2738 = vmatprep.subr.mxu0 0.0
    %2739 = vmatpush1.msra.mxu0 0.0
    %2740 = vmatprep.subr.mxu0 0.0
    %2741 = vmatpush1.msra.mxu0 0.0
    %2742 = vmatprep.subr.mxu0 0.0
    %2743 = vmatpush1.msra.mxu0 0.0
    %2744 = vmatprep.subr.mxu0 0.0
    %2745 = vmatpush1.msra.mxu0 0.0
    %2746 = vmatprep.subr.mxu0 0.0
    %2747 = vmatpush1.msra.mxu0 0.0
    %2748 = vmatprep.subr.mxu0 0.0
    %2749 = vmatpush1.msra.mxu0 0.0
    %2750 = vmatprep.subr.mxu0 0.0
    %2751 = vmatpush1.msra.mxu0 0.0
    %2752 = vmatprep.subr.mxu0 0.0
    %2753 = vmatpush1.msra.mxu0 0.0
    %2754 = vmatprep.mubr.f32.mxu0 0.0
    %2755 = vmatmul.mubr.f32.gmra.mrb[0].mxu0 %v2262
    %v2756 = vpop.f32.mrb[0].mxu0
    %v2757 = vadd.f32 0.0, %v2756
    %v2758 = vpop.f32.mrb[0].mxu0
    %v2759 = vadd.f32 0.0, %v2758
    %2760 = vdwg.mxu0
    %2761 = vmatprep.subr.mxu0 %v2020
    %2762 = vmatpush1.msra.mxu0 %v2019
    %2763 = vmatprep.subr.mxu0 %v2052
    %2764 = vmatpush1.msra.mxu0 %v2051
    %2765 = vmatprep.subr.mxu0 %v2084
    %2766 = vmatpush1.msra.mxu0 %v2083
    %2767 = vmatprep.subr.mxu0 %v2116
    %2768 = vmatpush1.msra.mxu0 %v2115
    %2769 = vmatprep.subr.mxu0 %v2148
    %2770 = vmatpush1.msra.mxu0 %v2147
    %2771 = vmatprep.subr.mxu0 %v2180
    %2772 = vmatpush1.msra.mxu0 %v2179
    %2773 = vmatprep.subr.mxu0 %v2212
    %2774 = vmatpush1.msra.mxu0 %v2211
    %2775 = vmatprep.subr.mxu0 %v2244
    %2776 = vmatpush1.msra.mxu0 %v2243
    %2777 = vmatprep.subr.mxu0 0.0
    %2778 = vmatpush1.msra.mxu0 0.0
    %2779 = vmatprep.subr.mxu0 0.0
    %2780 = vmatpush1.msra.mxu0 0.0
    %2781 = vmatprep.subr.mxu0 0.0
    %2782 = vmatpush1.msra.mxu0 0.0
    %2783 = vmatprep.subr.mxu0 0.0
    %2784 = vmatpush1.msra.mxu0 0.0
    %2785 = vmatprep.subr.mxu0 0.0
    %2786 = vmatpush1.msra.mxu0 0.0
    %2787 = vmatprep.subr.mxu0 0.0
    %2788 = vmatpush1.msra.mxu0 0.0
    %2789 = vmatprep.subr.mxu0 0.0
    %2790 = vmatpush1.msra.mxu0 0.0
    %2791 = vmatprep.subr.mxu0 0.0
    %2792 = vmatpush1.msra.mxu0 0.0
    %2793 = vmatprep.subr.mxu0 0.0
    %2794 = vmatpush1.msra.mxu0 0.0
    %2795 = vmatprep.subr.mxu0 0.0
    %2796 = vmatpush1.msra.mxu0 0.0
    %2797 = vmatprep.subr.mxu0 0.0
    %2798 = vmatpush1.msra.mxu0 0.0
    %2799 = vmatprep.subr.mxu0 0.0
    %2800 = vmatpush1.msra.mxu0 0.0
    %2801 = vmatprep.subr.mxu0 0.0
    %2802 = vmatpush1.msra.mxu0 0.0
    %2803 = vmatprep.subr.mxu0 0.0
    %2804 = vmatpush1.msra.mxu0 0.0
    %2805 = vmatprep.subr.mxu0 0.0
    %2806 = vmatpush1.msra.mxu0 0.0
    %2807 = vmatprep.subr.mxu0 0.0
    %2808 = vmatpush1.msra.mxu0 0.0
    %2809 = vmatprep.subr.mxu0 0.0
    %2810 = vmatpush1.msra.mxu0 0.0
    %2811 = vmatprep.subr.mxu0 0.0
    %2812 = vmatpush1.msra.mxu0 0.0
    %2813 = vmatprep.subr.mxu0 0.0
    %2814 = vmatpush1.msra.mxu0 0.0
    %2815 = vmatprep.subr.mxu0 0.0
    %2816 = vmatpush1.msra.mxu0 0.0
    %2817 = vmatprep.subr.mxu0 0.0
    %2818 = vmatpush1.msra.mxu0 0.0
    %2819 = vmatprep.subr.mxu0 0.0
    %2820 = vmatpush1.msra.mxu0 0.0
    %2821 = vmatprep.subr.mxu0 0.0
    %2822 = vmatpush1.msra.mxu0 0.0
    %2823 = vmatprep.subr.mxu0 0.0
    %2824 = vmatpush1.msra.mxu0 0.0
    %2825 = vmatprep.mubr.f32.mxu0 0.0
    %2826 = vmatmul.mubr.f32.gmra.mrb[0].mxu0 %v2262
    %v2827 = vpop.f32.mrb[0].mxu0
    %v2828 = vadd.f32 0.0, %v2827
    %v2829 = vpop.f32.mrb[0].mxu0
    %v2830 = vadd.f32 0.0, %v2829
    %2831 = vdwg.mxu0
    %2832 = vmatprep.subr.mxu0 %v2022
    %2833 = vmatpush1.msra.mxu0 %v2021
    %2834 = vmatprep.subr.mxu0 %v2054
    %2835 = vmatpush1.msra.mxu0 %v2053
    %2836 = vmatprep.subr.mxu0 %v2086
    %2837 = vmatpush1.msra.mxu0 %v2085
    %2838 = vmatprep.subr.mxu0 %v2118
    %2839 = vmatpush1.msra.mxu0 %v2117
    %2840 = vmatprep.subr.mxu0 %v2150
    %2841 = vmatpush1.msra.mxu0 %v2149
    %2842 = vmatprep.subr.mxu0 %v2182
    %2843 = vmatpush1.msra.mxu0 %v2181
    %2844 = vmatprep.subr.mxu0 %v2214
    %2845 = vmatpush1.msra.mxu0 %v2213
    %2846 = vmatprep.subr.mxu0 %v2246
    %2847 = vmatpush1.msra.mxu0 %v2245
    %2848 = vmatprep.subr.mxu0 0.0
    %2849 = vmatpush1.msra.mxu0 0.0
    %2850 = vmatprep.subr.mxu0 0.0
    %2851 = vmatpush1.msra.mxu0 0.0
    %2852 = vmatprep.subr.mxu0 0.0
    %2853 = vmatpush1.msra.mxu0 0.0
    %2854 = vmatprep.subr.mxu0 0.0
    %2855 = vmatpush1.msra.mxu0 0.0
    %2856 = vmatprep.subr.mxu0 0.0
    %2857 = vmatpush1.msra.mxu0 0.0
    %2858 = vmatprep.subr.mxu0 0.0
    %2859 = vmatpush1.msra.mxu0 0.0
    %2860 = vmatprep.subr.mxu0 0.0
    %2861 = vmatpush1.msra.mxu0 0.0
    %2862 = vmatprep.subr.mxu0 0.0
    %2863 = vmatpush1.msra.mxu0 0.0
    %2864 = vmatprep.subr.mxu0 0.0
    %2865 = vmatpush1.msra.mxu0 0.0
    %2866 = vmatprep.subr.mxu0 0.0
    %2867 = vmatpush1.msra.mxu0 0.0
    %2868 = vmatprep.subr.mxu0 0.0
    %2869 = vmatpush1.msra.mxu0 0.0
    %2870 = vmatprep.subr.mxu0 0.0
    %2871 = vmatpush1.msra.mxu0 0.0
    %2872 = vmatprep.subr.mxu0 0.0
    %2873 = vmatpush1.msra.mxu0 0.0
    %2874 = vmatprep.subr.mxu0 0.0
    %2875 = vmatpush1.msra.mxu0 0.0
    %2876 = vmatprep.subr.mxu0 0.0
    %2877 = vmatpush1.msra.mxu0 0.0
    %2878 = vmatprep.subr.mxu0 0.0
    %2879 = vmatpush1.msra.mxu0 0.0
    %2880 = vmatprep.subr.mxu0 0.0
    %2881 = vmatpush1.msra.mxu0 0.0
    %2882 = vmatprep.subr.mxu0 0.0
    %2883 = vmatpush1.msra.mxu0 0.0
    %2884 = vmatprep.subr.mxu0 0.0
    %2885 = vmatpush1.msra.mxu0 0.0
    %2886 = vmatprep.subr.mxu0 0.0
    %2887 = vmatpush1.msra.mxu0 0.0
    %2888 = vmatprep.subr.mxu0 0.0
    %2889 = vmatpush1.msra.mxu0 0.0
    %2890 = vmatprep.subr.mxu0 0.0
    %2891 = vmatpush1.msra.mxu0 0.0
    %2892 = vmatprep.subr.mxu0 0.0
    %2893 = vmatpush1.msra.mxu0 0.0
    %2894 = vmatprep.subr.mxu0 0.0
    %2895 = vmatpush1.msra.mxu0 0.0
    %2896 = vmatprep.mubr.f32.mxu0 0.0
    %2897 = vmatmul.mubr.f32.gmra.mrb[0].mxu0 %v2262
    %v2898 = vpop.f32.mrb[0].mxu0
    %v2899 = vadd.f32 0.0, %v2898
    %v2900 = vpop.f32.mrb[0].mxu0
    %v2901 = vadd.f32 0.0, %v2900
    %2902 = vdwg.mxu0
    %2903 = vmatprep.subr.mxu0 %v2024
    %2904 = vmatpush1.msra.mxu0 %v2023
    %2905 = vmatprep.subr.mxu0 %v2056
    %2906 = vmatpush1.msra.mxu0 %v2055
    %2907 = vmatprep.subr.mxu0 %v2088
    %2908 = vmatpush1.msra.mxu0 %v2087
    %2909 = vmatprep.subr.mxu0 %v2120
    %2910 = vmatpush1.msra.mxu0 %v2119
    %2911 = vmatprep.subr.mxu0 %v2152
    %2912 = vmatpush1.msra.mxu0 %v2151
    %2913 = vmatprep.subr.mxu0 %v2184
    %2914 = vmatpush1.msra.mxu0 %v2183
    %2915 = vmatprep.subr.mxu0 %v2216
    %2916 = vmatpush1.msra.mxu0 %v2215
    %2917 = vmatprep.subr.mxu0 %v2248
    %2918 = vmatpush1.msra.mxu0 %v2247
    %2919 = vmatprep.subr.mxu0 0.0
    %2920 = vmatpush1.msra.mxu0 0.0
    %2921 = vmatprep.subr.mxu0 0.0
    %2922 = vmatpush1.msra.mxu0 0.0
    %2923 = vmatprep.subr.mxu0 0.0
    %2924 = vmatpush1.msra.mxu0 0.0
    %2925 = vmatprep.subr.mxu0 0.0
    %2926 = vmatpush1.msra.mxu0 0.0
    %2927 = vmatprep.subr.mxu0 0.0
    %2928 = vmatpush1.msra.mxu0 0.0
    %2929 = vmatprep.subr.mxu0 0.0
    %2930 = vmatpush1.msra.mxu0 0.0
    %2931 = vmatprep.subr.mxu0 0.0
    %2932 = vmatpush1.msra.mxu0 0.0
    %2933 = vmatprep.subr.mxu0 0.0
    %2934 = vmatpush1.msra.mxu0 0.0
    %2935 = vmatprep.subr.mxu0 0.0
    %2936 = vmatpush1.msra.mxu0 0.0
    %2937 = vmatprep.subr.mxu0 0.0
    %2938 = vmatpush1.msra.mxu0 0.0
    %2939 = vmatprep.subr.mxu0 0.0
    %2940 = vmatpush1.msra.mxu0 0.0
    %2941 = vmatprep.subr.mxu0 0.0
    %2942 = vmatpush1.msra.mxu0 0.0
    %2943 = vmatprep.subr.mxu0 0.0
    %2944 = vmatpush1.msra.mxu0 0.0
    %2945 = vmatprep.subr.mxu0 0.0
    %2946 = vmatpush1.msra.mxu0 0.0
    %2947 = vmatprep.subr.mxu0 0.0
    %2948 = vmatpush1.msra.mxu0 0.0
    %2949 = vmatprep.subr.mxu0 0.0
    %2950 = vmatpush1.msra.mxu0 0.0
    %2951 = vmatprep.subr.mxu0 0.0
    %2952 = vmatpush1.msra.mxu0 0.0
    %2953 = vmatprep.subr.mxu0 0.0
    %2954 = vmatpush1.msra.mxu0 0.0
    %2955 = vmatprep.subr.mxu0 0.0
    %2956 = vmatpush1.msra.mxu0 0.0
    %2957 = vmatprep.subr.mxu0 0.0
    %2958 = vmatpush1.msra.mxu0 0.0
    %2959 = vmatprep.subr.mxu0 0.0
    %2960 = vmatpush1.msra.mxu0 0.0
    %2961 = vmatprep.subr.mxu0 0.0
    %2962 = vmatpush1.msra.mxu0 0.0
    %2963 = vmatprep.subr.mxu0 0.0
    %2964 = vmatpush1.msra.mxu0 0.0
    %2965 = vmatprep.subr.mxu0 0.0
    %2966 = vmatpush1.msra.mxu0 0.0
    %2967 = vmatprep.mubr.f32.mxu0 0.0
    %2968 = vmatmul.mubr.f32.gmra.mrb[0].mxu0 %v2262
    %v2969 = vpop.f32.mrb[0].mxu0
    %v2970 = vadd.f32 0.0, %v2969
    %v2971 = vpop.f32.mrb[0].mxu0
    %v2972 = vadd.f32 0.0, %v2971
    %2973 = vdwg.mxu0
    %2974 = vmatprep.subr.mxu0 %v2026
    %2975 = vmatpush1.msra.mxu0 %v2025
    %2976 = vmatprep.subr.mxu0 %v2058
    %2977 = vmatpush1.msra.mxu0 %v2057
    %2978 = vmatprep.subr.mxu0 %v2090
    %2979 = vmatpush1.msra.mxu0 %v2089
    %2980 = vmatprep.subr.mxu0 %v2122
    %2981 = vmatpush1.msra.mxu0 %v2121
    %2982 = vmatprep.subr.mxu0 %v2154
    %2983 = vmatpush1.msra.mxu0 %v2153
    %2984 = vmatprep.subr.mxu0 %v2186
    %2985 = vmatpush1.msra.mxu0 %v2185
    %2986 = vmatprep.subr.mxu0 %v2218
    %2987 = vmatpush1.msra.mxu0 %v2217
    %2988 = vmatprep.subr.mxu0 %v2250
    %2989 = vmatpush1.msra.mxu0 %v2249
    %2990 = vmatprep.subr.mxu0 0.0
    %2991 = vmatpush1.msra.mxu0 0.0
    %2992 = vmatprep.subr.mxu0 0.0
    %2993 = vmatpush1.msra.mxu0 0.0
    %2994 = vmatprep.subr.mxu0 0.0
    %2995 = vmatpush1.msra.mxu0 0.0
    %2996 = vmatprep.subr.mxu0 0.0
    %2997 = vmatpush1.msra.mxu0 0.0
    %2998 = vmatprep.subr.mxu0 0.0
    %2999 = vmatpush1.msra.mxu0 0.0
    %3000 = vmatprep.subr.mxu0 0.0
    %3001 = vmatpush1.msra.mxu0 0.0
    %3002 = vmatprep.subr.mxu0 0.0
    %3003 = vmatpush1.msra.mxu0 0.0
    %3004 = vmatprep.subr.mxu0 0.0
    %3005 = vmatpush1.msra.mxu0 0.0
    %3006 = vmatprep.subr.mxu0 0.0
    %3007 = vmatpush1.msra.mxu0 0.0
    %3008 = vmatprep.subr.mxu0 0.0
    %3009 = vmatpush1.msra.mxu0 0.0
    %3010 = vmatprep.subr.mxu0 0.0
    %3011 = vmatpush1.msra.mxu0 0.0
    %3012 = vmatprep.subr.mxu0 0.0
    %3013 = vmatpush1.msra.mxu0 0.0
    %3014 = vmatprep.subr.mxu0 0.0
    %3015 = vmatpush1.msra.mxu0 0.0
    %3016 = vmatprep.subr.mxu0 0.0
    %3017 = vmatpush1.msra.mxu0 0.0
    %3018 = vmatprep.subr.mxu0 0.0
    %3019 = vmatpush1.msra.mxu0 0.0
    %3020 = vmatprep.subr.mxu0 0.0
    %3021 = vmatpush1.msra.mxu0 0.0
    %3022 = vmatprep.subr.mxu0 0.0
    %3023 = vmatpush1.msra.mxu0 0.0
    %3024 = vmatprep.subr.mxu0 0.0
    %3025 = vmatpush1.msra.mxu0 0.0
    %3026 = vmatprep.subr.mxu0 0.0
    %3027 = vmatpush1.msra.mxu0 0.0
    %3028 = vmatprep.subr.mxu0 0.0
    %3029 = vmatpush1.msra.mxu0 0.0
    %3030 = vmatprep.subr.mxu0 0.0
    %3031 = vmatpush1.msra.mxu0 0.0
    %3032 = vmatprep.subr.mxu0 0.0
    %3033 = vmatpush1.msra.mxu0 0.0
    %3034 = vmatprep.subr.mxu0 0.0
    %3035 = vmatpush1.msra.mxu0 0.0
    %3036 = vmatprep.subr.mxu0 0.0
    %3037 = vmatpush1.msra.mxu0 0.0
    %3038 = vmatprep.mubr.f32.mxu0 0.0
    %3039 = vmatmul.mubr.f32.gmra.mrb[0].mxu0 %v2262
    %v3040 = vpop.f32.mrb[0].mxu0
    %v3041 = vadd.f32 0.0, %v3040
    %v3042 = vpop.f32.mrb[0].mxu0
    %v3043 = vadd.f32 0.0, %v3042
    %3044 = vdwg.mxu0
    %3045 = vmatprep.subr.mxu0 %v2028
    %3046 = vmatpush1.msra.mxu0 %v2027
    %3047 = vmatprep.subr.mxu0 %v2060
    %3048 = vmatpush1.msra.mxu0 %v2059
    %3049 = vmatprep.subr.mxu0 %v2092
    %3050 = vmatpush1.msra.mxu0 %v2091
    %3051 = vmatprep.subr.mxu0 %v2124
    %3052 = vmatpush1.msra.mxu0 %v2123
    %3053 = vmatprep.subr.mxu0 %v2156
    %3054 = vmatpush1.msra.mxu0 %v2155
    %3055 = vmatprep.subr.mxu0 %v2188
    %3056 = vmatpush1.msra.mxu0 %v2187
    %3057 = vmatprep.subr.mxu0 %v2220
    %3058 = vmatpush1.msra.mxu0 %v2219
    %3059 = vmatprep.subr.mxu0 %v2252
    %3060 = vmatpush1.msra.mxu0 %v2251
    %3061 = vmatprep.subr.mxu0 0.0
    %3062 = vmatpush1.msra.mxu0 0.0
    %3063 = vmatprep.subr.mxu0 0.0
    %3064 = vmatpush1.msra.mxu0 0.0
    %3065 = vmatprep.subr.mxu0 0.0
    %3066 = vmatpush1.msra.mxu0 0.0
    %3067 = vmatprep.subr.mxu0 0.0
    %3068 = vmatpush1.msra.mxu0 0.0
    %3069 = vmatprep.subr.mxu0 0.0
    %3070 = vmatpush1.msra.mxu0 0.0
    %3071 = vmatprep.subr.mxu0 0.0
    %3072 = vmatpush1.msra.mxu0 0.0
    %3073 = vmatprep.subr.mxu0 0.0
    %3074 = vmatpush1.msra.mxu0 0.0
    %3075 = vmatprep.subr.mxu0 0.0
    %3076 = vmatpush1.msra.mxu0 0.0
    %3077 = vmatprep.subr.mxu0 0.0
    %3078 = vmatpush1.msra.mxu0 0.0
    %3079 = vmatprep.subr.mxu0 0.0
    %3080 = vmatpush1.msra.mxu0 0.0
    %3081 = vmatprep.subr.mxu0 0.0
    %3082 = vmatpush1.msra.mxu0 0.0
    %3083 = vmatprep.subr.mxu0 0.0
    %3084 = vmatpush1.msra.mxu0 0.0
    %3085 = vmatprep.subr.mxu0 0.0
    %3086 = vmatpush1.msra.mxu0 0.0
    %3087 = vmatprep.subr.mxu0 0.0
    %3088 = vmatpush1.msra.mxu0 0.0
    %3089 = vmatprep.subr.mxu0 0.0
    %3090 = vmatpush1.msra.mxu0 0.0
    %3091 = vmatprep.subr.mxu0 0.0
    %3092 = vmatpush1.msra.mxu0 0.0
    %3093 = vmatprep.subr.mxu0 0.0
    %3094 = vmatpush1.msra.mxu0 0.0
    %3095 = vmatprep.subr.mxu0 0.0
    %3096 = vmatpush1.msra.mxu0 0.0
    %3097 = vmatprep.subr.mxu0 0.0
    %3098 = vmatpush1.msra.mxu0 0.0
    %3099 = vmatprep.subr.mxu0 0.0
    %3100 = vmatpush1.msra.mxu0 0.0
    %3101 = vmatprep.subr.mxu0 0.0
    %3102 = vmatpush1.msra.mxu0 0.0
    %3103 = vmatprep.subr.mxu0 0.0
    %3104 = vmatpush1.msra.mxu0 0.0
    %3105 = vmatprep.subr.mxu0 0.0
    %3106 = vmatpush1.msra.mxu0 0.0
    %3107 = vmatprep.subr.mxu0 0.0
    %3108 = vmatpush1.msra.mxu0 0.0
    %3109 = vmatprep.mubr.f32.mxu0 0.0
    %3110 = vmatmul.mubr.f32.gmra.mrb[0].mxu0 %v2262
    %v3111 = vpop.f32.mrb[0].mxu0
    %v3112 = vadd.f32 0.0, %v3111
    %v3113 = vpop.f32.mrb[0].mxu0
    %v3114 = vadd.f32 0.0, %v3113
    %3115 = vdwg.mxu0
    %3116 = vmatprep.subr.mxu0 %v2030
    %3117 = vmatpush1.msra.mxu0 %v2029
    %3118 = vmatprep.subr.mxu0 %v2062
    %3119 = vmatpush1.msra.mxu0 %v2061
    %3120 = vmatprep.subr.mxu0 %v2094
    %3121 = vmatpush1.msra.mxu0 %v2093
    %3122 = vmatprep.subr.mxu0 %v2126
    %3123 = vmatpush1.msra.mxu0 %v2125
    %3124 = vmatprep.subr.mxu0 %v2158
    %3125 = vmatpush1.msra.mxu0 %v2157
    %3126 = vmatprep.subr.mxu0 %v2190
    %3127 = vmatpush1.msra.mxu0 %v2189
    %3128 = vmatprep.subr.mxu0 %v2222
    %3129 = vmatpush1.msra.mxu0 %v2221
    %3130 = vmatprep.subr.mxu0 %v2254
    %3131 = vmatpush1.msra.mxu0 %v2253
    %3132 = vmatprep.subr.mxu0 0.0
    %3133 = vmatpush1.msra.mxu0 0.0
    %3134 = vmatprep.subr.mxu0 0.0
    %3135 = vmatpush1.msra.mxu0 0.0
    %3136 = vmatprep.subr.mxu0 0.0
    %3137 = vmatpush1.msra.mxu0 0.0
    %3138 = vmatprep.subr.mxu0 0.0
    %3139 = vmatpush1.msra.mxu0 0.0
    %3140 = vmatprep.subr.mxu0 0.0
    %3141 = vmatpush1.msra.mxu0 0.0
    %3142 = vmatprep.subr.mxu0 0.0
    %3143 = vmatpush1.msra.mxu0 0.0
    %3144 = vmatprep.subr.mxu0 0.0
    %3145 = vmatpush1.msra.mxu0 0.0
    %3146 = vmatprep.subr.mxu0 0.0
    %3147 = vmatpush1.msra.mxu0 0.0
    %3148 = vmatprep.subr.mxu0 0.0
    %3149 = vmatpush1.msra.mxu0 0.0
    %3150 = vmatprep.subr.mxu0 0.0
    %3151 = vmatpush1.msra.mxu0 0.0
    %3152 = vmatprep.subr.mxu0 0.0
    %3153 = vmatpush1.msra.mxu0 0.0
    %3154 = vmatprep.subr.mxu0 0.0
    %3155 = vmatpush1.msra.mxu0 0.0
    %3156 = vmatprep.subr.mxu0 0.0
    %3157 = vmatpush1.msra.mxu0 0.0
    %3158 = vmatprep.subr.mxu0 0.0
    %3159 = vmatpush1.msra.mxu0 0.0
    %3160 = vmatprep.subr.mxu0 0.0
    %3161 = vmatpush1.msra.mxu0 0.0
    %3162 = vmatprep.subr.mxu0 0.0
    %3163 = vmatpush1.msra.mxu0 0.0
    %3164 = vmatprep.subr.mxu0 0.0
    %3165 = vmatpush1.msra.mxu0 0.0
    %3166 = vmatprep.subr.mxu0 0.0
    %3167 = vmatpush1.msra.mxu0 0.0
    %3168 = vmatprep.subr.mxu0 0.0
    %3169 = vmatpush1.msra.mxu0 0.0
    %3170 = vmatprep.subr.mxu0 0.0
    %3171 = vmatpush1.msra.mxu0 0.0
    %3172 = vmatprep.subr.mxu0 0.0
    %3173 = vmatpush1.msra.mxu0 0.0
    %3174 = vmatprep.subr.mxu0 0.0
    %3175 = vmatpush1.msra.mxu0 0.0
    %3176 = vmatprep.subr.mxu0 0.0
    %3177 = vmatpush1.msra.mxu0 0.0
    %3178 = vmatprep.subr.mxu0 0.0
    %3179 = vmatpush1.msra.mxu0 0.0
    %3180 = vmatprep.mubr.f32.mxu0 0.0
    %3181 = vmatmul.mubr.f32.gmra.mrb[0].mxu0 %v2262
    %v3182 = vpop.f32.mrb[0].mxu0
    %v3183 = vadd.f32 0.0, %v3182
    %v3184 = vpop.f32.mrb[0].mxu0
    %v3185 = vadd.f32 0.0, %v3184
    %3186 = vdwg.mxu0
    %3187 = vmatprep.subr.mxu0 %v2032
    %3188 = vmatpush1.msra.mxu0 %v2031
    %3189 = vmatprep.subr.mxu0 %v2064
    %3190 = vmatpush1.msra.mxu0 %v2063
    %3191 = vmatprep.subr.mxu0 %v2096
    %3192 = vmatpush1.msra.mxu0 %v2095
    %3193 = vmatprep.subr.mxu0 %v2128
    %3194 = vmatpush1.msra.mxu0 %v2127
    %3195 = vmatprep.subr.mxu0 %v2160
    %3196 = vmatpush1.msra.mxu0 %v2159
    %3197 = vmatprep.subr.mxu0 %v2192
    %3198 = vmatpush1.msra.mxu0 %v2191
    %3199 = vmatprep.subr.mxu0 %v2224
    %3200 = vmatpush1.msra.mxu0 %v2223
    %3201 = vmatprep.subr.mxu0 %v2256
    %3202 = vmatpush1.msra.mxu0 %v2255
    %3203 = vmatprep.subr.mxu0 0.0
    %3204 = vmatpush1.msra.mxu0 0.0
    %3205 = vmatprep.subr.mxu0 0.0
    %3206 = vmatpush1.msra.mxu0 0.0
    %3207 = vmatprep.subr.mxu0 0.0
    %3208 = vmatpush1.msra.mxu0 0.0
    %3209 = vmatprep.subr.mxu0 0.0
    %3210 = vmatpush1.msra.mxu0 0.0
    %3211 = vmatprep.subr.mxu0 0.0
    %3212 = vmatpush1.msra.mxu0 0.0
    %3213 = vmatprep.subr.mxu0 0.0
    %3214 = vmatpush1.msra.mxu0 0.0
    %3215 = vmatprep.subr.mxu0 0.0
    %3216 = vmatpush1.msra.mxu0 0.0
    %3217 = vmatprep.subr.mxu0 0.0
    %3218 = vmatpush1.msra.mxu0 0.0
    %3219 = vmatprep.subr.mxu0 0.0
    %3220 = vmatpush1.msra.mxu0 0.0
    %3221 = vmatprep.subr.mxu0 0.0
    %3222 = vmatpush1.msra.mxu0 0.0
    %3223 = vmatprep.subr.mxu0 0.0
    %3224 = vmatpush1.msra.mxu0 0.0
    %3225 = vmatprep.subr.mxu0 0.0
    %3226 = vmatpush1.msra.mxu0 0.0
    %3227 = vmatprep.subr.mxu0 0.0
    %3228 = vmatpush1.msra.mxu0 0.0
    %3229 = vmatprep.subr.mxu0 0.0
    %3230 = vmatpush1.msra.mxu0 0.0
    %3231 = vmatprep.subr.mxu0 0.0
    %3232 = vmatpush1.msra.mxu0 0.0
    %3233 = vmatprep.subr.mxu0 0.0
    %3234 = vmatpush1.msra.mxu0 0.0
    %3235 = vmatprep.subr.mxu0 0.0
    %3236 = vmatpush1.msra.mxu0 0.0
    %3237 = vmatprep.subr.mxu0 0.0
    %3238 = vmatpush1.msra.mxu0 0.0
    %3239 = vmatprep.subr.mxu0 0.0
    %3240 = vmatpush1.msra.mxu0 0.0
    %3241 = vmatprep.subr.mxu0 0.0
    %3242 = vmatpush1.msra.mxu0 0.0
    %3243 = vmatprep.subr.mxu0 0.0
    %3244 = vmatpush1.msra.mxu0 0.0
    %3245 = vmatprep.subr.mxu0 0.0
    %3246 = vmatpush1.msra.mxu0 0.0
    %3247 = vmatprep.subr.mxu0 0.0
    %3248 = vmatpush1.msra.mxu0 0.0
    %3249 = vmatprep.subr.mxu0 0.0
    %3250 = vmatpush1.msra.mxu0 0.0
    %3251 = vmatprep.mubr.f32.mxu0 0.0
    %3252 = vmatmul.mubr.f32.gmra.mrb[0].mxu0 %v2262
    %v3253 = vpop.f32.mrb[0].mxu0
    %v3254 = vadd.f32 0.0, %v3253
    %v3255 = vpop.f32.mrb[0].mxu0
    %v3256 = vadd.f32 0.0, %v3255
    %3257 = vdwg.mxu0
    %3258 = vmatprep.subr.mxu0 %v2034
    %3259 = vmatpush1.msra.mxu0 %v2033
    %3260 = vmatprep.subr.mxu0 %v2066
    %3261 = vmatpush1.msra.mxu0 %v2065
    %3262 = vmatprep.subr.mxu0 %v2098
    %3263 = vmatpush1.msra.mxu0 %v2097
    %3264 = vmatprep.subr.mxu0 %v2130
    %3265 = vmatpush1.msra.mxu0 %v2129
    %3266 = vmatprep.subr.mxu0 %v2162
    %3267 = vmatpush1.msra.mxu0 %v2161
    %3268 = vmatprep.subr.mxu0 %v2194
    %3269 = vmatpush1.msra.mxu0 %v2193
    %3270 = vmatprep.subr.mxu0 %v2226
    %3271 = vmatpush1.msra.mxu0 %v2225
    %3272 = vmatprep.subr.mxu0 %v2258
    %3273 = vmatpush1.msra.mxu0 %v2257
    %3274 = vmatprep.subr.mxu0 0.0
    %3275 = vmatpush1.msra.mxu0 0.0
    %3276 = vmatprep.subr.mxu0 0.0
    %3277 = vmatpush1.msra.mxu0 0.0
    %3278 = vmatprep.subr.mxu0 0.0
    %3279 = vmatpush1.msra.mxu0 0.0
    %3280 = vmatprep.subr.mxu0 0.0
    %3281 = vmatpush1.msra.mxu0 0.0
    %3282 = vmatprep.subr.mxu0 0.0
    %3283 = vmatpush1.msra.mxu0 0.0
    %3284 = vmatprep.subr.mxu0 0.0
    %3285 = vmatpush1.msra.mxu0 0.0
    %3286 = vmatprep.subr.mxu0 0.0
    %3287 = vmatpush1.msra.mxu0 0.0
    %3288 = vmatprep.subr.mxu0 0.0
    %3289 = vmatpush1.msra.mxu0 0.0
    %3290 = vmatprep.subr.mxu0 0.0
    %3291 = vmatpush1.msra.mxu0 0.0
    %3292 = vmatprep.subr.mxu0 0.0
    %3293 = vmatpush1.msra.mxu0 0.0
    %3294 = vmatprep.subr.mxu0 0.0
    %3295 = vmatpush1.msra.mxu0 0.0
    %3296 = vmatprep.subr.mxu0 0.0
    %3297 = vmatpush1.msra.mxu0 0.0
    %3298 = vmatprep.subr.mxu0 0.0
    %3299 = vmatpush1.msra.mxu0 0.0
    %3300 = vmatprep.subr.mxu0 0.0
    %3301 = vmatpush1.msra.mxu0 0.0
    %3302 = vmatprep.subr.mxu0 0.0
    %3303 = vmatpush1.msra.mxu0 0.0
    %3304 = vmatprep.subr.mxu0 0.0
    %3305 = vmatpush1.msra.mxu0 0.0
    %3306 = vmatprep.subr.mxu0 0.0
    %3307 = vmatpush1.msra.mxu0 0.0
    %3308 = vmatprep.subr.mxu0 0.0
    %3309 = vmatpush1.msra.mxu0 0.0
    %3310 = vmatprep.subr.mxu0 0.0
    %3311 = vmatpush1.msra.mxu0 0.0
    %3312 = vmatprep.subr.mxu0 0.0
    %3313 = vmatpush1.msra.mxu0 0.0
    %3314 = vmatprep.subr.mxu0 0.0
    %3315 = vmatpush1.msra.mxu0 0.0
    %3316 = vmatprep.subr.mxu0 0.0
    %3317 = vmatpush1.msra.mxu0 0.0
    %3318 = vmatprep.subr.mxu0 0.0
    %3319 = vmatpush1.msra.mxu0 0.0
    %3320 = vmatprep.subr.mxu0 0.0
    %3321 = vmatpush1.msra.mxu0 0.0
    %3322 = vmatprep.mubr.f32.mxu0 0.0
    %3323 = vmatmul.mubr.f32.gmra.mrb[0].mxu0 %v2262
    %v3324 = vpop.f32.mrb[0].mxu0
    %v3325 = vadd.f32 0.0, %v3324
    %v3326 = vpop.f32.mrb[0].mxu0
    %v3327 = vadd.f32 0.0, %v3326
    %3328 = vdwg.mxu0
    %3329 = vmatprep.subr.mxu0 %v2036
    %3330 = vmatpush1.msra.mxu0 %v2035
    %3331 = vmatprep.subr.mxu0 %v2068
    %3332 = vmatpush1.msra.mxu0 %v2067
    %3333 = vmatprep.subr.mxu0 %v2100
    %3334 = vmatpush1.msra.mxu0 %v2099
    %3335 = vmatprep.subr.mxu0 %v2132
    %3336 = vmatpush1.msra.mxu0 %v2131
    %3337 = vmatprep.subr.mxu0 %v2164
    %3338 = vmatpush1.msra.mxu0 %v2163
    %3339 = vmatprep.subr.mxu0 %v2196
    %3340 = vmatpush1.msra.mxu0 %v2195
    %3341 = vmatprep.subr.mxu0 %v2228
    %3342 = vmatpush1.msra.mxu0 %v2227
    %3343 = vmatprep.subr.mxu0 %v2260
    %3344 = vmatpush1.msra.mxu0 %v2259
    %3345 = vmatprep.subr.mxu0 0.0
    %3346 = vmatpush1.msra.mxu0 0.0
    %3347 = vmatprep.subr.mxu0 0.0
    %3348 = vmatpush1.msra.mxu0 0.0
    %3349 = vmatprep.subr.mxu0 0.0
    %3350 = vmatpush1.msra.mxu0 0.0
    %3351 = vmatprep.subr.mxu0 0.0
    %3352 = vmatpush1.msra.mxu0 0.0
    %3353 = vmatprep.subr.mxu0 0.0
    %3354 = vmatpush1.msra.mxu0 0.0
    %3355 = vmatprep.subr.mxu0 0.0
    %3356 = vmatpush1.msra.mxu0 0.0
    %3357 = vmatprep.subr.mxu0 0.0
    %3358 = vmatpush1.msra.mxu0 0.0
    %3359 = vmatprep.subr.mxu0 0.0
    %3360 = vmatpush1.msra.mxu0 0.0
    %3361 = vmatprep.subr.mxu0 0.0
    %3362 = vmatpush1.msra.mxu0 0.0
    %3363 = vmatprep.subr.mxu0 0.0
    %3364 = vmatpush1.msra.mxu0 0.0
    %3365 = vmatprep.subr.mxu0 0.0
    %3366 = vmatpush1.msra.mxu0 0.0
    %3367 = vmatprep.subr.mxu0 0.0
    %3368 = vmatpush1.msra.mxu0 0.0
    %3369 = vmatprep.subr.mxu0 0.0
    %3370 = vmatpush1.msra.mxu0 0.0
    %3371 = vmatprep.subr.mxu0 0.0
    %3372 = vmatpush1.msra.mxu0 0.0
    %3373 = vmatprep.subr.mxu0 0.0
    %3374 = vmatpush1.msra.mxu0 0.0
    %3375 = vmatprep.subr.mxu0 0.0
    %3376 = vmatpush1.msra.mxu0 0.0
    %3377 = vmatprep.subr.mxu0 0.0
    %3378 = vmatpush1.msra.mxu0 0.0
    %3379 = vmatprep.subr.mxu0 0.0
    %3380 = vmatpush1.msra.mxu0 0.0
    %3381 = vmatprep.subr.mxu0 0.0
    %3382 = vmatpush1.msra.mxu0 0.0
    %3383 = vmatprep.subr.mxu0 0.0
    %3384 = vmatpush1.msra.mxu0 0.0
    %3385 = vmatprep.subr.mxu0 0.0
    %3386 = vmatpush1.msra.mxu0 0.0
    %3387 = vmatprep.subr.mxu0 0.0
    %3388 = vmatpush1.msra.mxu0 0.0
    %3389 = vmatprep.subr.mxu0 0.0
    %3390 = vmatpush1.msra.mxu0 0.0
    %3391 = vmatprep.subr.mxu0 0.0
    %3392 = vmatpush1.msra.mxu0 0.0
    %3393 = vmatprep.mubr.f32.mxu0 0.0
    %3394 = vmatmul.mubr.f32.gmra.mrb[0].mxu0 %v2262
    %v3395 = vpop.f32.mrb[0].mxu0
    %v3396 = vadd.f32 0.0, %v3395
    %v3397 = vpop.f32.mrb[0].mxu0
    %v3398 = vadd.f32 0.0, %v3397
    %3399 = vdwg.mxu0
    %v3432 = vcombine.low %v2331, %v2333
    %v3433 = vcombine.low %v2402, %v2404
    %v3435 = vunpack.c.l.s4 1983009808
    %v3436 = vunpack.c.0.s8 %v3435
    %v3437 = vlaneseq
    %v3438 = vshrl.u32 %v3437, 7
    %v3439 = vsub.s32 %v3436, %v3438
    %v3440 = vrot.slane %v3432, %v3439
    %v3442 = vunpack.c.l.s4 1983009808
    %v3443 = vunpack.c.0.s8 %v3442
    %v3444 = vlaneseq
    %v3445 = vshrl.u32 %v3444, 7
    %v3446 = vsub.s32 %v3443, %v3445
    %v3447 = vrot.slane %v3433, %v3446
    %v3448 = vcombine.low %v3440, %v3447
    %v3449 = vcombine.low %v2473, %v2475
    %v3450 = vcombine.low %v2544, %v2546
    %v3452 = vunpack.c.l.s4 1983009808
    %v3453 = vunpack.c.0.s8 %v3452
    %v3454 = vlaneseq
    %v3455 = vshrl.u32 %v3454, 7
    %v3456 = vsub.s32 %v3453, %v3455
    %v3457 = vrot.slane %v3449, %v3456
    %v3459 = vunpack.c.l.s4 1983009808
    %v3460 = vunpack.c.0.s8 %v3459
    %v3461 = vlaneseq
    %v3462 = vshrl.u32 %v3461, 7
    %v3463 = vsub.s32 %v3460, %v3462
    %v3464 = vrot.slane %v3450, %v3463
    %v3465 = vcombine.low %v3457, %v3464
    %v3466 = vcombine.low %v2615, %v2617
    %v3467 = vcombine.low %v2686, %v2688
    %v3469 = vunpack.c.l.s4 1983009808
    %v3470 = vunpack.c.0.s8 %v3469
    %v3471 = vlaneseq
    %v3472 = vshrl.u32 %v3471, 7
    %v3473 = vsub.s32 %v3470, %v3472
    %v3474 = vrot.slane %v3466, %v3473
    %v3476 = vunpack.c.l.s4 1983009808
    %v3477 = vunpack.c.0.s8 %v3476
    %v3478 = vlaneseq
    %v3479 = vshrl.u32 %v3478, 7
    %v3480 = vsub.s32 %v3477, %v3479
    %v3481 = vrot.slane %v3467, %v3480
    %v3482 = vcombine.low %v3474, %v3481
    %v3483 = vcombine.low %v2757, %v2759
    %v3484 = vcombine.low %v2828, %v2830
    %v3486 = vunpack.c.l.s4 1983009808
    %v3487 = vunpack.c.0.s8 %v3486
    %v3488 = vlaneseq
    %v3489 = vshrl.u32 %v3488, 7
    %v3490 = vsub.s32 %v3487, %v3489
    %v3491 = vrot.slane %v3483, %v3490
    %v3493 = vunpack.c.l.s4 1983009808
    %v3494 = vunpack.c.0.s8 %v3493
    %v3495 = vlaneseq
    %v3496 = vshrl.u32 %v3495, 7
    %v3497 = vsub.s32 %v3494, %v3496
    %v3498 = vrot.slane %v3484, %v3497
    %v3499 = vcombine.low %v3491, %v3498
    %v3500 = vcombine.low %v2899, %v2901
    %v3501 = vcombine.low %v2970, %v2972
    %v3503 = vunpack.c.l.s4 1983009808
    %v3504 = vunpack.c.0.s8 %v3503
    %v3505 = vlaneseq
    %v3506 = vshrl.u32 %v3505, 7
    %v3507 = vsub.s32 %v3504, %v3506
    %v3508 = vrot.slane %v3500, %v3507
    %v3510 = vunpack.c.l.s4 1983009808
    %v3511 = vunpack.c.0.s8 %v3510
    %v3512 = vlaneseq
    %v3513 = vshrl.u32 %v3512, 7
    %v3514 = vsub.s32 %v3511, %v3513
    %v3515 = vrot.slane %v3501, %v3514
    %v3516 = vcombine.low %v3508, %v3515
    %v3517 = vcombine.low %v3041, %v3043
    %v3518 = vcombine.low %v3112, %v3114
    %v3520 = vunpack.c.l.s4 1983009808
    %v3521 = vunpack.c.0.s8 %v3520
    %v3522 = vlaneseq
    %v3523 = vshrl.u32 %v3522, 7
    %v3524 = vsub.s32 %v3521, %v3523
    %v3525 = vrot.slane %v3517, %v3524
    %v3527 = vunpack.c.l.s4 1983009808
    %v3528 = vunpack.c.0.s8 %v3527
    %v3529 = vlaneseq
    %v3530 = vshrl.u32 %v3529, 7
    %v3531 = vsub.s32 %v3528, %v3530
    %v3532 = vrot.slane %v3518, %v3531
    %v3533 = vcombine.low %v3525, %v3532
    %v3534 = vcombine.low %v3183, %v3185
    %v3535 = vcombine.low %v3254, %v3256
    %v3537 = vunpack.c.l.s4 1983009808
    %v3538 = vunpack.c.0.s8 %v3537
    %v3539 = vlaneseq
    %v3540 = vshrl.u32 %v3539, 7
    %v3541 = vsub.s32 %v3538, %v3540
    %v3542 = vrot.slane %v3534, %v3541
    %v3544 = vunpack.c.l.s4 1983009808
    %v3545 = vunpack.c.0.s8 %v3544
    %v3546 = vlaneseq
    %v3547 = vshrl.u32 %v3546, 7
    %v3548 = vsub.s32 %v3545, %v3547
    %v3549 = vrot.slane %v3535, %v3548
    %v3550 = vcombine.low %v3542, %v3549
    %v3551 = vcombine.low %v3325, %v3327
    %v3552 = vcombine.low %v3396, %v3398
    %v3554 = vunpack.c.l.s4 1983009808
    %v3555 = vunpack.c.0.s8 %v3554
    %v3556 = vlaneseq
    %v3557 = vshrl.u32 %v3556, 7
    %v3558 = vsub.s32 %v3555, %v3557
    %v3559 = vrot.slane %v3551, %v3558
    %v3561 = vunpack.c.l.s4 1983009808
    %v3562 = vunpack.c.0.s8 %v3561
    %v3563 = vlaneseq
    %v3564 = vshrl.u32 %v3563, 7
    %v3565 = vsub.s32 %v3562, %v3564
    %v3566 = vrot.slane %v3552, %v3565
    %v3567 = vcombine.low %v3559, %v3566
    %v3576 = vmul.f32 %v21, %v3448
    %v3577 = vmul.f32 %v22, %v3465
    %v3578 = vmul.f32 %v23, %v3482
    %v3579 = vmul.f32 %v24, %v3499
    %v3580 = vmul.f32 %v25, %v3516
    %v3581 = vmul.f32 %v26, %v3533
    %v3582 = vmul.f32 %v27, %v3550
    %v3583 = vmul.f32 %v28, %v3567
    %3584 = vst [vmem:[#allocation2] sm:$0xff] %v3576
    %3585 = vst [vmem:[#allocation2 + $0x8] sm:$0xff] %v3577
    %3586 = vst [vmem:[#allocation2 + $0x10] sm:$0xff] %v3578
    %3587 = vst [vmem:[#allocation2 + $0x18] sm:$0xff] %v3579
    %3588 = vst [vmem:[#allocation2 + $0x20] sm:$0xff] %v3580
    %3589 = vst [vmem:[#allocation2 + $0x28] sm:$0xff] %v3581
    %3590 = vst [vmem:[#allocation2 + $0x30] sm:$0xff] %v3582
    %3591 = vst [vmem:[#allocation2 + $0x38] sm:$0xff] %v3583
    // Predicated region
    $region22: #{tpu_custom_call.1} parent=1 // pred_check
      _
    $region23: #{tpu_custom_call.1} parent=1 // pred_check_branch
      %3593 = sbr.rel (0) target = $region25
    $region24: #{tpu_custom_call.1} parent=1 // pred_region
      %s3595 = ssub.s32 1024, 1024
      %3596 = vsyncadd [#allocation3], %s3595
      %s3598 = sshll.u32 [#allocation2], 4
      %s3599 = int_to_ptr.vmem [resolvable:$true] %s3598
      %3601 = dma.vmem_to_hbm [thread:$0]  %s3599, 1024, %s5, [#allocation3]
    $region25: #{tpu_custom_call.1} parent=1 // pred_fallthru
      _
    // Predicated region
    $region26: #{tpu_custom_call.1} parent=1 // pred_check
      _
    $region27: #{tpu_custom_call.1} parent=1 // pred_check_branch
      %3603 = sbr.rel (0) target = $region29
    $region28: #{tpu_custom_call.1} parent=1 // pred_region
      %3604 = dma.done [#allocation3], 1024
    $region29: #{tpu_custom_call.1} parent=1 // pred_fallthru
      _
    %3605 = vsyncpa [#allocation3], 1

</llo_original>
